<compile_context>
chip_gen: v6e
topology: v6e:2x2x1
jax: 0.10.0
libtpu: 0.0.40
codegen_flags: <defaults>
</compile_context>

<pallas_src>
import functools

import jax
import jax.numpy as jnp
from jax.experimental import pallas as pl
from jax.experimental.pallas import tpu as pltpu


# ----------------------------------------------------------------------------
# Kernels
# ----------------------------------------------------------------------------
def _ffwd_kernel_resident(x_ref, w1_ref, b1_ref, w2_ref, b2_ref, o_ref, *,
                          negative_slope):
    """Both weight matrices fully resident in VMEM (single-buffered)."""
    x = x_ref[...]
    # Linear 1 on the MXU, f32 accumulation; bias add in f32.
    h = jnp.dot(x, w1_ref[...], preferred_element_type=jnp.float32) + b1_ref[...]
    # LeakyReLU: for 0 <= a <= 1, leaky_relu(h) == max(h, a*h)  (mul+max, no select).
    h = jnp.maximum(h, negative_slope * h)
    # Linear 2: cast activation to MXU input dtype, accumulate in f32.
    out = jnp.dot(h.astype(x.dtype), w2_ref[...],
                  preferred_element_type=jnp.float32) + b2_ref[...]
    # Dropout is identity in eval mode.
    o_ref[...] = out.astype(o_ref.dtype)


def _ffwd_kernel_chunked(x_ref, w1_ref, b1_ref, w2_ref, b2_ref, o_ref, acc_ref,
                         *, negative_slope):
    """Hidden dim H streamed in chunks; f32 accumulator for the second matmul."""
    k = pl.program_id(1)

    @pl.when(k == 0)
    def _():
        acc_ref[...] = jnp.zeros_like(acc_ref)

    x = x_ref[...]
    h = jnp.dot(x, w1_ref[...], preferred_element_type=jnp.float32) + b1_ref[...]
    h = jnp.maximum(h, negative_slope * h)
    acc_ref[...] += jnp.dot(h.astype(x.dtype), w2_ref[...],
                            preferred_element_type=jnp.float32)

    @pl.when(k == pl.num_programs(1) - 1)
    def _():
        o_ref[...] = (acc_ref[...] + b2_ref[...]).astype(o_ref.dtype)


# ----------------------------------------------------------------------------
# Chip-aware helpers
# ----------------------------------------------------------------------------
def _tpu_caps():
    """Returns (physical VMEM bytes per TC, TensorCores per chip); conservative fallbacks."""
    vmem_physical = 64 << 20   # conservative default (v7x per-TC VMEM)
    num_tc = 1
    try:
        info = pltpu.get_tpu_info()
        v = getattr(info, "vmem_capacity_bytes", None)
        if v:
            vmem_physical = int(v)
        for attr in ("num_cores", "tensorcores_per_chip", "core_count"):
            c = getattr(info, attr, None)
            if c:
                num_tc = max(num_tc, int(c))
                break
    except Exception:
        pass
    try:
        kind = jax.devices()[0].device_kind.lower()
        if "v7" in kind:
            num_tc = max(num_tc, 2)
    except Exception:
        pass
    return vmem_physical, num_tc


def _pick_tm(M, tm_default, num_tc):
    """Row tile: big tiles amortize ~0.35us/step; only split for dual-TC chips."""
    if M <= 0:
        return 1
    tm = min(tm_default, M)
    if num_tc > 1 and M >= 256:
        # aim for >= 2 grid steps per core when M permits, else >= 1 per core
        target = 2 * num_tc if M >= 2 * num_tc * 128 else num_tc
        while pl.cdiv(M, tm) < target and tm > 128:
            tm //= 2
    if tm < M:
        # tile smaller than full array: keep 128-multiples (full MXU passes,
        # unmasked vst, bf16 sublane packing); tiny M falls back to full block.
        if tm >= 128:
            tm = (tm // 128) * 128
        elif tm >= 16:
            tm = (tm // 16) * 16
        else:
            tm = M
    return max(tm, 1)


def _resident_vmem_bytes(tm, E, H, in_it, out_it, w_it):
    return (2 * tm * E * in_it            # x tiles (double-buffered)
            + 2 * tm * E * out_it         # out tiles (double-buffered)
            + 2 * E * H * w_it            # W1 + W2 (single-buffered residents)
            + (H + E) * 4                 # biases (f32)
            + tm * H * 4)                 # f32 hidden intermediate


def _chunked_vmem_bytes(tm, E, th, in_it, out_it, w_it):
    return (2 * tm * E * in_it            # x tiles
            + 2 * tm * E * out_it         # out tiles
            + 2 * 2 * E * th * w_it       # W1/W2 chunks (double-buffered)
            + (th + E) * 4                # biases (f32)
            + tm * E * 4                  # f32 output accumulator (scratch)
            + tm * th * 4)                # f32 hidden intermediate


def _pick_h_chunk(H, tm, E, in_it, out_it, w_it, vmem_physical):
    candidates = [c for c in (H, 4096, 2048, 1024, 512, 256, 128)
                  if c <= H and H % c == 0]
    for th in candidates:
        if _chunked_vmem_bytes(tm, E, th, in_it, out_it, w_it) <= 0.6 * vmem_physical:
            return th
    return candidates[-1]


# ----------------------------------------------------------------------------
# Wrapper
# ----------------------------------------------------------------------------
def feed_forward(x, w1, b1, w2, b2, *, negative_slope=0.01, tm=512,
                 compute_dtype=None, h_chunk=None):
    """Fused Linear -> LeakyReLU -> Linear -> Dropout(eval) forward.

    x: (B, T, n_embd) -> (B, T, n_embd). Dropout is identity (inference mode).
    compute_dtype=jnp.bfloat16 casts x/W1/W2 for MXU-native throughput while
    keeping bias adds and matmul accumulation in f32.
    """
    B, T, E = x.shape
    H = w1.shape[1]
    M = B * T
    out_dtype = x.dtype

    cd = jnp.dtype(compute_dtype) if compute_dtype is not None else jnp.dtype(x.dtype)
    x2d = x.reshape(M, E).astype(cd)
    w1c = w1.astype(cd)
    w2c = w2.astype(cd)
    b1_2d = b1.reshape(1, H).astype(jnp.float32)
    b2_2d = b2.reshape(1, E).astype(jnp.float32)

    in_it = cd.itemsize
    w_it = cd.itemsize
    out_it = jnp.dtype(out_dtype).itemsize

    vmem_physical, num_tc = _tpu_caps()
    tm = _pick_tm(M, tm, num_tc)
    gm = pl.cdiv(M, tm)

    cost = pl.CostEstimate(
        flops=4 * M * E * H,                                    # two matmuls, 2*M*E*H each
        transcendentals=0,
        bytes_accessed=M * E * (in_it + out_it) + 2 * E * H * w_it + (H + E) * 4,
    )

    resident_bytes = _resident_vmem_bytes(tm, E, H, in_it, out_it, w_it)
    use_resident = (h_chunk is None) and (resident_bytes <= 0.6 * vmem_physical)

    if use_resident:
        vmem_limit = min(int(resident_bytes * 1.5) + (4 << 20),
                         int(vmem_physical * 0.8))
        out2d = pl.pallas_call(
            functools.partial(_ffwd_kernel_resident, negative_slope=negative_slope),
            out_shape=jax.ShapeDtypeStruct((M, E), out_dtype),
            grid_spec=pltpu.PrefetchScalarGridSpec(
                num_scalar_prefetch=0,
                grid=(gm,),
                in_specs=[
                    pl.BlockSpec((tm, E), lambda i: (i, 0)),               # x rows
                    pl.BlockSpec((E, H), lambda i: (0, 0),
                                 pipeline_mode=pl.Buffered(1)),            # W1 resident
                    pl.BlockSpec((1, H), lambda i: (0, 0),
                                 pipeline_mode=pl.Buffered(1)),            # b1
                    pl.BlockSpec((H, E), lambda i: (0, 0),
                                 pipeline_mode=pl.Buffered(1)),            # W2 resident
                    pl.BlockSpec((1, E), lambda i: (0, 0),
                                 pipeline_mode=pl.Buffered(1)),            # b2
                ],
                out_specs=pl.BlockSpec((tm, E), lambda i: (i, 0)),
            ),
            compiler_params=pltpu.CompilerParams(
                dimension_semantics=("parallel",),
                vmem_limit_bytes=vmem_limit,
            ),
            cost_estimate=cost,
        )(x2d, w1c, b1_2d, w2c, b2_2d)
    else:
        th = int(h_chunk) if h_chunk is not None else _pick_h_chunk(
            H, tm, E, in_it, out_it, w_it, vmem_physical)
        if H % th != 0:
            raise ValueError(f"h_chunk={th} must divide H={H}")
        if th < H and th % 128 != 0:
            raise ValueError(f"h_chunk={th} must be a multiple of 128")
        gh = H // th
        chunk_bytes = _chunked_vmem_bytes(tm, E, th, in_it, out_it, w_it)
        vmem_limit = min(int(chunk_bytes * 1.5) + (4 << 20),
                         int(vmem_physical * 0.8))
        out2d = pl.pallas_call(
            functools.partial(_ffwd_kernel_chunked, negative_slope=negative_slope),
            out_shape=jax.ShapeDtypeStruct((M, E), out_dtype),
            grid_spec=pltpu.PrefetchScalarGridSpec(
                num_scalar_prefetch=0,
                grid=(gm, gh),                                  # reduction axis (H) last
                in_specs=[
                    pl.BlockSpec((tm, E), lambda i, k: (i, 0)),            # x rows
                    pl.BlockSpec((E, th), lambda i, k: (0, k)),            # W1 col-chunk
                    pl.BlockSpec((1, th), lambda i, k: (0, k)),            # b1 chunk
                    pl.BlockSpec((th, E), lambda i, k: (k, 0)),            # W2 row-chunk
                    pl.BlockSpec((1, E), lambda i, k: (0, 0),
                                 pipeline_mode=pl.Buffered(1)),            # b2
                ],
                out_specs=pl.BlockSpec((tm, E), lambda i, k: (i, 0)),
                scratch_shapes=[pltpu.VMEM((tm, E), jnp.float32)],
            ),
            compiler_params=pltpu.CompilerParams(
                dimension_semantics=("parallel", "arbitrary"),
                vmem_limit_bytes=vmem_limit,
            ),
            cost_estimate=cost,
        )(x2d, w1c, b1_2d, w2c, b2_2d)

    return out2d.reshape(B, T, E)


# ----------------------------------------------------------------------------
# Reference + self-test
# ----------------------------------------------------------------------------
def _ref_feed_forward(x, w1, b1, w2, b2, negative_slope=0.01):
    h = jnp.dot(x, w1, precision="highest") + b1
    h = jnp.where(h > 0, h, negative_slope * h)
    return jnp.dot(h, w2, precision="highest") + b2


if __name__ == "__main__":
    # Module's real feature dim (n_embd=256) so E and H=4E are multiples of 128
    # (lane-dense stores). Small batch/seq: B=2, T=128 -> M=256 rows.
    B, T, E = 2, 128, 256
    H = 4 * E

    key = jax.random.PRNGKey(0)
    kx, k1, k2, k3, k4 = jax.random.split(key, 5)

    # Deterministic, PyTorch-Linear-like uniform init (synthetic weights).
    bound1 = 1.0 / (E ** 0.5)
    bound2 = 1.0 / (H ** 0.5)
    x = jax.random.normal(kx, (B, T, E), dtype=jnp.float32)
    w1 = jax.random.uniform(k1, (E, H), jnp.float32, -bound1, bound1)
    b1 = jax.random.uniform(k2, (H,), jnp.float32, -bound1, bound1)
    w2 = jax.random.uniform(k3, (H, E), jnp.float32, -bound2, bound2)
    b2 = jax.random.uniform(k4, (E,), jnp.float32, -bound2, bound2)

    ref = _ref_feed_forward(x, w1, b1, w2, b2)

    # 1) f32, resident-weights path (default).
    out = jax.block_until_ready(feed_forward(x, w1, b1, w2, b2))
    assert out.shape == (B, T, E)
    assert jnp.allclose(out, ref, atol=1e-4, rtol=1e-4), "f32 resident mismatch"

    # 2) f32, forced H-chunked streaming path (large-model / v7x VMEM fallback).
    out_c = jax.block_until_ready(feed_forward(x, w1, b1, w2, b2, h_chunk=256))
    assert jnp.allclose(out_c, ref, atol=2e-4, rtol=2e-4), "f32 chunked mismatch"

    # 3) bf16 compute path (MXU-native); f32 accumulation, f32 output.
    out_bf = jax.block_until_ready(
        feed_forward(x, w1, b1, w2, b2, compute_dtype=jnp.bfloat16))
    assert out_bf.dtype == x.dtype
    assert jnp.allclose(out_bf, ref, atol=3e-2, rtol=3e-2), "bf16 mismatch"

    print("KERNEL_OK")
</pallas_src>

<mosaic_0001>
module attributes {stable_mosaic.version = 11 : i64} {
  func.func @_ffwd_kernel_resident(%arg0: i32, %arg1: memref<256x256xf32, #tpu.memory_space<vmem>>, %arg2: memref<256x1024xf32, #tpu.memory_space<vmem>>, %arg3: memref<1x1024xf32, #tpu.memory_space<vmem>>, %arg4: memref<1024x256xf32, #tpu.memory_space<vmem>>, %arg5: memref<1x256xf32, #tpu.memory_space<vmem>>, %arg6: memref<256x256xf32, #tpu.memory_space<vmem>>) attributes {dimension_semantics = [#tpu.dimension_semantics<parallel>], iteration_bounds = array<i64: 1>, scalar_prefetch = 0 : i64, scratch_operands = 0 : i64, tpu.core_type = #tpu.core_type<tc>, window_params = [{transform_indices = @transform_0, window_bounds = array<i64: 256, 256>}, {pipeline_mode = #tpu.pipeline_mode<synchronous>, transform_indices = @transform_1, window_bounds = array<i64: 256, 1024>}, {pipeline_mode = #tpu.pipeline_mode<synchronous>, transform_indices = @transform_2, window_bounds = array<i64: 1, 1024>}, {pipeline_mode = #tpu.pipeline_mode<synchronous>, transform_indices = @transform_3, window_bounds = array<i64: 1024, 256>}, {pipeline_mode = #tpu.pipeline_mode<synchronous>, transform_indices = @transform_4, window_bounds = array<i64: 1, 256>}, {transform_indices = @transform_5, window_bounds = array<i64: 256, 256>}]} {
    %c0 = arith.constant 0 : index
    %c0_0 = arith.constant 0 : index
    %0 = vector.load %arg1[%c0, %c0_0] : memref<256x256xf32, #tpu.memory_space<vmem>>, vector<256x256xf32>
    %c0_1 = arith.constant 0 : index
    %c0_2 = arith.constant 0 : index
    %1 = vector.load %arg2[%c0_1, %c0_2] : memref<256x1024xf32, #tpu.memory_space<vmem>>, vector<256x1024xf32>
    %cst = arith.constant dense<0.000000e+00> : vector<256x1024xf32>
    %2 = tpu.matmul %0, %1, %cst {dimension_numbers = #tpu.dot_dimension_numbers<[1], [0], [0], [1], [0, 0, 1, 1], [], []>} : vector<256x256xf32>, vector<256x1024xf32>, vector<256x1024xf32> -> vector<256x1024xf32>
    %c0_3 = arith.constant 0 : index
    %c0_4 = arith.constant 0 : index
    %3 = vector.load %arg3[%c0_3, %c0_4] : memref<1x1024xf32, #tpu.memory_space<vmem>>, vector<1x1024xf32>
    %4 = vector.broadcast %3 : vector<1x1024xf32> to vector<256x1024xf32>
    %5 = arith.addf %2, %4 : vector<256x1024xf32>
    %cst_5 = arith.constant 0.00999999977 : f32
    %6 = vector.broadcast %cst_5 : f32 to vector<256x1024xf32>
    %7 = arith.mulf %6, %5 : vector<256x1024xf32>
    %8 = arith.maximumf %5, %7 : vector<256x1024xf32>
    %c0_6 = arith.constant 0 : index
    %c0_7 = arith.constant 0 : index
    %9 = vector.load %arg4[%c0_6, %c0_7] : memref<1024x256xf32, #tpu.memory_space<vmem>>, vector<1024x256xf32>
    %cst_8 = arith.constant dense<0.000000e+00> : vector<256x256xf32>
    %10 = tpu.matmul %8, %9, %cst_8 {dimension_numbers = #tpu.dot_dimension_numbers<[1], [0], [0], [1], [0, 0, 1, 1], [], []>} : vector<256x1024xf32>, vector<1024x256xf32>, vector<256x256xf32> -> vector<256x256xf32>
    %c0_9 = arith.constant 0 : index
    %c0_10 = arith.constant 0 : index
    %11 = vector.load %arg5[%c0_9, %c0_10] : memref<1x256xf32, #tpu.memory_space<vmem>>, vector<1x256xf32>
    %12 = vector.broadcast %11 : vector<1x256xf32> to vector<256x256xf32>
    %13 = arith.addf %10, %12 : vector<256x256xf32>
    %c0_11 = arith.constant 0 : index
    %c0_12 = arith.constant 0 : index
    %14 = vector.load %arg6[%c0_11, %c0_12] : memref<256x256xf32, #tpu.memory_space<vmem>>, vector<256x256xf32>
    tpu.vector_store %arg6[%c0_11, %c0_12], %13 {strides = array<i32>} : memref<256x256xf32, #tpu.memory_space<vmem>>, vector<256x256xf32>,
    return
  }
  func.func @transform_0(%arg0: i32) -> (i32, i32) {
    %c0_i32 = arith.constant 0 : i32
    %c0_i32_0 = arith.constant 0 : i32
    return %arg0, %c0_i32 : i32, i32
  }
  func.func @transform_1(%arg0: i32) -> (i32, i32) {
    %c0_i32 = arith.constant 0 : i32
    %c0_i32_0 = arith.constant 0 : i32
    %c0_i32_1 = arith.constant 0 : i32
    return %c0_i32, %c0_i32_0 : i32, i32
  }
  func.func @transform_2(%arg0: i32) -> (i32, i32) {
    %c0_i32 = arith.constant 0 : i32
    %c0_i32_0 = arith.constant 0 : i32
    %c0_i32_1 = arith.constant 0 : i32
    return %c0_i32, %c0_i32_0 : i32, i32
  }
  func.func @transform_3(%arg0: i32) -> (i32, i32) {
    %c0_i32 = arith.constant 0 : i32
    %c0_i32_0 = arith.constant 0 : i32
    %c0_i32_1 = arith.constant 0 : i32
    return %c0_i32, %c0_i32_0 : i32, i32
  }
  func.func @transform_4(%arg0: i32) -> (i32, i32) {
    %c0_i32 = arith.constant 0 : i32
    %c0_i32_0 = arith.constant 0 : i32
    %c0_i32_1 = arith.constant 0 : i32
    return %c0_i32, %c0_i32_0 : i32, i32
  }
  func.func @transform_5(%arg0: i32) -> (i32, i32) {
    %c0_i32 = arith.constant 0 : i32
    %c0_i32_0 = arith.constant 0 : i32
    return %arg0, %c0_i32 : i32, i32
  }
}

</mosaic_0001>

<llo_original>
// kernel: tpu_custom_call.1
$region0: #{tpu_custom_call.1}
  #allocation0 [shape = 'u32[]', space=smem, size = 0x4, offset = 0x4, fixed_abs, tag = 'smem constant byte address 0x4 - core index']
  #allocation1 [shape = 'u32[144,128]{1,0:T(1,128)}', space=vmem, size = 0x12000, scoped, tag = 'internal scratch']
  %s0 = inlined_call_operand.hbm [shape: f32[256,256], index: 0, kind: input, shape index: {}]
  %s1 = inlined_call_operand.hbm [shape: f32[256,1024], index: 1, kind: input, shape index: {}]
  %s2 = inlined_call_operand.hbm [shape: f32[1,1024], index: 2, kind: input, shape index: {}]
  %s3 = inlined_call_operand.hbm [shape: f32[1024,256], index: 3, kind: input, shape index: {}]
  %s4 = inlined_call_operand.vmem [shape: f32[1,256], index: 4, kind: input, shape index: {}]
  %s5 = inlined_call_operand.hbm [shape: f32[256,256], index: 5, kind: output, shape index: {}]
  %s6 = sld [smem:[#allocation0]]
  $region46: #{tpu_custom_call.1} parent=0
    _
  %s8 = ssub.s32 1, %s6
  %s9 = scalar_select 0, %s8, %s6
  $region1: #{tpu_custom_call.1} parent=0
    #allocation2 [shape = 'u8[262144]{0}', space=vmem, size = 0x40000, scoped, tag = 'input window, operand 0, single buffered']
    #allocation3 [shape = 's32[1]{0}', space=sflag, size = 0x4, scoped, tag = 'scoped memory for tpu_custom_call.1']
    #allocation4 [shape = 's32[1]{0}', space=sflag, size = 0x4, scoped, tag = 'scoped memory for tpu_custom_call.1']
    #allocation5 [shape = 'u8[1048576]{0}', space=vmem, size = 0x100000, scoped, tag = 'input window, operand 1, single buffered']
    #allocation6 [shape = 's32[1]{0}', space=sflag, size = 0x4, scoped, tag = 'scoped memory for tpu_custom_call.1']
    #allocation7 [shape = 'u8[4096]{0}', space=vmem, size = 0x1000, scoped, tag = 'input window, operand 2, single buffered']
    #allocation8 [shape = 'u8[1048576]{0}', space=vmem, size = 0x100000, scoped, tag = 'input window, operand 3, single buffered']
    #allocation9 [shape = 's32[1]{0}', space=sflag, size = 0x4, scoped, tag = 'scoped memory for tpu_custom_call.1']
    #allocation10 [shape = 'u8[262144]{0}', space=vmem, size = 0x40000, scoped, tag = 'output window, operand 0, single buffered']
    %10 = vsyncpa [#allocation3], 0
    %11 = vsyncpa [#allocation6], 0
    %12 = vsyncpa [#allocation9], 0
    %13 = vsyncpa [#allocation4], 0
    // Predicated region
    $region2: #{tpu_custom_call.1} parent=1 // pred_check
      _
    $region3: #{tpu_custom_call.1} parent=1 // pred_check_branch
      %15 = sbr.rel (0) target = $region5
    $region4: #{tpu_custom_call.1} parent=1 // pred_region
      %s17 = ssub.s32 8192, 8192
      %18 = vsyncadd [#allocation3], %s17
      %s19 = sshll.u32 [#allocation2], 4
      %s20 = int_to_ptr.vmem [resolvable:$true] %s19
      %25 = dma.hbm_to_vmem [thread:$0]  %s0, 8192, %s20, [#allocation3], 256, 256, 16
    $region5: #{tpu_custom_call.1} parent=1 // pred_fallthru
      _
    // Predicated region
    $region6: #{tpu_custom_call.1} parent=1 // pred_check
      _
    $region7: #{tpu_custom_call.1} parent=1 // pred_check_branch
      %27 = sbr.rel (0) target = $region9
    $region8: #{tpu_custom_call.1} parent=1 // pred_region
      %s29 = ssub.s32 32768, 32768
      %30 = vsyncadd [#allocation6], %s29
      %s31 = sshll.u32 [#allocation5], 4
      %s32 = int_to_ptr.vmem [resolvable:$true] %s31
      %37 = dma.hbm_to_vmem [thread:$0]  %s1, 32768, %s32, [#allocation6], 1024, 1024, 64
    $region9: #{tpu_custom_call.1} parent=1 // pred_fallthru
      _
    // Predicated region
    $region10: #{tpu_custom_call.1} parent=1 // pred_check
      _
    $region11: #{tpu_custom_call.1} parent=1 // pred_check_branch
      %39 = sbr.rel (0) target = $region13
    $region12: #{tpu_custom_call.1} parent=1 // pred_region
      %s41 = ssub.s32 128, 128
      %42 = vsyncadd [#allocation6], %s41
      %s44 = sshll.u32 [#allocation7], 4
      %s45 = int_to_ptr.vmem [resolvable:$true] %s44
      %47 = dma.hbm_to_vmem [thread:$0]  %s2, 128, %s45, [#allocation6]
    $region13: #{tpu_custom_call.1} parent=1 // pred_fallthru
      _
    // Predicated region
    $region14: #{tpu_custom_call.1} parent=1 // pred_check
      _
    $region15: #{tpu_custom_call.1} parent=1 // pred_check_branch
      %49 = sbr.rel (0) target = $region17
    $region16: #{tpu_custom_call.1} parent=1 // pred_region
      %s51 = ssub.s32 32768, 32768
      %52 = vsyncadd [#allocation9], %s51
      %s53 = sshll.u32 [#allocation8], 4
      %s54 = int_to_ptr.vmem [resolvable:$true] %s53
      %59 = dma.hbm_to_vmem [thread:$0]  %s3, 32768, %s54, [#allocation9], 256, 256, 16
    $region17: #{tpu_custom_call.1} parent=1 // pred_fallthru
      _
    // Predicated region
    $region18: #{tpu_custom_call.1} parent=1 // pred_check
      _
    $region19: #{tpu_custom_call.1} parent=1 // pred_check_branch
      %61 = sbr.rel (0) target = $region21
    $region20: #{tpu_custom_call.1} parent=1 // pred_region
      _
    $region21: #{tpu_custom_call.1} parent=1 // pred_fallthru
      _
    // Predicated region
    $region22: #{tpu_custom_call.1} parent=1 // pred_check
      _
    $region23: #{tpu_custom_call.1} parent=1 // pred_check_branch
      %63 = sbr.rel (0) target = $region25
    $region24: #{tpu_custom_call.1} parent=1 // pred_region
      %64 = dma.done [#allocation3], 8192
    $region25: #{tpu_custom_call.1} parent=1 // pred_fallthru
      _
    // Predicated region
    $region26: #{tpu_custom_call.1} parent=1 // pred_check
      _
    $region27: #{tpu_custom_call.1} parent=1 // pred_check_branch
      %66 = sbr.rel (0) target = $region29
    $region28: #{tpu_custom_call.1} parent=1 // pred_region
      %67 = dma.done [#allocation6], 32768
    $region29: #{tpu_custom_call.1} parent=1 // pred_fallthru
      _
    // Predicated region
    $region30: #{tpu_custom_call.1} parent=1 // pred_check
      _
    $region31: #{tpu_custom_call.1} parent=1 // pred_check_branch
      %69 = sbr.rel (0) target = $region33
    $region32: #{tpu_custom_call.1} parent=1 // pred_region
      %70 = dma.done [#allocation6], 128
    $region33: #{tpu_custom_call.1} parent=1 // pred_fallthru
      _
    // Predicated region
    $region34: #{tpu_custom_call.1} parent=1 // pred_check
      _
    $region35: #{tpu_custom_call.1} parent=1 // pred_check_branch
      %72 = sbr.rel (0) target = $region37
    $region36: #{tpu_custom_call.1} parent=1 // pred_region
      %73 = dma.done [#allocation9], 32768
    $region37: #{tpu_custom_call.1} parent=1 // pred_fallthru
      _
    %v74 = vld [vmem:[#allocation2] sm:$0xff]
    %v75 = vld [vmem:[#allocation2 + $0x8] sm:$0xff]
    %v76 = vld [vmem:[#allocation2 + $0x10] sm:$0xff]
    %v77 = vld [vmem:[#allocation2 + $0x18] sm:$0xff]
    %v78 = vld [vmem:[#allocation2 + $0x20] sm:$0xff]
    %v79 = vld [vmem:[#allocation2 + $0x28] sm:$0xff]
    %v80 = vld [vmem:[#allocation2 + $0x30] sm:$0xff]
    %v81 = vld [vmem:[#allocation2 + $0x38] sm:$0xff]
    %v82 = vld [vmem:[#allocation2 + $0x40] sm:$0xff]
    %v83 = vld [vmem:[#allocation2 + $0x48] sm:$0xff]
    %v84 = vld [vmem:[#allocation2 + $0x50] sm:$0xff]
    %v85 = vld [vmem:[#allocation2 + $0x58] sm:$0xff]
    %v86 = vld [vmem:[#allocation2 + $0x60] sm:$0xff]
    %v87 = vld [vmem:[#allocation2 + $0x68] sm:$0xff]
    %v88 = vld [vmem:[#allocation2 + $0x70] sm:$0xff]
    %v89 = vld [vmem:[#allocation2 + $0x78] sm:$0xff]
    %v90 = vld [vmem:[#allocation2 + $0x80] sm:$0xff]
    %v91 = vld [vmem:[#allocation2 + $0x88] sm:$0xff]
    %v92 = vld [vmem:[#allocation2 + $0x90] sm:$0xff]
    %v93 = vld [vmem:[#allocation2 + $0x98] sm:$0xff]
    %v94 = vld [vmem:[#allocation2 + $0xa0] sm:$0xff]
    %v95 = vld [vmem:[#allocation2 + $0xa8] sm:$0xff]
    %v96 = vld [vmem:[#allocation2 + $0xb0] sm:$0xff]
    %v97 = vld [vmem:[#allocation2 + $0xb8] sm:$0xff]
    %v98 = vld [vmem:[#allocation2 + $0xc0] sm:$0xff]
    %v99 = vld [vmem:[#allocation2 + $0xc8] sm:$0xff]
    %v100 = vld [vmem:[#allocation2 + $0xd0] sm:$0xff]
    %v101 = vld [vmem:[#allocation2 + $0xd8] sm:$0xff]
    %v102 = vld [vmem:[#allocation2 + $0xe0] sm:$0xff]
    %v103 = vld [vmem:[#allocation2 + $0xe8] sm:$0xff]
    %v104 = vld [vmem:[#allocation2 + $0xf0] sm:$0xff]
    %v105 = vld [vmem:[#allocation2 + $0xf8] sm:$0xff]
    %v106 = vld [vmem:[#allocation2 + $0x100] sm:$0xff]
    %v107 = vld [vmem:[#allocation2 + $0x108] sm:$0xff]
    %v108 = vld [vmem:[#allocation2 + $0x110] sm:$0xff]
    %v109 = vld [vmem:[#allocation2 + $0x118] sm:$0xff]
    %v110 = vld [vmem:[#allocation2 + $0x120] sm:$0xff]
    %v111 = vld [vmem:[#allocation2 + $0x128] sm:$0xff]
    %v112 = vld [vmem:[#allocation2 + $0x130] sm:$0xff]
    %v113 = vld [vmem:[#allocation2 + $0x138] sm:$0xff]
    %v114 = vld [vmem:[#allocation2 + $0x140] sm:$0xff]
    %v115 = vld [vmem:[#allocation2 + $0x148] sm:$0xff]
    %v116 = vld [vmem:[#allocation2 + $0x150] sm:$0xff]
    %v117 = vld [vmem:[#allocation2 + $0x158] sm:$0xff]
    %v118 = vld [vmem:[#allocation2 + $0x160] sm:$0xff]
    %v119 = vld [vmem:[#allocation2 + $0x168] sm:$0xff]
    %v120 = vld [vmem:[#allocation2 + $0x170] sm:$0xff]
    %v121 = vld [vmem:[#allocation2 + $0x178] sm:$0xff]
    %v122 = vld [vmem:[#allocation2 + $0x180] sm:$0xff]
    %v123 = vld [vmem:[#allocation2 + $0x188] sm:$0xff]
    %v124 = vld [vmem:[#allocation2 + $0x190] sm:$0xff]
    %v125 = vld [vmem:[#allocation2 + $0x198] sm:$0xff]
    %v126 = vld [vmem:[#allocation2 + $0x1a0] sm:$0xff]
    %v127 = vld [vmem:[#allocation2 + $0x1a8] sm:$0xff]
    %v128 = vld [vmem:[#allocation2 + $0x1b0] sm:$0xff]
    %v129 = vld [vmem:[#allocation2 + $0x1b8] sm:$0xff]
    %v130 = vld [vmem:[#allocation2 + $0x1c0] sm:$0xff]
    %v131 = vld [vmem:[#allocation2 + $0x1c8] sm:$0xff]
    %v132 = vld [vmem:[#allocation2 + $0x1d0] sm:$0xff]
    %v133 = vld [vmem:[#allocation2 + $0x1d8] sm:$0xff]
    %v134 = vld [vmem:[#allocation2 + $0x1e0] sm:$0xff]
    %v135 = vld [vmem:[#allocation2 + $0x1e8] sm:$0xff]
    %v136 = vld [vmem:[#allocation2 + $0x1f0] sm:$0xff]
    %v137 = vld [vmem:[#allocation2 + $0x1f8] sm:$0xff]
    %v138 = vld [vmem:[#allocation5] sm:$0xff]
    %v139 = vld [vmem:[#allocation5 + $0x8] sm:$0xff]
    %v140 = vld [vmem:[#allocation5 + $0x10] sm:$0xff]
    %v141 = vld [vmem:[#allocation5 + $0x18] sm:$0xff]
    %v142 = vld [vmem:[#allocation5 + $0x20] sm:$0xff]
    %v143 = vld [vmem:[#allocation5 + $0x28] sm:$0xff]
    %v144 = vld [vmem:[#allocation5 + $0x30] sm:$0xff]
    %v145 = vld [vmem:[#allocation5 + $0x38] sm:$0xff]
    %v146 = vld [vmem:[#allocation5 + $0x40] sm:$0xff]
    %v147 = vld [vmem:[#allocation5 + $0x48] sm:$0xff]
    %v148 = vld [vmem:[#allocation5 + $0x50] sm:$0xff]
    %v149 = vld [vmem:[#allocation5 + $0x58] sm:$0xff]
    %v150 = vld [vmem:[#allocation5 + $0x60] sm:$0xff]
    %v151 = vld [vmem:[#allocation5 + $0x68] sm:$0xff]
    %v152 = vld [vmem:[#allocation5 + $0x70] sm:$0xff]
    %v153 = vld [vmem:[#allocation5 + $0x78] sm:$0xff]
    %v154 = vld [vmem:[#allocation5 + $0x80] sm:$0xff]
    %v155 = vld [vmem:[#allocation5 + $0x88] sm:$0xff]
    %v156 = vld [vmem:[#allocation5 + $0x90] sm:$0xff]
    %v157 = vld [vmem:[#allocation5 + $0x98] sm:$0xff]
    %v158 = vld [vmem:[#allocation5 + $0xa0] sm:$0xff]
    %v159 = vld [vmem:[#allocation5 + $0xa8] sm:$0xff]
    %v160 = vld [vmem:[#allocation5 + $0xb0] sm:$0xff]
    %v161 = vld [vmem:[#allocation5 + $0xb8] sm:$0xff]
    %v162 = vld [vmem:[#allocation5 + $0xc0] sm:$0xff]
    %v163 = vld [vmem:[#allocation5 + $0xc8] sm:$0xff]
    %v164 = vld [vmem:[#allocation5 + $0xd0] sm:$0xff]
    %v165 = vld [vmem:[#allocation5 + $0xd8] sm:$0xff]
    %v166 = vld [vmem:[#allocation5 + $0xe0] sm:$0xff]
    %v167 = vld [vmem:[#allocation5 + $0xe8] sm:$0xff]
    %v168 = vld [vmem:[#allocation5 + $0xf0] sm:$0xff]
    %v169 = vld [vmem:[#allocation5 + $0xf8] sm:$0xff]
    %v170 = vld [vmem:[#allocation5 + $0x100] sm:$0xff]
    %v171 = vld [vmem:[#allocation5 + $0x108] sm:$0xff]
    %v172 = vld [vmem:[#allocation5 + $0x110] sm:$0xff]
    %v173 = vld [vmem:[#allocation5 + $0x118] sm:$0xff]
    %v174 = vld [vmem:[#allocation5 + $0x120] sm:$0xff]
    %v175 = vld [vmem:[#allocation5 + $0x128] sm:$0xff]
    %v176 = vld [vmem:[#allocation5 + $0x130] sm:$0xff]
    %v177 = vld [vmem:[#allocation5 + $0x138] sm:$0xff]
    %v178 = vld [vmem:[#allocation5 + $0x140] sm:$0xff]
    %v179 = vld [vmem:[#allocation5 + $0x148] sm:$0xff]
    %v180 = vld [vmem:[#allocation5 + $0x150] sm:$0xff]
    %v181 = vld [vmem:[#allocation5 + $0x158] sm:$0xff]
    %v182 = vld [vmem:[#allocation5 + $0x160] sm:$0xff]
    %v183 = vld [vmem:[#allocation5 + $0x168] sm:$0xff]
    %v184 = vld [vmem:[#allocation5 + $0x170] sm:$0xff]
    %v185 = vld [vmem:[#allocation5 + $0x178] sm:$0xff]
    %v186 = vld [vmem:[#allocation5 + $0x180] sm:$0xff]
    %v187 = vld [vmem:[#allocation5 + $0x188] sm:$0xff]
    %v188 = vld [vmem:[#allocation5 + $0x190] sm:$0xff]
    %v189 = vld [vmem:[#allocation5 + $0x198] sm:$0xff]
    %v190 = vld [vmem:[#allocation5 + $0x1a0] sm:$0xff]
    %v191 = vld [vmem:[#allocation5 + $0x1a8] sm:$0xff]
    %v192 = vld [vmem:[#allocation5 + $0x1b0] sm:$0xff]
    %v193 = vld [vmem:[#allocation5 + $0x1b8] sm:$0xff]
    %v194 = vld [vmem:[#allocation5 + $0x1c0] sm:$0xff]
    %v195 = vld [vmem:[#allocation5 + $0x1c8] sm:$0xff]
    %v196 = vld [vmem:[#allocation5 + $0x1d0] sm:$0xff]
    %v197 = vld [vmem:[#allocation5 + $0x1d8] sm:$0xff]
    %v198 = vld [vmem:[#allocation5 + $0x1e0] sm:$0xff]
    %v199 = vld [vmem:[#allocation5 + $0x1e8] sm:$0xff]
    %v200 = vld [vmem:[#allocation5 + $0x1f0] sm:$0xff]
    %v201 = vld [vmem:[#allocation5 + $0x1f8] sm:$0xff]
    %v202 = vld [vmem:[#allocation5 + $0x200] sm:$0xff]
    %v203 = vld [vmem:[#allocation5 + $0x208] sm:$0xff]
    %v204 = vld [vmem:[#allocation5 + $0x210] sm:$0xff]
    %v205 = vld [vmem:[#allocation5 + $0x218] sm:$0xff]
    %v206 = vld [vmem:[#allocation5 + $0x220] sm:$0xff]
    %v207 = vld [vmem:[#allocation5 + $0x228] sm:$0xff]
    %v208 = vld [vmem:[#allocation5 + $0x230] sm:$0xff]
    %v209 = vld [vmem:[#allocation5 + $0x238] sm:$0xff]
    %v210 = vld [vmem:[#allocation5 + $0x240] sm:$0xff]
    %v211 = vld [vmem:[#allocation5 + $0x248] sm:$0xff]
    %v212 = vld [vmem:[#allocation5 + $0x250] sm:$0xff]
    %v213 = vld [vmem:[#allocation5 + $0x258] sm:$0xff]
    %v214 = vld [vmem:[#allocation5 + $0x260] sm:$0xff]
    %v215 = vld [vmem:[#allocation5 + $0x268] sm:$0xff]
    %v216 = vld [vmem:[#allocation5 + $0x270] sm:$0xff]
    %v217 = vld [vmem:[#allocation5 + $0x278] sm:$0xff]
    %v218 = vld [vmem:[#allocation5 + $0x280] sm:$0xff]
    %v219 = vld [vmem:[#allocation5 + $0x288] sm:$0xff]
    %v220 = vld [vmem:[#allocation5 + $0x290] sm:$0xff]
    %v221 = vld [vmem:[#allocation5 + $0x298] sm:$0xff]
    %v222 = vld [vmem:[#allocation5 + $0x2a0] sm:$0xff]
    %v223 = vld [vmem:[#allocation5 + $0x2a8] sm:$0xff]
    %v224 = vld [vmem:[#allocation5 + $0x2b0] sm:$0xff]
    %v225 = vld [vmem:[#allocation5 + $0x2b8] sm:$0xff]
    %v226 = vld [vmem:[#allocation5 + $0x2c0] sm:$0xff]
    %v227 = vld [vmem:[#allocation5 + $0x2c8] sm:$0xff]
    %v228 = vld [vmem:[#allocation5 + $0x2d0] sm:$0xff]
    %v229 = vld [vmem:[#allocation5 + $0x2d8] sm:$0xff]
    %v230 = vld [vmem:[#allocation5 + $0x2e0] sm:$0xff]
    %v231 = vld [vmem:[#allocation5 + $0x2e8] sm:$0xff]
    %v232 = vld [vmem:[#allocation5 + $0x2f0] sm:$0xff]
    %v233 = vld [vmem:[#allocation5 + $0x2f8] sm:$0xff]
    %v234 = vld [vmem:[#allocation5 + $0x300] sm:$0xff]
    %v235 = vld [vmem:[#allocation5 + $0x308] sm:$0xff]
    %v236 = vld [vmem:[#allocation5 + $0x310] sm:$0xff]
    %v237 = vld [vmem:[#allocation5 + $0x318] sm:$0xff]
    %v238 = vld [vmem:[#allocation5 + $0x320] sm:$0xff]
    %v239 = vld [vmem:[#allocation5 + $0x328] sm:$0xff]
    %v240 = vld [vmem:[#allocation5 + $0x330] sm:$0xff]
    %v241 = vld [vmem:[#allocation5 + $0x338] sm:$0xff]
    %v242 = vld [vmem:[#allocation5 + $0x340] sm:$0xff]
    %v243 = vld [vmem:[#allocation5 + $0x348] sm:$0xff]
    %v244 = vld [vmem:[#allocation5 + $0x350] sm:$0xff]
    %v245 = vld [vmem:[#allocation5 + $0x358] sm:$0xff]
    %v246 = vld [vmem:[#allocation5 + $0x360] sm:$0xff]
    %v247 = vld [vmem:[#allocation5 + $0x368] sm:$0xff]
    %v248 = vld [vmem:[#allocation5 + $0x370] sm:$0xff]
    %v249 = vld [vmem:[#allocation5 + $0x378] sm:$0xff]
    %v250 = vld [vmem:[#allocation5 + $0x380] sm:$0xff]
    %v251 = vld [vmem:[#allocation5 + $0x388] sm:$0xff]
    %v252 = vld [vmem:[#allocation5 + $0x390] sm:$0xff]
    %v253 = vld [vmem:[#allocation5 + $0x398] sm:$0xff]
    %v254 = vld [vmem:[#allocation5 + $0x3a0] sm:$0xff]
    %v255 = vld [vmem:[#allocation5 + $0x3a8] sm:$0xff]
    %v256 = vld [vmem:[#allocation5 + $0x3b0] sm:$0xff]
    %v257 = vld [vmem:[#allocation5 + $0x3b8] sm:$0xff]
    %v258 = vld [vmem:[#allocation5 + $0x3c0] sm:$0xff]
    %v259 = vld [vmem:[#allocation5 + $0x3c8] sm:$0xff]
    %v260 = vld [vmem:[#allocation5 + $0x3d0] sm:$0xff]
    %v261 = vld [vmem:[#allocation5 + $0x3d8] sm:$0xff]
    %v262 = vld [vmem:[#allocation5 + $0x3e0] sm:$0xff]
    %v263 = vld [vmem:[#allocation5 + $0x3e8] sm:$0xff]
    %v264 = vld [vmem:[#allocation5 + $0x3f0] sm:$0xff]
    %v265 = vld [vmem:[#allocation5 + $0x3f8] sm:$0xff]
    %v266 = vld [vmem:[#allocation5 + $0x400] sm:$0xff]
    %v267 = vld [vmem:[#allocation5 + $0x408] sm:$0xff]
    %v268 = vld [vmem:[#allocation5 + $0x410] sm:$0xff]
    %v269 = vld [vmem:[#allocation5 + $0x418] sm:$0xff]
    %v270 = vld [vmem:[#allocation5 + $0x420] sm:$0xff]
    %v271 = vld [vmem:[#allocation5 + $0x428] sm:$0xff]
    %v272 = vld [vmem:[#allocation5 + $0x430] sm:$0xff]
    %v273 = vld [vmem:[#allocation5 + $0x438] sm:$0xff]
    %v274 = vld [vmem:[#allocation5 + $0x440] sm:$0xff]
    %v275 = vld [vmem:[#allocation5 + $0x448] sm:$0xff]
    %v276 = vld [vmem:[#allocation5 + $0x450] sm:$0xff]
    %v277 = vld [vmem:[#allocation5 + $0x458] sm:$0xff]
    %v278 = vld [vmem:[#allocation5 + $0x460] sm:$0xff]
    %v279 = vld [vmem:[#allocation5 + $0x468] sm:$0xff]
    %v280 = vld [vmem:[#allocation5 + $0x470] sm:$0xff]
    %v281 = vld [vmem:[#allocation5 + $0x478] sm:$0xff]
    %v282 = vld [vmem:[#allocation5 + $0x480] sm:$0xff]
    %v283 = vld [vmem:[#allocation5 + $0x488] sm:$0xff]
    %v284 = vld [vmem:[#allocation5 + $0x490] sm:$0xff]
    %v285 = vld [vmem:[#allocation5 + $0x498] sm:$0xff]
    %v286 = vld [vmem:[#allocation5 + $0x4a0] sm:$0xff]
    %v287 = vld [vmem:[#allocation5 + $0x4a8] sm:$0xff]
    %v288 = vld [vmem:[#allocation5 + $0x4b0] sm:$0xff]
    %v289 = vld [vmem:[#allocation5 + $0x4b8] sm:$0xff]
    %v290 = vld [vmem:[#allocation5 + $0x4c0] sm:$0xff]
    %v291 = vld [vmem:[#allocation5 + $0x4c8] sm:$0xff]
    %v292 = vld [vmem:[#allocation5 + $0x4d0] sm:$0xff]
    %v293 = vld [vmem:[#allocation5 + $0x4d8] sm:$0xff]
    %v294 = vld [vmem:[#allocation5 + $0x4e0] sm:$0xff]
    %v295 = vld [vmem:[#allocation5 + $0x4e8] sm:$0xff]
    %v296 = vld [vmem:[#allocation5 + $0x4f0] sm:$0xff]
    %v297 = vld [vmem:[#allocation5 + $0x4f8] sm:$0xff]
    %v298 = vld [vmem:[#allocation5 + $0x500] sm:$0xff]
    %v299 = vld [vmem:[#allocation5 + $0x508] sm:$0xff]
    %v300 = vld [vmem:[#allocation5 + $0x510] sm:$0xff]
    %v301 = vld [vmem:[#allocation5 + $0x518] sm:$0xff]
    %v302 = vld [vmem:[#allocation5 + $0x520] sm:$0xff]
    %v303 = vld [vmem:[#allocation5 + $0x528] sm:$0xff]
    %v304 = vld [vmem:[#allocation5 + $0x530] sm:$0xff]
    %v305 = vld [vmem:[#allocation5 + $0x538] sm:$0xff]
    %v306 = vld [vmem:[#allocation5 + $0x540] sm:$0xff]
    %v307 = vld [vmem:[#allocation5 + $0x548] sm:$0xff]
    %v308 = vld [vmem:[#allocation5 + $0x550] sm:$0xff]
    %v309 = vld [vmem:[#allocation5 + $0x558] sm:$0xff]
    %v310 = vld [vmem:[#allocation5 + $0x560] sm:$0xff]
    %v311 = vld [vmem:[#allocation5 + $0x568] sm:$0xff]
    %v312 = vld [vmem:[#allocation5 + $0x570] sm:$0xff]
    %v313 = vld [vmem:[#allocation5 + $0x578] sm:$0xff]
    %v314 = vld [vmem:[#allocation5 + $0x580] sm:$0xff]
    %v315 = vld [vmem:[#allocation5 + $0x588] sm:$0xff]
    %v316 = vld [vmem:[#allocation5 + $0x590] sm:$0xff]
    %v317 = vld [vmem:[#allocation5 + $0x598] sm:$0xff]
    %v318 = vld [vmem:[#allocation5 + $0x5a0] sm:$0xff]
    %v319 = vld [vmem:[#allocation5 + $0x5a8] sm:$0xff]
    %v320 = vld [vmem:[#allocation5 + $0x5b0] sm:$0xff]
    %v321 = vld [vmem:[#allocation5 + $0x5b8] sm:$0xff]
    %v322 = vld [vmem:[#allocation5 + $0x5c0] sm:$0xff]
    %v323 = vld [vmem:[#allocation5 + $0x5c8] sm:$0xff]
    %v324 = vld [vmem:[#allocation5 + $0x5d0] sm:$0xff]
    %v325 = vld [vmem:[#allocation5 + $0x5d8] sm:$0xff]
    %v326 = vld [vmem:[#allocation5 + $0x5e0] sm:$0xff]
    %v327 = vld [vmem:[#allocation5 + $0x5e8] sm:$0xff]
    %v328 = vld [vmem:[#allocation5 + $0x5f0] sm:$0xff]
    %v329 = vld [vmem:[#allocation5 + $0x5f8] sm:$0xff]
    %v330 = vld [vmem:[#allocation5 + $0x600] sm:$0xff]
    %v331 = vld [vmem:[#allocation5 + $0x608] sm:$0xff]
    %v332 = vld [vmem:[#allocation5 + $0x610] sm:$0xff]
    %v333 = vld [vmem:[#allocation5 + $0x618] sm:$0xff]
    %v334 = vld [vmem:[#allocation5 + $0x620] sm:$0xff]
    %v335 = vld [vmem:[#allocation5 + $0x628] sm:$0xff]
    %v336 = vld [vmem:[#allocation5 + $0x630] sm:$0xff]
    %v337 = vld [vmem:[#allocation5 + $0x638] sm:$0xff]
    %v338 = vld [vmem:[#allocation5 + $0x640] sm:$0xff]
    %v339 = vld [vmem:[#allocation5 + $0x648] sm:$0xff]
    %v340 = vld [vmem:[#allocation5 + $0x650] sm:$0xff]
    %v341 = vld [vmem:[#allocation5 + $0x658] sm:$0xff]
    %v342 = vld [vmem:[#allocation5 + $0x660] sm:$0xff]
    %v343 = vld [vmem:[#allocation5 + $0x668] sm:$0xff]
    %v344 = vld [vmem:[#allocation5 + $0x670] sm:$0xff]
    %v345 = vld [vmem:[#allocation5 + $0x678] sm:$0xff]
    %v346 = vld [vmem:[#allocation5 + $0x680] sm:$0xff]
    %v347 = vld [vmem:[#allocation5 + $0x688] sm:$0xff]
    %v348 = vld [vmem:[#allocation5 + $0x690] sm:$0xff]
    %v349 = vld [vmem:[#allocation5 + $0x698] sm:$0xff]
    %v350 = vld [vmem:[#allocation5 + $0x6a0] sm:$0xff]
    %v351 = vld [vmem:[#allocation5 + $0x6a8] sm:$0xff]
    %v352 = vld [vmem:[#allocation5 + $0x6b0] sm:$0xff]
    %v353 = vld [vmem:[#allocation5 + $0x6b8] sm:$0xff]
    %v354 = vld [vmem:[#allocation5 + $0x6c0] sm:$0xff]
    %v355 = vld [vmem:[#allocation5 + $0x6c8] sm:$0xff]
    %v356 = vld [vmem:[#allocation5 + $0x6d0] sm:$0xff]
    %v357 = vld [vmem:[#allocation5 + $0x6d8] sm:$0xff]
    %v358 = vld [vmem:[#allocation5 + $0x6e0] sm:$0xff]
    %v359 = vld [vmem:[#allocation5 + $0x6e8] sm:$0xff]
    %v360 = vld [vmem:[#allocation5 + $0x6f0] sm:$0xff]
    %v361 = vld [vmem:[#allocation5 + $0x6f8] sm:$0xff]
    %v362 = vld [vmem:[#allocation5 + $0x700] sm:$0xff]
    %v363 = vld [vmem:[#allocation5 + $0x708] sm:$0xff]
    %v364 = vld [vmem:[#allocation5 + $0x710] sm:$0xff]
    %v365 = vld [vmem:[#allocation5 + $0x718] sm:$0xff]
    %v366 = vld [vmem:[#allocation5 + $0x720] sm:$0xff]
    %v367 = vld [vmem:[#allocation5 + $0x728] sm:$0xff]
    %v368 = vld [vmem:[#allocation5 + $0x730] sm:$0xff]
    %v369 = vld [vmem:[#allocation5 + $0x738] sm:$0xff]
    %v370 = vld [vmem:[#allocation5 + $0x740] sm:$0xff]
    %v371 = vld [vmem:[#allocation5 + $0x748] sm:$0xff]
    %v372 = vld [vmem:[#allocation5 + $0x750] sm:$0xff]
    %v373 = vld [vmem:[#allocation5 + $0x758] sm:$0xff]
    %v374 = vld [vmem:[#allocation5 + $0x760] sm:$0xff]
    %v375 = vld [vmem:[#allocation5 + $0x768] sm:$0xff]
    %v376 = vld [vmem:[#allocation5 + $0x770] sm:$0xff]
    %v377 = vld [vmem:[#allocation5 + $0x778] sm:$0xff]
    %v378 = vld [vmem:[#allocation5 + $0x780] sm:$0xff]
    %v379 = vld [vmem:[#allocation5 + $0x788] sm:$0xff]
    %v380 = vld [vmem:[#allocation5 + $0x790] sm:$0xff]
    %v381 = vld [vmem:[#allocation5 + $0x798] sm:$0xff]
    %v382 = vld [vmem:[#allocation5 + $0x7a0] sm:$0xff]
    %v383 = vld [vmem:[#allocation5 + $0x7a8] sm:$0xff]
    %v384 = vld [vmem:[#allocation5 + $0x7b0] sm:$0xff]
    %v385 = vld [vmem:[#allocation5 + $0x7b8] sm:$0xff]
    %v386 = vld [vmem:[#allocation5 + $0x7c0] sm:$0xff]
    %v387 = vld [vmem:[#allocation5 + $0x7c8] sm:$0xff]
    %v388 = vld [vmem:[#allocation5 + $0x7d0] sm:$0xff]
    %v389 = vld [vmem:[#allocation5 + $0x7d8] sm:$0xff]
    %v390 = vld [vmem:[#allocation5 + $0x7e0] sm:$0xff]
    %v391 = vld [vmem:[#allocation5 + $0x7e8] sm:$0xff]
    %v392 = vld [vmem:[#allocation5 + $0x7f0] sm:$0xff]
    %v393 = vld [vmem:[#allocation5 + $0x7f8] sm:$0xff]
    %v394 = vld [vmem:[#allocation7] sm:$0xff]
    %v396 = vlaneseq
    %v397 = vshrl.u32 %v396, 7
    %v398 = vsub.s32 0, %v397
    %v399 = vrot.slane %v394, %v398
    %v400 = vlaneseq
    %v401 = vshrl.u32 %v400, 7
    %v402 = vsub.s32 1, %v401
    %v403 = vrot.slane %v394, %v402
    %v404 = vlaneseq
    %v405 = vshrl.u32 %v404, 7
    %v406 = vsub.s32 2, %v405
    %v407 = vrot.slane %v394, %v406
    %v408 = vlaneseq
    %v409 = vshrl.u32 %v408, 7
    %v410 = vsub.s32 3, %v409
    %v411 = vrot.slane %v394, %v410
    %v412 = vlaneseq
    %v413 = vshrl.u32 %v412, 7
    %v414 = vsub.s32 4, %v413
    %v415 = vrot.slane %v394, %v414
    %v416 = vlaneseq
    %v417 = vshrl.u32 %v416, 7
    %v418 = vsub.s32 5, %v417
    %v419 = vrot.slane %v394, %v418
    %v420 = vlaneseq
    %v421 = vshrl.u32 %v420, 7
    %v422 = vsub.s32 6, %v421
    %v423 = vrot.slane %v394, %v422
    %v424 = vlaneseq
    %v425 = vshrl.u32 %v424, 7
    %v426 = vsub.s32 7, %v425
    %v427 = vrot.slane %v394, %v426
    %436 = vmatprep.subr.mxu0 %v259
    %437 = vmatpush1.msra.mxu0 %v258
    %438 = vmatprep.subr.mxu0 %v251
    %439 = vmatpush1.msra.mxu0 %v250
    %440 = vmatprep.subr.mxu0 %v243
    %441 = vmatpush1.msra.mxu0 %v242
    %442 = vmatprep.subr.mxu0 %v235
    %443 = vmatpush1.msra.mxu0 %v234
    %444 = vmatprep.subr.mxu0 %v227
    %445 = vmatpush1.msra.mxu0 %v226
    %446 = vmatprep.subr.mxu0 %v219
    %447 = vmatpush1.msra.mxu0 %v218
    %448 = vmatprep.subr.mxu0 %v211
    %449 = vmatpush1.msra.mxu0 %v210
    %450 = vmatprep.subr.mxu0 %v203
    %451 = vmatpush1.msra.mxu0 %v202
    %452 = vmatprep.subr.mxu0 %v195
    %453 = vmatpush1.msra.mxu0 %v194
    %454 = vmatprep.subr.mxu0 %v187
    %455 = vmatpush1.msra.mxu0 %v186
    %456 = vmatprep.subr.mxu0 %v179
    %457 = vmatpush1.msra.mxu0 %v178
    %458 = vmatprep.subr.mxu0 %v171
    %459 = vmatpush1.msra.mxu0 %v170
    %460 = vmatprep.subr.mxu0 %v163
    %461 = vmatpush1.msra.mxu0 %v162
    %462 = vmatprep.subr.mxu0 %v155
    %463 = vmatpush1.msra.mxu0 %v154
    %464 = vmatprep.subr.mxu0 %v147
    %465 = vmatpush1.msra.mxu0 %v146
    %466 = vmatprep.subr.mxu0 %v139
    %467 = vmatpush1.msra.mxu0 %v138
    %468 = vmatprep.subr.mxu0 %v387
    %469 = vmatpush2.msra.mxu0 %v386
    %470 = vmatprep.subr.mxu0 %v379
    %471 = vmatpush2.msra.mxu0 %v378
    %472 = vmatprep.subr.mxu0 %v371
    %473 = vmatpush2.msra.mxu0 %v370
    %474 = vmatprep.subr.mxu0 %v363
    %475 = vmatpush2.msra.mxu0 %v362
    %476 = vmatprep.subr.mxu0 %v355
    %477 = vmatpush2.msra.mxu0 %v354
    %478 = vmatprep.subr.mxu0 %v347
    %479 = vmatpush2.msra.mxu0 %v346
    %480 = vmatprep.subr.mxu0 %v339
    %481 = vmatpush2.msra.mxu0 %v338
    %482 = vmatprep.subr.mxu0 %v331
    %483 = vmatpush2.msra.mxu0 %v330
    %484 = vmatprep.subr.mxu0 %v323
    %485 = vmatpush2.msra.mxu0 %v322
    %486 = vmatprep.subr.mxu0 %v315
    %487 = vmatpush2.msra.mxu0 %v314
    %488 = vmatprep.subr.mxu0 %v307
    %489 = vmatpush2.msra.mxu0 %v306
    %490 = vmatprep.subr.mxu0 %v299
    %491 = vmatpush2.msra.mxu0 %v298
    %492 = vmatprep.subr.mxu0 %v291
    %493 = vmatpush2.msra.mxu0 %v290
    %494 = vmatprep.subr.mxu0 %v283
    %495 = vmatpush2.msra.mxu0 %v282
    %496 = vmatprep.subr.mxu0 %v275
    %497 = vmatpush2.msra.mxu0 %v274
    %498 = vmatprep.subr.mxu0 %v267
    %499 = vmatpush2.msra.mxu0 %v266
    %500 = vmatprep.mubr.f32.mxu0 %v75
    %501 = vmatmul.mubr.f32.gmra.mxu0 %v74
    %v502 = vpop.f32.mrf.mxu0
    %v503 = vadd.f32 %v399, %v502
    %v504 = vpop.f32.mrf.mxu0
    %v505 = vadd.f32 %v403, %v504
    %506 = vmatprep.mubr.f32.mxu0 %v77
    %507 = vmatmul.mubr.f32.gmra.mxu0 %v76
    %v508 = vpop.f32.mrf.mxu0
    %v509 = vadd.f32 %v399, %v508
    %v510 = vpop.f32.mrf.mxu0
    %v511 = vadd.f32 %v403, %v510
    %512 = vmatprep.mubr.f32.mxu0 %v79
    %513 = vmatmul.mubr.f32.gmra.mxu0 %v78
    %v514 = vpop.f32.mrf.mxu0
    %v515 = vadd.f32 %v399, %v514
    %v516 = vpop.f32.mrf.mxu0
    %v517 = vadd.f32 %v403, %v516
    %518 = vmatprep.mubr.f32.mxu0 %v81
    %519 = vmatmul.mubr.f32.gmra.mxu0 %v80
    %v520 = vpop.f32.mrf.mxu0
    %v521 = vadd.f32 %v399, %v520
    %v522 = vpop.f32.mrf.mxu0
    %v523 = vadd.f32 %v403, %v522
    %524 = vmatprep.mubr.f32.mxu0 %v83
    %525 = vmatmul.mubr.f32.gmra.mxu0 %v82
    %v526 = vpop.f32.mrf.mxu0
    %v527 = vadd.f32 %v399, %v526
    %v528 = vpop.f32.mrf.mxu0
    %v529 = vadd.f32 %v403, %v528
    %530 = vmatprep.mubr.f32.mxu0 %v85
    %531 = vmatmul.mubr.f32.gmra.mxu0 %v84
    %v532 = vpop.f32.mrf.mxu0
    %v533 = vadd.f32 %v399, %v532
    %v534 = vpop.f32.mrf.mxu0
    %v535 = vadd.f32 %v403, %v534
    %536 = vmatprep.mubr.f32.mxu0 %v87
    %537 = vmatmul.mubr.f32.gmra.mxu0 %v86
    %v538 = vpop.f32.mrf.mxu0
    %v539 = vadd.f32 %v399, %v538
    %v540 = vpop.f32.mrf.mxu0
    %v541 = vadd.f32 %v403, %v540
    %542 = vmatprep.mubr.f32.mxu0 %v89
    %543 = vmatmul.mubr.f32.gmra.mxu0 %v88
    %v544 = vpop.f32.mrf.mxu0
    %v545 = vadd.f32 %v399, %v544
    %v546 = vpop.f32.mrf.mxu0
    %v547 = vadd.f32 %v403, %v546
    %548 = vmatprep.mubr.f32.mxu0 %v91
    %549 = vmatmul.mubr.f32.gmra.mxu0 %v90
    %v550 = vpop.f32.mrf.mxu0
    %v551 = vadd.f32 %v399, %v550
    %v552 = vpop.f32.mrf.mxu0
    %v553 = vadd.f32 %v403, %v552
    %554 = vmatprep.mubr.f32.mxu0 %v93
    %555 = vmatmul.mubr.f32.gmra.mxu0 %v92
    %v556 = vpop.f32.mrf.mxu0
    %v557 = vadd.f32 %v399, %v556
    %v558 = vpop.f32.mrf.mxu0
    %v559 = vadd.f32 %v403, %v558
    %560 = vmatprep.mubr.f32.mxu0 %v95
    %561 = vmatmul.mubr.f32.gmra.mxu0 %v94
    %v562 = vpop.f32.mrf.mxu0
    %v563 = vadd.f32 %v399, %v562
    %v564 = vpop.f32.mrf.mxu0
    %v565 = vadd.f32 %v403, %v564
    %566 = vmatprep.mubr.f32.mxu0 %v97
    %567 = vmatmul.mubr.f32.gmra.mxu0 %v96
    %v568 = vpop.f32.mrf.mxu0
    %v569 = vadd.f32 %v399, %v568
    %v570 = vpop.f32.mrf.mxu0
    %v571 = vadd.f32 %v403, %v570
    %572 = vmatprep.mubr.f32.mxu0 %v99
    %573 = vmatmul.mubr.f32.gmra.mxu0 %v98
    %v574 = vpop.f32.mrf.mxu0
    %v575 = vadd.f32 %v399, %v574
    %v576 = vpop.f32.mrf.mxu0
    %v577 = vadd.f32 %v403, %v576
    %578 = vmatprep.mubr.f32.mxu0 %v101
    %579 = vmatmul.mubr.f32.gmra.mxu0 %v100
    %v580 = vpop.f32.mrf.mxu0
    %v581 = vadd.f32 %v399, %v580
    %v582 = vpop.f32.mrf.mxu0
    %v583 = vadd.f32 %v403, %v582
    %584 = vmatprep.mubr.f32.mxu0 %v103
    %585 = vmatmul.mubr.f32.gmra.mxu0 %v102
    %v586 = vpop.f32.mrf.mxu0
    %v587 = vadd.f32 %v399, %v586
    %v588 = vpop.f32.mrf.mxu0
    %v589 = vadd.f32 %v403, %v588
    %590 = vmatprep.mubr.f32.mxu0 %v105
    %591 = vmatmul.mubr.f32.gmra.mxu0 %v104
    %v592 = vpop.f32.mrf.mxu0
    %v593 = vadd.f32 %v399, %v592
    %v594 = vpop.f32.mrf.mxu0
    %v595 = vadd.f32 %v403, %v594
    %596 = vmatprep.mubr.f32.mxu0 %v107
    %597 = vmatmul.mubr.f32.gmra.mxu0 %v106
    %v598 = vpop.f32.mrf.mxu0
    %v599 = vadd.f32 %v399, %v598
    %v600 = vpop.f32.mrf.mxu0
    %v601 = vadd.f32 %v403, %v600
    %602 = vmatprep.mubr.f32.mxu0 %v109
    %603 = vmatmul.mubr.f32.gmra.mxu0 %v108
    %v604 = vpop.f32.mrf.mxu0
    %v605 = vadd.f32 %v399, %v604
    %v606 = vpop.f32.mrf.mxu0
    %v607 = vadd.f32 %v403, %v606
    %608 = vmatprep.mubr.f32.mxu0 %v111
    %609 = vmatmul.mubr.f32.gmra.mxu0 %v110
    %v610 = vpop.f32.mrf.mxu0
    %v611 = vadd.f32 %v399, %v610
    %v612 = vpop.f32.mrf.mxu0
    %v613 = vadd.f32 %v403, %v612
    %614 = vmatprep.mubr.f32.mxu0 %v113
    %615 = vmatmul.mubr.f32.gmra.mxu0 %v112
    %v616 = vpop.f32.mrf.mxu0
    %v617 = vadd.f32 %v399, %v616
    %v618 = vpop.f32.mrf.mxu0
    %v619 = vadd.f32 %v403, %v618
    %620 = vmatprep.mubr.f32.mxu0 %v115
    %621 = vmatmul.mubr.f32.gmra.mxu0 %v114
    %v622 = vpop.f32.mrf.mxu0
    %v623 = vadd.f32 %v399, %v622
    %v624 = vpop.f32.mrf.mxu0
    %v625 = vadd.f32 %v403, %v624
    %626 = vmatprep.mubr.f32.mxu0 %v117
    %627 = vmatmul.mubr.f32.gmra.mxu0 %v116
    %v628 = vpop.f32.mrf.mxu0
    %v629 = vadd.f32 %v399, %v628
    %v630 = vpop.f32.mrf.mxu0
    %v631 = vadd.f32 %v403, %v630
    %632 = vmatprep.mubr.f32.mxu0 %v119
    %633 = vmatmul.mubr.f32.gmra.mxu0 %v118
    %v634 = vpop.f32.mrf.mxu0
    %v635 = vadd.f32 %v399, %v634
    %v636 = vpop.f32.mrf.mxu0
    %v637 = vadd.f32 %v403, %v636
    %638 = vmatprep.mubr.f32.mxu0 %v121
    %639 = vmatmul.mubr.f32.gmra.mxu0 %v120
    %v640 = vpop.f32.mrf.mxu0
    %v641 = vadd.f32 %v399, %v640
    %v642 = vpop.f32.mrf.mxu0
    %v643 = vadd.f32 %v403, %v642
    %644 = vmatprep.mubr.f32.mxu0 %v123
    %645 = vmatmul.mubr.f32.gmra.mxu0 %v122
    %v646 = vpop.f32.mrf.mxu0
    %v647 = vadd.f32 %v399, %v646
    %v648 = vpop.f32.mrf.mxu0
    %v649 = vadd.f32 %v403, %v648
    %650 = vmatprep.mubr.f32.mxu0 %v125
    %651 = vmatmul.mubr.f32.gmra.mxu0 %v124
    %v652 = vpop.f32.mrf.mxu0
    %v653 = vadd.f32 %v399, %v652
    %v654 = vpop.f32.mrf.mxu0
    %v655 = vadd.f32 %v403, %v654
    %656 = vmatprep.mubr.f32.mxu0 %v127
    %657 = vmatmul.mubr.f32.gmra.mxu0 %v126
    %v658 = vpop.f32.mrf.mxu0
    %v659 = vadd.f32 %v399, %v658
    %v660 = vpop.f32.mrf.mxu0
    %v661 = vadd.f32 %v403, %v660
    %662 = vmatprep.mubr.f32.mxu0 %v129
    %663 = vmatmul.mubr.f32.gmra.mxu0 %v128
    %v664 = vpop.f32.mrf.mxu0
    %v665 = vadd.f32 %v399, %v664
    %v666 = vpop.f32.mrf.mxu0
    %v667 = vadd.f32 %v403, %v666
    %668 = vmatprep.mubr.f32.mxu0 %v131
    %669 = vmatmul.mubr.f32.gmra.mxu0 %v130
    %v670 = vpop.f32.mrf.mxu0
    %v671 = vadd.f32 %v399, %v670
    %v672 = vpop.f32.mrf.mxu0
    %v673 = vadd.f32 %v403, %v672
    %674 = vmatprep.mubr.f32.mxu0 %v133
    %675 = vmatmul.mubr.f32.gmra.mxu0 %v132
    %v676 = vpop.f32.mrf.mxu0
    %v677 = vadd.f32 %v399, %v676
    %v678 = vpop.f32.mrf.mxu0
    %v679 = vadd.f32 %v403, %v678
    %680 = vmatprep.mubr.f32.mxu0 %v135
    %681 = vmatmul.mubr.f32.gmra.mxu0 %v134
    %v682 = vpop.f32.mrf.mxu0
    %v683 = vadd.f32 %v399, %v682
    %v684 = vpop.f32.mrf.mxu0
    %v685 = vadd.f32 %v403, %v684
    %686 = vmatprep.mubr.f32.mxu0 %v137
    %687 = vmatmul.mubr.f32.gmra.mxu0 %v136
    %v688 = vpop.f32.mrf.mxu0
    %v689 = vadd.f32 %v399, %v688
    %v690 = vpop.f32.mrf.mxu0
    %v691 = vadd.f32 %v403, %v690
    %692 = vdwg.mxu0
    %693 = vmatprep.subr.mxu0 %v261
    %694 = vmatpush1.msra.mxu0 %v260
    %695 = vmatprep.subr.mxu0 %v253
    %696 = vmatpush1.msra.mxu0 %v252
    %697 = vmatprep.subr.mxu0 %v245
    %698 = vmatpush1.msra.mxu0 %v244
    %699 = vmatprep.subr.mxu0 %v237
    %700 = vmatpush1.msra.mxu0 %v236
    %701 = vmatprep.subr.mxu0 %v229
    %702 = vmatpush1.msra.mxu0 %v228
    %703 = vmatprep.subr.mxu0 %v221
    %704 = vmatpush1.msra.mxu0 %v220
    %705 = vmatprep.subr.mxu0 %v213
    %706 = vmatpush1.msra.mxu0 %v212
    %707 = vmatprep.subr.mxu0 %v205
    %708 = vmatpush1.msra.mxu0 %v204
    %709 = vmatprep.subr.mxu0 %v197
    %710 = vmatpush1.msra.mxu0 %v196
    %711 = vmatprep.subr.mxu0 %v189
    %712 = vmatpush1.msra.mxu0 %v188
    %713 = vmatprep.subr.mxu0 %v181
    %714 = vmatpush1.msra.mxu0 %v180
    %715 = vmatprep.subr.mxu0 %v173
    %716 = vmatpush1.msra.mxu0 %v172
    %717 = vmatprep.subr.mxu0 %v165
    %718 = vmatpush1.msra.mxu0 %v164
    %719 = vmatprep.subr.mxu0 %v157
    %720 = vmatpush1.msra.mxu0 %v156
    %721 = vmatprep.subr.mxu0 %v149
    %722 = vmatpush1.msra.mxu0 %v148
    %723 = vmatprep.subr.mxu0 %v141
    %724 = vmatpush1.msra.mxu0 %v140
    %725 = vmatprep.subr.mxu0 %v389
    %726 = vmatpush2.msra.mxu0 %v388
    %727 = vmatprep.subr.mxu0 %v381
    %728 = vmatpush2.msra.mxu0 %v380
    %729 = vmatprep.subr.mxu0 %v373
    %730 = vmatpush2.msra.mxu0 %v372
    %731 = vmatprep.subr.mxu0 %v365
    %732 = vmatpush2.msra.mxu0 %v364
    %733 = vmatprep.subr.mxu0 %v357
    %734 = vmatpush2.msra.mxu0 %v356
    %735 = vmatprep.subr.mxu0 %v349
    %736 = vmatpush2.msra.mxu0 %v348
    %737 = vmatprep.subr.mxu0 %v341
    %738 = vmatpush2.msra.mxu0 %v340
    %739 = vmatprep.subr.mxu0 %v333
    %740 = vmatpush2.msra.mxu0 %v332
    %741 = vmatprep.subr.mxu0 %v325
    %742 = vmatpush2.msra.mxu0 %v324
    %743 = vmatprep.subr.mxu0 %v317
    %744 = vmatpush2.msra.mxu0 %v316
    %745 = vmatprep.subr.mxu0 %v309
    %746 = vmatpush2.msra.mxu0 %v308
    %747 = vmatprep.subr.mxu0 %v301
    %748 = vmatpush2.msra.mxu0 %v300
    %749 = vmatprep.subr.mxu0 %v293
    %750 = vmatpush2.msra.mxu0 %v292
    %751 = vmatprep.subr.mxu0 %v285
    %752 = vmatpush2.msra.mxu0 %v284
    %753 = vmatprep.subr.mxu0 %v277
    %754 = vmatpush2.msra.mxu0 %v276
    %755 = vmatprep.subr.mxu0 %v269
    %756 = vmatpush2.msra.mxu0 %v268
    %757 = vmatprep.mubr.f32.mxu0 %v75
    %758 = vmatmul.mubr.f32.gmra.mxu0 %v74
    %v759 = vpop.f32.mrf.mxu0
    %v760 = vadd.f32 %v407, %v759
    %v761 = vpop.f32.mrf.mxu0
    %v762 = vadd.f32 %v411, %v761
    %763 = vmatprep.mubr.f32.mxu0 %v77
    %764 = vmatmul.mubr.f32.gmra.mxu0 %v76
    %v765 = vpop.f32.mrf.mxu0
    %v766 = vadd.f32 %v407, %v765
    %v767 = vpop.f32.mrf.mxu0
    %v768 = vadd.f32 %v411, %v767
    %769 = vmatprep.mubr.f32.mxu0 %v79
    %770 = vmatmul.mubr.f32.gmra.mxu0 %v78
    %v771 = vpop.f32.mrf.mxu0
    %v772 = vadd.f32 %v407, %v771
    %v773 = vpop.f32.mrf.mxu0
    %v774 = vadd.f32 %v411, %v773
    %775 = vmatprep.mubr.f32.mxu0 %v81
    %776 = vmatmul.mubr.f32.gmra.mxu0 %v80
    %v777 = vpop.f32.mrf.mxu0
    %v778 = vadd.f32 %v407, %v777
    %v779 = vpop.f32.mrf.mxu0
    %v780 = vadd.f32 %v411, %v779
    %781 = vmatprep.mubr.f32.mxu0 %v83
    %782 = vmatmul.mubr.f32.gmra.mxu0 %v82
    %v783 = vpop.f32.mrf.mxu0
    %v784 = vadd.f32 %v407, %v783
    %v785 = vpop.f32.mrf.mxu0
    %v786 = vadd.f32 %v411, %v785
    %787 = vmatprep.mubr.f32.mxu0 %v85
    %788 = vmatmul.mubr.f32.gmra.mxu0 %v84
    %v789 = vpop.f32.mrf.mxu0
    %v790 = vadd.f32 %v407, %v789
    %v791 = vpop.f32.mrf.mxu0
    %v792 = vadd.f32 %v411, %v791
    %793 = vmatprep.mubr.f32.mxu0 %v87
    %794 = vmatmul.mubr.f32.gmra.mxu0 %v86
    %v795 = vpop.f32.mrf.mxu0
    %v796 = vadd.f32 %v407, %v795
    %v797 = vpop.f32.mrf.mxu0
    %v798 = vadd.f32 %v411, %v797
    %799 = vmatprep.mubr.f32.mxu0 %v89
    %800 = vmatmul.mubr.f32.gmra.mxu0 %v88
    %v801 = vpop.f32.mrf.mxu0
    %v802 = vadd.f32 %v407, %v801
    %v803 = vpop.f32.mrf.mxu0
    %v804 = vadd.f32 %v411, %v803
    %805 = vmatprep.mubr.f32.mxu0 %v91
    %806 = vmatmul.mubr.f32.gmra.mxu0 %v90
    %v807 = vpop.f32.mrf.mxu0
    %v808 = vadd.f32 %v407, %v807
    %v809 = vpop.f32.mrf.mxu0
    %v810 = vadd.f32 %v411, %v809
    %811 = vmatprep.mubr.f32.mxu0 %v93
    %812 = vmatmul.mubr.f32.gmra.mxu0 %v92
    %v813 = vpop.f32.mrf.mxu0
    %v814 = vadd.f32 %v407, %v813
    %v815 = vpop.f32.mrf.mxu0
    %v816 = vadd.f32 %v411, %v815
    %817 = vmatprep.mubr.f32.mxu0 %v95
    %818 = vmatmul.mubr.f32.gmra.mxu0 %v94
    %v819 = vpop.f32.mrf.mxu0
    %v820 = vadd.f32 %v407, %v819
    %v821 = vpop.f32.mrf.mxu0
    %v822 = vadd.f32 %v411, %v821
    %823 = vmatprep.mubr.f32.mxu0 %v97
    %824 = vmatmul.mubr.f32.gmra.mxu0 %v96
    %v825 = vpop.f32.mrf.mxu0
    %v826 = vadd.f32 %v407, %v825
    %v827 = vpop.f32.mrf.mxu0
    %v828 = vadd.f32 %v411, %v827
    %829 = vmatprep.mubr.f32.mxu0 %v99
    %830 = vmatmul.mubr.f32.gmra.mxu0 %v98
    %v831 = vpop.f32.mrf.mxu0
    %v832 = vadd.f32 %v407, %v831
    %v833 = vpop.f32.mrf.mxu0
    %v834 = vadd.f32 %v411, %v833
    %835 = vmatprep.mubr.f32.mxu0 %v101
    %836 = vmatmul.mubr.f32.gmra.mxu0 %v100
    %v837 = vpop.f32.mrf.mxu0
    %v838 = vadd.f32 %v407, %v837
    %v839 = vpop.f32.mrf.mxu0
    %v840 = vadd.f32 %v411, %v839
    %841 = vmatprep.mubr.f32.mxu0 %v103
    %842 = vmatmul.mubr.f32.gmra.mxu0 %v102
    %v843 = vpop.f32.mrf.mxu0
    %v844 = vadd.f32 %v407, %v843
    %v845 = vpop.f32.mrf.mxu0
    %v846 = vadd.f32 %v411, %v845
    %847 = vmatprep.mubr.f32.mxu0 %v105
    %848 = vmatmul.mubr.f32.gmra.mxu0 %v104
    %v849 = vpop.f32.mrf.mxu0
    %v850 = vadd.f32 %v407, %v849
    %v851 = vpop.f32.mrf.mxu0
    %v852 = vadd.f32 %v411, %v851
    %853 = vmatprep.mubr.f32.mxu0 %v107
    %854 = vmatmul.mubr.f32.gmra.mxu0 %v106
    %v855 = vpop.f32.mrf.mxu0
    %v856 = vadd.f32 %v407, %v855
    %v857 = vpop.f32.mrf.mxu0
    %v858 = vadd.f32 %v411, %v857
    %859 = vmatprep.mubr.f32.mxu0 %v109
    %860 = vmatmul.mubr.f32.gmra.mxu0 %v108
    %v861 = vpop.f32.mrf.mxu0
    %v862 = vadd.f32 %v407, %v861
    %v863 = vpop.f32.mrf.mxu0
    %v864 = vadd.f32 %v411, %v863
    %865 = vmatprep.mubr.f32.mxu0 %v111
    %866 = vmatmul.mubr.f32.gmra.mxu0 %v110
    %v867 = vpop.f32.mrf.mxu0
    %v868 = vadd.f32 %v407, %v867
    %v869 = vpop.f32.mrf.mxu0
    %v870 = vadd.f32 %v411, %v869
    %871 = vmatprep.mubr.f32.mxu0 %v113
    %872 = vmatmul.mubr.f32.gmra.mxu0 %v112
    %v873 = vpop.f32.mrf.mxu0
    %v874 = vadd.f32 %v407, %v873
    %v875 = vpop.f32.mrf.mxu0
    %v876 = vadd.f32 %v411, %v875
    %877 = vmatprep.mubr.f32.mxu0 %v115
    %878 = vmatmul.mubr.f32.gmra.mxu0 %v114
    %v879 = vpop.f32.mrf.mxu0
    %v880 = vadd.f32 %v407, %v879
    %v881 = vpop.f32.mrf.mxu0
    %v882 = vadd.f32 %v411, %v881
    %883 = vmatprep.mubr.f32.mxu0 %v117
    %884 = vmatmul.mubr.f32.gmra.mxu0 %v116
    %v885 = vpop.f32.mrf.mxu0
    %v886 = vadd.f32 %v407, %v885
    %v887 = vpop.f32.mrf.mxu0
    %v888 = vadd.f32 %v411, %v887
    %889 = vmatprep.mubr.f32.mxu0 %v119
    %890 = vmatmul.mubr.f32.gmra.mxu0 %v118
    %v891 = vpop.f32.mrf.mxu0
    %v892 = vadd.f32 %v407, %v891
    %v893 = vpop.f32.mrf.mxu0
    %v894 = vadd.f32 %v411, %v893
    %895 = vmatprep.mubr.f32.mxu0 %v121
    %896 = vmatmul.mubr.f32.gmra.mxu0 %v120
    %v897 = vpop.f32.mrf.mxu0
    %v898 = vadd.f32 %v407, %v897
    %v899 = vpop.f32.mrf.mxu0
    %v900 = vadd.f32 %v411, %v899
    %901 = vmatprep.mubr.f32.mxu0 %v123
    %902 = vmatmul.mubr.f32.gmra.mxu0 %v122
    %v903 = vpop.f32.mrf.mxu0
    %v904 = vadd.f32 %v407, %v903
    %v905 = vpop.f32.mrf.mxu0
    %v906 = vadd.f32 %v411, %v905
    %907 = vmatprep.mubr.f32.mxu0 %v125
    %908 = vmatmul.mubr.f32.gmra.mxu0 %v124
    %v909 = vpop.f32.mrf.mxu0
    %v910 = vadd.f32 %v407, %v909
    %v911 = vpop.f32.mrf.mxu0
    %v912 = vadd.f32 %v411, %v911
    %913 = vmatprep.mubr.f32.mxu0 %v127
    %914 = vmatmul.mubr.f32.gmra.mxu0 %v126
    %v915 = vpop.f32.mrf.mxu0
    %v916 = vadd.f32 %v407, %v915
    %v917 = vpop.f32.mrf.mxu0
    %v918 = vadd.f32 %v411, %v917
    %919 = vmatprep.mubr.f32.mxu0 %v129
    %920 = vmatmul.mubr.f32.gmra.mxu0 %v128
    %v921 = vpop.f32.mrf.mxu0
    %v922 = vadd.f32 %v407, %v921
    %v923 = vpop.f32.mrf.mxu0
    %v924 = vadd.f32 %v411, %v923
    %925 = vmatprep.mubr.f32.mxu0 %v131
    %926 = vmatmul.mubr.f32.gmra.mxu0 %v130
    %v927 = vpop.f32.mrf.mxu0
    %v928 = vadd.f32 %v407, %v927
    %v929 = vpop.f32.mrf.mxu0
    %v930 = vadd.f32 %v411, %v929
    %931 = vmatprep.mubr.f32.mxu0 %v133
    %932 = vmatmul.mubr.f32.gmra.mxu0 %v132
    %v933 = vpop.f32.mrf.mxu0
    %v934 = vadd.f32 %v407, %v933
    %v935 = vpop.f32.mrf.mxu0
    %v936 = vadd.f32 %v411, %v935
    %937 = vmatprep.mubr.f32.mxu0 %v135
    %938 = vmatmul.mubr.f32.gmra.mxu0 %v134
    %v939 = vpop.f32.mrf.mxu0
    %v940 = vadd.f32 %v407, %v939
    %v941 = vpop.f32.mrf.mxu0
    %v942 = vadd.f32 %v411, %v941
    %943 = vmatprep.mubr.f32.mxu0 %v137
    %944 = vmatmul.mubr.f32.gmra.mxu0 %v136
    %v945 = vpop.f32.mrf.mxu0
    %v946 = vadd.f32 %v407, %v945
    %v947 = vpop.f32.mrf.mxu0
    %v948 = vadd.f32 %v411, %v947
    %949 = vdwg.mxu0
    %950 = vmatprep.subr.mxu0 %v263
    %951 = vmatpush1.msra.mxu0 %v262
    %952 = vmatprep.subr.mxu0 %v255
    %953 = vmatpush1.msra.mxu0 %v254
    %954 = vmatprep.subr.mxu0 %v247
    %955 = vmatpush1.msra.mxu0 %v246
    %956 = vmatprep.subr.mxu0 %v239
    %957 = vmatpush1.msra.mxu0 %v238
    %958 = vmatprep.subr.mxu0 %v231
    %959 = vmatpush1.msra.mxu0 %v230
    %960 = vmatprep.subr.mxu0 %v223
    %961 = vmatpush1.msra.mxu0 %v222
    %962 = vmatprep.subr.mxu0 %v215
    %963 = vmatpush1.msra.mxu0 %v214
    %964 = vmatprep.subr.mxu0 %v207
    %965 = vmatpush1.msra.mxu0 %v206
    %966 = vmatprep.subr.mxu0 %v199
    %967 = vmatpush1.msra.mxu0 %v198
    %968 = vmatprep.subr.mxu0 %v191
    %969 = vmatpush1.msra.mxu0 %v190
    %970 = vmatprep.subr.mxu0 %v183
    %971 = vmatpush1.msra.mxu0 %v182
    %972 = vmatprep.subr.mxu0 %v175
    %973 = vmatpush1.msra.mxu0 %v174
    %974 = vmatprep.subr.mxu0 %v167
    %975 = vmatpush1.msra.mxu0 %v166
    %976 = vmatprep.subr.mxu0 %v159
    %977 = vmatpush1.msra.mxu0 %v158
    %978 = vmatprep.subr.mxu0 %v151
    %979 = vmatpush1.msra.mxu0 %v150
    %980 = vmatprep.subr.mxu0 %v143
    %981 = vmatpush1.msra.mxu0 %v142
    %982 = vmatprep.subr.mxu0 %v391
    %983 = vmatpush2.msra.mxu0 %v390
    %984 = vmatprep.subr.mxu0 %v383
    %985 = vmatpush2.msra.mxu0 %v382
    %986 = vmatprep.subr.mxu0 %v375
    %987 = vmatpush2.msra.mxu0 %v374
    %988 = vmatprep.subr.mxu0 %v367
    %989 = vmatpush2.msra.mxu0 %v366
    %990 = vmatprep.subr.mxu0 %v359
    %991 = vmatpush2.msra.mxu0 %v358
    %992 = vmatprep.subr.mxu0 %v351
    %993 = vmatpush2.msra.mxu0 %v350
    %994 = vmatprep.subr.mxu0 %v343
    %995 = vmatpush2.msra.mxu0 %v342
    %996 = vmatprep.subr.mxu0 %v335
    %997 = vmatpush2.msra.mxu0 %v334
    %998 = vmatprep.subr.mxu0 %v327
    %999 = vmatpush2.msra.mxu0 %v326
    %1000 = vmatprep.subr.mxu0 %v319
    %1001 = vmatpush2.msra.mxu0 %v318
    %1002 = vmatprep.subr.mxu0 %v311
    %1003 = vmatpush2.msra.mxu0 %v310
    %1004 = vmatprep.subr.mxu0 %v303
    %1005 = vmatpush2.msra.mxu0 %v302
    %1006 = vmatprep.subr.mxu0 %v295
    %1007 = vmatpush2.msra.mxu0 %v294
    %1008 = vmatprep.subr.mxu0 %v287
    %1009 = vmatpush2.msra.mxu0 %v286
    %1010 = vmatprep.subr.mxu0 %v279
    %1011 = vmatpush2.msra.mxu0 %v278
    %1012 = vmatprep.subr.mxu0 %v271
    %1013 = vmatpush2.msra.mxu0 %v270
    %1014 = vmatprep.mubr.f32.mxu0 %v75
    %1015 = vmatmul.mubr.f32.gmra.mxu0 %v74
    %v1016 = vpop.f32.mrf.mxu0
    %v1017 = vadd.f32 %v415, %v1016
    %v1018 = vpop.f32.mrf.mxu0
    %v1019 = vadd.f32 %v419, %v1018
    %1020 = vmatprep.mubr.f32.mxu0 %v77
    %1021 = vmatmul.mubr.f32.gmra.mxu0 %v76
    %v1022 = vpop.f32.mrf.mxu0
    %v1023 = vadd.f32 %v415, %v1022
    %v1024 = vpop.f32.mrf.mxu0
    %v1025 = vadd.f32 %v419, %v1024
    %1026 = vmatprep.mubr.f32.mxu0 %v79
    %1027 = vmatmul.mubr.f32.gmra.mxu0 %v78
    %v1028 = vpop.f32.mrf.mxu0
    %v1029 = vadd.f32 %v415, %v1028
    %v1030 = vpop.f32.mrf.mxu0
    %v1031 = vadd.f32 %v419, %v1030
    %1032 = vmatprep.mubr.f32.mxu0 %v81
    %1033 = vmatmul.mubr.f32.gmra.mxu0 %v80
    %v1034 = vpop.f32.mrf.mxu0
    %v1035 = vadd.f32 %v415, %v1034
    %v1036 = vpop.f32.mrf.mxu0
    %v1037 = vadd.f32 %v419, %v1036
    %1038 = vmatprep.mubr.f32.mxu0 %v83
    %1039 = vmatmul.mubr.f32.gmra.mxu0 %v82
    %v1040 = vpop.f32.mrf.mxu0
    %v1041 = vadd.f32 %v415, %v1040
    %v1042 = vpop.f32.mrf.mxu0
    %v1043 = vadd.f32 %v419, %v1042
    %1044 = vmatprep.mubr.f32.mxu0 %v85
    %1045 = vmatmul.mubr.f32.gmra.mxu0 %v84
    %v1046 = vpop.f32.mrf.mxu0
    %v1047 = vadd.f32 %v415, %v1046
    %v1048 = vpop.f32.mrf.mxu0
    %v1049 = vadd.f32 %v419, %v1048
    %1050 = vmatprep.mubr.f32.mxu0 %v87
    %1051 = vmatmul.mubr.f32.gmra.mxu0 %v86
    %v1052 = vpop.f32.mrf.mxu0
    %v1053 = vadd.f32 %v415, %v1052
    %v1054 = vpop.f32.mrf.mxu0
    %v1055 = vadd.f32 %v419, %v1054
    %1056 = vmatprep.mubr.f32.mxu0 %v89
    %1057 = vmatmul.mubr.f32.gmra.mxu0 %v88
    %v1058 = vpop.f32.mrf.mxu0
    %v1059 = vadd.f32 %v415, %v1058
    %v1060 = vpop.f32.mrf.mxu0
    %v1061 = vadd.f32 %v419, %v1060
    %1062 = vmatprep.mubr.f32.mxu0 %v91
    %1063 = vmatmul.mubr.f32.gmra.mxu0 %v90
    %v1064 = vpop.f32.mrf.mxu0
    %v1065 = vadd.f32 %v415, %v1064
    %v1066 = vpop.f32.mrf.mxu0
    %v1067 = vadd.f32 %v419, %v1066
    %1068 = vmatprep.mubr.f32.mxu0 %v93
    %1069 = vmatmul.mubr.f32.gmra.mxu0 %v92
    %v1070 = vpop.f32.mrf.mxu0
    %v1071 = vadd.f32 %v415, %v1070
    %v1072 = vpop.f32.mrf.mxu0
    %v1073 = vadd.f32 %v419, %v1072
    %1074 = vmatprep.mubr.f32.mxu0 %v95
    %1075 = vmatmul.mubr.f32.gmra.mxu0 %v94
    %v1076 = vpop.f32.mrf.mxu0
    %v1077 = vadd.f32 %v415, %v1076
    %v1078 = vpop.f32.mrf.mxu0
    %v1079 = vadd.f32 %v419, %v1078
    %1080 = vmatprep.mubr.f32.mxu0 %v97
    %1081 = vmatmul.mubr.f32.gmra.mxu0 %v96
    %v1082 = vpop.f32.mrf.mxu0
    %v1083 = vadd.f32 %v415, %v1082
    %v1084 = vpop.f32.mrf.mxu0
    %v1085 = vadd.f32 %v419, %v1084
    %1086 = vmatprep.mubr.f32.mxu0 %v99
    %1087 = vmatmul.mubr.f32.gmra.mxu0 %v98
    %v1088 = vpop.f32.mrf.mxu0
    %v1089 = vadd.f32 %v415, %v1088
    %v1090 = vpop.f32.mrf.mxu0
    %v1091 = vadd.f32 %v419, %v1090
    %1092 = vmatprep.mubr.f32.mxu0 %v101
    %1093 = vmatmul.mubr.f32.gmra.mxu0 %v100
    %v1094 = vpop.f32.mrf.mxu0
    %v1095 = vadd.f32 %v415, %v1094
    %v1096 = vpop.f32.mrf.mxu0
    %v1097 = vadd.f32 %v419, %v1096
    %1098 = vmatprep.mubr.f32.mxu0 %v103
    %1099 = vmatmul.mubr.f32.gmra.mxu0 %v102
    %v1100 = vpop.f32.mrf.mxu0
    %v1101 = vadd.f32 %v415, %v1100
    %v1102 = vpop.f32.mrf.mxu0
    %v1103 = vadd.f32 %v419, %v1102
    %1104 = vmatprep.mubr.f32.mxu0 %v105
    %1105 = vmatmul.mubr.f32.gmra.mxu0 %v104
    %v1106 = vpop.f32.mrf.mxu0
    %v1107 = vadd.f32 %v415, %v1106
    %v1108 = vpop.f32.mrf.mxu0
    %v1109 = vadd.f32 %v419, %v1108
    %1110 = vmatprep.mubr.f32.mxu0 %v107
    %1111 = vmatmul.mubr.f32.gmra.mxu0 %v106
    %v1112 = vpop.f32.mrf.mxu0
    %v1113 = vadd.f32 %v415, %v1112
    %v1114 = vpop.f32.mrf.mxu0
    %v1115 = vadd.f32 %v419, %v1114
    %1116 = vmatprep.mubr.f32.mxu0 %v109
    %1117 = vmatmul.mubr.f32.gmra.mxu0 %v108
    %v1118 = vpop.f32.mrf.mxu0
    %v1119 = vadd.f32 %v415, %v1118
    %v1120 = vpop.f32.mrf.mxu0
    %v1121 = vadd.f32 %v419, %v1120
    %1122 = vmatprep.mubr.f32.mxu0 %v111
    %1123 = vmatmul.mubr.f32.gmra.mxu0 %v110
    %v1124 = vpop.f32.mrf.mxu0
    %v1125 = vadd.f32 %v415, %v1124
    %v1126 = vpop.f32.mrf.mxu0
    %v1127 = vadd.f32 %v419, %v1126
    %1128 = vmatprep.mubr.f32.mxu0 %v113
    %1129 = vmatmul.mubr.f32.gmra.mxu0 %v112
    %v1130 = vpop.f32.mrf.mxu0
    %v1131 = vadd.f32 %v415, %v1130
    %v1132 = vpop.f32.mrf.mxu0
    %v1133 = vadd.f32 %v419, %v1132
    %1134 = vmatprep.mubr.f32.mxu0 %v115
    %1135 = vmatmul.mubr.f32.gmra.mxu0 %v114
    %v1136 = vpop.f32.mrf.mxu0
    %v1137 = vadd.f32 %v415, %v1136
    %v1138 = vpop.f32.mrf.mxu0
    %v1139 = vadd.f32 %v419, %v1138
    %1140 = vmatprep.mubr.f32.mxu0 %v117
    %1141 = vmatmul.mubr.f32.gmra.mxu0 %v116
    %v1142 = vpop.f32.mrf.mxu0
    %v1143 = vadd.f32 %v415, %v1142
    %v1144 = vpop.f32.mrf.mxu0
    %v1145 = vadd.f32 %v419, %v1144
    %1146 = vmatprep.mubr.f32.mxu0 %v119
    %1147 = vmatmul.mubr.f32.gmra.mxu0 %v118
    %v1148 = vpop.f32.mrf.mxu0
    %v1149 = vadd.f32 %v415, %v1148
    %v1150 = vpop.f32.mrf.mxu0
    %v1151 = vadd.f32 %v419, %v1150
    %1152 = vmatprep.mubr.f32.mxu0 %v121
    %1153 = vmatmul.mubr.f32.gmra.mxu0 %v120
    %v1154 = vpop.f32.mrf.mxu0
    %v1155 = vadd.f32 %v415, %v1154
    %v1156 = vpop.f32.mrf.mxu0
    %v1157 = vadd.f32 %v419, %v1156
    %1158 = vmatprep.mubr.f32.mxu0 %v123
    %1159 = vmatmul.mubr.f32.gmra.mxu0 %v122
    %v1160 = vpop.f32.mrf.mxu0
    %v1161 = vadd.f32 %v415, %v1160
    %v1162 = vpop.f32.mrf.mxu0
    %v1163 = vadd.f32 %v419, %v1162
    %1164 = vmatprep.mubr.f32.mxu0 %v125
    %1165 = vmatmul.mubr.f32.gmra.mxu0 %v124
    %v1166 = vpop.f32.mrf.mxu0
    %v1167 = vadd.f32 %v415, %v1166
    %v1168 = vpop.f32.mrf.mxu0
    %v1169 = vadd.f32 %v419, %v1168
    %1170 = vmatprep.mubr.f32.mxu0 %v127
    %1171 = vmatmul.mubr.f32.gmra.mxu0 %v126
    %v1172 = vpop.f32.mrf.mxu0
    %v1173 = vadd.f32 %v415, %v1172
    %v1174 = vpop.f32.mrf.mxu0
    %v1175 = vadd.f32 %v419, %v1174
    %1176 = vmatprep.mubr.f32.mxu0 %v129
    %1177 = vmatmul.mubr.f32.gmra.mxu0 %v128
    %v1178 = vpop.f32.mrf.mxu0
    %v1179 = vadd.f32 %v415, %v1178
    %v1180 = vpop.f32.mrf.mxu0
    %v1181 = vadd.f32 %v419, %v1180
    %1182 = vmatprep.mubr.f32.mxu0 %v131
    %1183 = vmatmul.mubr.f32.gmra.mxu0 %v130
    %v1184 = vpop.f32.mrf.mxu0
    %v1185 = vadd.f32 %v415, %v1184
    %v1186 = vpop.f32.mrf.mxu0
    %v1187 = vadd.f32 %v419, %v1186
    %1188 = vmatprep.mubr.f32.mxu0 %v133
    %1189 = vmatmul.mubr.f32.gmra.mxu0 %v132
    %v1190 = vpop.f32.mrf.mxu0
    %v1191 = vadd.f32 %v415, %v1190
    %v1192 = vpop.f32.mrf.mxu0
    %v1193 = vadd.f32 %v419, %v1192
    %1194 = vmatprep.mubr.f32.mxu0 %v135
    %1195 = vmatmul.mubr.f32.gmra.mxu0 %v134
    %v1196 = vpop.f32.mrf.mxu0
    %v1197 = vadd.f32 %v415, %v1196
    %v1198 = vpop.f32.mrf.mxu0
    %v1199 = vadd.f32 %v419, %v1198
    %1200 = vmatprep.mubr.f32.mxu0 %v137
    %1201 = vmatmul.mubr.f32.gmra.mxu0 %v136
    %v1202 = vpop.f32.mrf.mxu0
    %v1203 = vadd.f32 %v415, %v1202
    %v1204 = vpop.f32.mrf.mxu0
    %v1205 = vadd.f32 %v419, %v1204
    %1206 = vdwg.mxu0
    %1207 = vmatprep.subr.mxu0 %v265
    %1208 = vmatpush1.msra.mxu0 %v264
    %1209 = vmatprep.subr.mxu0 %v257
    %1210 = vmatpush1.msra.mxu0 %v256
    %1211 = vmatprep.subr.mxu0 %v249
    %1212 = vmatpush1.msra.mxu0 %v248
    %1213 = vmatprep.subr.mxu0 %v241
    %1214 = vmatpush1.msra.mxu0 %v240
    %1215 = vmatprep.subr.mxu0 %v233
    %1216 = vmatpush1.msra.mxu0 %v232
    %1217 = vmatprep.subr.mxu0 %v225
    %1218 = vmatpush1.msra.mxu0 %v224
    %1219 = vmatprep.subr.mxu0 %v217
    %1220 = vmatpush1.msra.mxu0 %v216
    %1221 = vmatprep.subr.mxu0 %v209
    %1222 = vmatpush1.msra.mxu0 %v208
    %1223 = vmatprep.subr.mxu0 %v201
    %1224 = vmatpush1.msra.mxu0 %v200
    %1225 = vmatprep.subr.mxu0 %v193
    %1226 = vmatpush1.msra.mxu0 %v192
    %1227 = vmatprep.subr.mxu0 %v185
    %1228 = vmatpush1.msra.mxu0 %v184
    %1229 = vmatprep.subr.mxu0 %v177
    %1230 = vmatpush1.msra.mxu0 %v176
    %1231 = vmatprep.subr.mxu0 %v169
    %1232 = vmatpush1.msra.mxu0 %v168
    %1233 = vmatprep.subr.mxu0 %v161
    %1234 = vmatpush1.msra.mxu0 %v160
    %1235 = vmatprep.subr.mxu0 %v153
    %1236 = vmatpush1.msra.mxu0 %v152
    %1237 = vmatprep.subr.mxu0 %v145
    %1238 = vmatpush1.msra.mxu0 %v144
    %1239 = vmatprep.subr.mxu0 %v393
    %1240 = vmatpush2.msra.mxu0 %v392
    %1241 = vmatprep.subr.mxu0 %v385
    %1242 = vmatpush2.msra.mxu0 %v384
    %1243 = vmatprep.subr.mxu0 %v377
    %1244 = vmatpush2.msra.mxu0 %v376
    %1245 = vmatprep.subr.mxu0 %v369
    %1246 = vmatpush2.msra.mxu0 %v368
    %1247 = vmatprep.subr.mxu0 %v361
    %1248 = vmatpush2.msra.mxu0 %v360
    %1249 = vmatprep.subr.mxu0 %v353
    %1250 = vmatpush2.msra.mxu0 %v352
    %1251 = vmatprep.subr.mxu0 %v345
    %1252 = vmatpush2.msra.mxu0 %v344
    %1253 = vmatprep.subr.mxu0 %v337
    %1254 = vmatpush2.msra.mxu0 %v336
    %1255 = vmatprep.subr.mxu0 %v329
    %1256 = vmatpush2.msra.mxu0 %v328
    %1257 = vmatprep.subr.mxu0 %v321
    %1258 = vmatpush2.msra.mxu0 %v320
    %1259 = vmatprep.subr.mxu0 %v313
    %1260 = vmatpush2.msra.mxu0 %v312
    %1261 = vmatprep.subr.mxu0 %v305
    %1262 = vmatpush2.msra.mxu0 %v304
    %1263 = vmatprep.subr.mxu0 %v297
    %1264 = vmatpush2.msra.mxu0 %v296
    %1265 = vmatprep.subr.mxu0 %v289
    %1266 = vmatpush2.msra.mxu0 %v288
    %1267 = vmatprep.subr.mxu0 %v281
    %1268 = vmatpush2.msra.mxu0 %v280
    %1269 = vmatprep.subr.mxu0 %v273
    %1270 = vmatpush2.msra.mxu0 %v272
    %1271 = vmatprep.mubr.f32.mxu0 %v75
    %1272 = vmatmul.mubr.f32.gmra.mxu0 %v74
    %v1273 = vpop.f32.mrf.mxu0
    %v1274 = vadd.f32 %v423, %v1273
    %v1275 = vpop.f32.mrf.mxu0
    %v1276 = vadd.f32 %v427, %v1275
    %1277 = vmatprep.mubr.f32.mxu0 %v77
    %1278 = vmatmul.mubr.f32.gmra.mxu0 %v76
    %v1279 = vpop.f32.mrf.mxu0
    %v1280 = vadd.f32 %v423, %v1279
    %v1281 = vpop.f32.mrf.mxu0
    %v1282 = vadd.f32 %v427, %v1281
    %1283 = vmatprep.mubr.f32.mxu0 %v79
    %1284 = vmatmul.mubr.f32.gmra.mxu0 %v78
    %v1285 = vpop.f32.mrf.mxu0
    %v1286 = vadd.f32 %v423, %v1285
    %v1287 = vpop.f32.mrf.mxu0
    %v1288 = vadd.f32 %v427, %v1287
    %1289 = vmatprep.mubr.f32.mxu0 %v81
    %1290 = vmatmul.mubr.f32.gmra.mxu0 %v80
    %v1291 = vpop.f32.mrf.mxu0
    %v1292 = vadd.f32 %v423, %v1291
    %v1293 = vpop.f32.mrf.mxu0
    %v1294 = vadd.f32 %v427, %v1293
    %1295 = vmatprep.mubr.f32.mxu0 %v83
    %1296 = vmatmul.mubr.f32.gmra.mxu0 %v82
    %v1297 = vpop.f32.mrf.mxu0
    %v1298 = vadd.f32 %v423, %v1297
    %v1299 = vpop.f32.mrf.mxu0
    %v1300 = vadd.f32 %v427, %v1299
    %1301 = vmatprep.mubr.f32.mxu0 %v85
    %1302 = vmatmul.mubr.f32.gmra.mxu0 %v84
    %v1303 = vpop.f32.mrf.mxu0
    %v1304 = vadd.f32 %v423, %v1303
    %v1305 = vpop.f32.mrf.mxu0
    %v1306 = vadd.f32 %v427, %v1305
    %1307 = vmatprep.mubr.f32.mxu0 %v87
    %1308 = vmatmul.mubr.f32.gmra.mxu0 %v86
    %v1309 = vpop.f32.mrf.mxu0
    %v1310 = vadd.f32 %v423, %v1309
    %v1311 = vpop.f32.mrf.mxu0
    %v1312 = vadd.f32 %v427, %v1311
    %1313 = vmatprep.mubr.f32.mxu0 %v89
    %1314 = vmatmul.mubr.f32.gmra.mxu0 %v88
    %v1315 = vpop.f32.mrf.mxu0
    %v1316 = vadd.f32 %v423, %v1315
    %v1317 = vpop.f32.mrf.mxu0
    %v1318 = vadd.f32 %v427, %v1317
    %1319 = vmatprep.mubr.f32.mxu0 %v91
    %1320 = vmatmul.mubr.f32.gmra.mxu0 %v90
    %v1321 = vpop.f32.mrf.mxu0
    %v1322 = vadd.f32 %v423, %v1321
    %v1323 = vpop.f32.mrf.mxu0
    %v1324 = vadd.f32 %v427, %v1323
    %1325 = vmatprep.mubr.f32.mxu0 %v93
    %1326 = vmatmul.mubr.f32.gmra.mxu0 %v92
    %v1327 = vpop.f32.mrf.mxu0
    %v1328 = vadd.f32 %v423, %v1327
    %v1329 = vpop.f32.mrf.mxu0
    %v1330 = vadd.f32 %v427, %v1329
    %1331 = vmatprep.mubr.f32.mxu0 %v95
    %1332 = vmatmul.mubr.f32.gmra.mxu0 %v94
    %v1333 = vpop.f32.mrf.mxu0
    %v1334 = vadd.f32 %v423, %v1333
    %v1335 = vpop.f32.mrf.mxu0
    %v1336 = vadd.f32 %v427, %v1335
    %1337 = vmatprep.mubr.f32.mxu0 %v97
    %1338 = vmatmul.mubr.f32.gmra.mxu0 %v96
    %v1339 = vpop.f32.mrf.mxu0
    %v1340 = vadd.f32 %v423, %v1339
    %v1341 = vpop.f32.mrf.mxu0
    %v1342 = vadd.f32 %v427, %v1341
    %1343 = vmatprep.mubr.f32.mxu0 %v99
    %1344 = vmatmul.mubr.f32.gmra.mxu0 %v98
    %v1345 = vpop.f32.mrf.mxu0
    %v1346 = vadd.f32 %v423, %v1345
    %v1347 = vpop.f32.mrf.mxu0
    %v1348 = vadd.f32 %v427, %v1347
    %1349 = vmatprep.mubr.f32.mxu0 %v101
    %1350 = vmatmul.mubr.f32.gmra.mxu0 %v100
    %v1351 = vpop.f32.mrf.mxu0
    %v1352 = vadd.f32 %v423, %v1351
    %v1353 = vpop.f32.mrf.mxu0
    %v1354 = vadd.f32 %v427, %v1353
    %1355 = vmatprep.mubr.f32.mxu0 %v103
    %1356 = vmatmul.mubr.f32.gmra.mxu0 %v102
    %v1357 = vpop.f32.mrf.mxu0
    %v1358 = vadd.f32 %v423, %v1357
    %v1359 = vpop.f32.mrf.mxu0
    %v1360 = vadd.f32 %v427, %v1359
    %1361 = vmatprep.mubr.f32.mxu0 %v105
    %1362 = vmatmul.mubr.f32.gmra.mxu0 %v104
    %v1363 = vpop.f32.mrf.mxu0
    %v1364 = vadd.f32 %v423, %v1363
    %v1365 = vpop.f32.mrf.mxu0
    %v1366 = vadd.f32 %v427, %v1365
    %1367 = vmatprep.mubr.f32.mxu0 %v107
    %1368 = vmatmul.mubr.f32.gmra.mxu0 %v106
    %v1369 = vpop.f32.mrf.mxu0
    %v1370 = vadd.f32 %v423, %v1369
    %v1371 = vpop.f32.mrf.mxu0
    %v1372 = vadd.f32 %v427, %v1371
    %1373 = vmatprep.mubr.f32.mxu0 %v109
    %1374 = vmatmul.mubr.f32.gmra.mxu0 %v108
    %v1375 = vpop.f32.mrf.mxu0
    %v1376 = vadd.f32 %v423, %v1375
    %v1377 = vpop.f32.mrf.mxu0
    %v1378 = vadd.f32 %v427, %v1377
    %1379 = vmatprep.mubr.f32.mxu0 %v111
    %1380 = vmatmul.mubr.f32.gmra.mxu0 %v110
    %v1381 = vpop.f32.mrf.mxu0
    %v1382 = vadd.f32 %v423, %v1381
    %v1383 = vpop.f32.mrf.mxu0
    %v1384 = vadd.f32 %v427, %v1383
    %1385 = vmatprep.mubr.f32.mxu0 %v113
    %1386 = vmatmul.mubr.f32.gmra.mxu0 %v112
    %v1387 = vpop.f32.mrf.mxu0
    %v1388 = vadd.f32 %v423, %v1387
    %v1389 = vpop.f32.mrf.mxu0
    %v1390 = vadd.f32 %v427, %v1389
    %1391 = vmatprep.mubr.f32.mxu0 %v115
    %1392 = vmatmul.mubr.f32.gmra.mxu0 %v114
    %v1393 = vpop.f32.mrf.mxu0
    %v1394 = vadd.f32 %v423, %v1393
    %v1395 = vpop.f32.mrf.mxu0
    %v1396 = vadd.f32 %v427, %v1395
    %1397 = vmatprep.mubr.f32.mxu0 %v117
    %1398 = vmatmul.mubr.f32.gmra.mxu0 %v116
    %v1399 = vpop.f32.mrf.mxu0
    %v1400 = vadd.f32 %v423, %v1399
    %v1401 = vpop.f32.mrf.mxu0
    %v1402 = vadd.f32 %v427, %v1401
    %1403 = vmatprep.mubr.f32.mxu0 %v119
    %1404 = vmatmul.mubr.f32.gmra.mxu0 %v118
    %v1405 = vpop.f32.mrf.mxu0
    %v1406 = vadd.f32 %v423, %v1405
    %v1407 = vpop.f32.mrf.mxu0
    %v1408 = vadd.f32 %v427, %v1407
    %1409 = vmatprep.mubr.f32.mxu0 %v121
    %1410 = vmatmul.mubr.f32.gmra.mxu0 %v120
    %v1411 = vpop.f32.mrf.mxu0
    %v1412 = vadd.f32 %v423, %v1411
    %v1413 = vpop.f32.mrf.mxu0
    %v1414 = vadd.f32 %v427, %v1413
    %1415 = vmatprep.mubr.f32.mxu0 %v123
    %1416 = vmatmul.mubr.f32.gmra.mxu0 %v122
    %v1417 = vpop.f32.mrf.mxu0
    %v1418 = vadd.f32 %v423, %v1417
    %v1419 = vpop.f32.mrf.mxu0
    %v1420 = vadd.f32 %v427, %v1419
    %1421 = vmatprep.mubr.f32.mxu0 %v125
    %1422 = vmatmul.mubr.f32.gmra.mxu0 %v124
    %v1423 = vpop.f32.mrf.mxu0
    %v1424 = vadd.f32 %v423, %v1423
    %v1425 = vpop.f32.mrf.mxu0
    %v1426 = vadd.f32 %v427, %v1425
    %1427 = vmatprep.mubr.f32.mxu0 %v127
    %1428 = vmatmul.mubr.f32.gmra.mxu0 %v126
    %v1429 = vpop.f32.mrf.mxu0
    %v1430 = vadd.f32 %v423, %v1429
    %v1431 = vpop.f32.mrf.mxu0
    %v1432 = vadd.f32 %v427, %v1431
    %1433 = vmatprep.mubr.f32.mxu0 %v129
    %1434 = vmatmul.mubr.f32.gmra.mxu0 %v128
    %v1435 = vpop.f32.mrf.mxu0
    %v1436 = vadd.f32 %v423, %v1435
    %v1437 = vpop.f32.mrf.mxu0
    %v1438 = vadd.f32 %v427, %v1437
    %1439 = vmatprep.mubr.f32.mxu0 %v131
    %1440 = vmatmul.mubr.f32.gmra.mxu0 %v130
    %v1441 = vpop.f32.mrf.mxu0
    %v1442 = vadd.f32 %v423, %v1441
    %v1443 = vpop.f32.mrf.mxu0
    %v1444 = vadd.f32 %v427, %v1443
    %1445 = vmatprep.mubr.f32.mxu0 %v133
    %1446 = vmatmul.mubr.f32.gmra.mxu0 %v132
    %v1447 = vpop.f32.mrf.mxu0
    %v1448 = vadd.f32 %v423, %v1447
    %v1449 = vpop.f32.mrf.mxu0
    %v1450 = vadd.f32 %v427, %v1449
    %1451 = vmatprep.mubr.f32.mxu0 %v135
    %1452 = vmatmul.mubr.f32.gmra.mxu0 %v134
    %v1453 = vpop.f32.mrf.mxu0
    %v1454 = vadd.f32 %v423, %v1453
    %v1455 = vpop.f32.mrf.mxu0
    %v1456 = vadd.f32 %v427, %v1455
    %1457 = vmatprep.mubr.f32.mxu0 %v137
    %1458 = vmatmul.mubr.f32.gmra.mxu0 %v136
    %v1459 = vpop.f32.mrf.mxu0
    %v1460 = vadd.f32 %v423, %v1459
    %v1461 = vpop.f32.mrf.mxu0
    %v1462 = vadd.f32 %v427, %v1461
    %1463 = vdwg.mxu0
    %v1464 = vmul.f32 %v503, 0.01
    %v1465 = vmul.f32 %v505, 0.01
    %v1466 = vmul.f32 %v760, 0.01
    %v1467 = vmul.f32 %v762, 0.01
    %v1468 = vmul.f32 %v1017, 0.01
    %v1469 = vmul.f32 %v1019, 0.01
    %v1470 = vmul.f32 %v1274, 0.01
    %v1471 = vmul.f32 %v1276, 0.01
    %v1472 = vmul.f32 %v509, 0.01
    %v1473 = vmul.f32 %v511, 0.01
    %v1474 = vmul.f32 %v766, 0.01
    %v1475 = vmul.f32 %v768, 0.01
    %v1476 = vmul.f32 %v1023, 0.01
    %v1477 = vmul.f32 %v1025, 0.01
    %v1478 = vmul.f32 %v1280, 0.01
    %v1479 = vmul.f32 %v1282, 0.01
    %v1480 = vmul.f32 %v515, 0.01
    %v1481 = vmul.f32 %v517, 0.01
    %v1482 = vmul.f32 %v772, 0.01
    %v1483 = vmul.f32 %v774, 0.01
    %v1484 = vmul.f32 %v1029, 0.01
    %v1485 = vmul.f32 %v1031, 0.01
    %v1486 = vmul.f32 %v1286, 0.01
    %v1487 = vmul.f32 %v1288, 0.01
    %v1488 = vmul.f32 %v521, 0.01
    %v1489 = vmul.f32 %v523, 0.01
    %v1490 = vmul.f32 %v778, 0.01
    %v1491 = vmul.f32 %v780, 0.01
    %v1492 = vmul.f32 %v1035, 0.01
    %v1493 = vmul.f32 %v1037, 0.01
    %v1494 = vmul.f32 %v1292, 0.01
    %v1495 = vmul.f32 %v1294, 0.01
    %v1496 = vmul.f32 %v527, 0.01
    %v1497 = vmul.f32 %v529, 0.01
    %v1498 = vmul.f32 %v784, 0.01
    %v1499 = vmul.f32 %v786, 0.01
    %v1500 = vmul.f32 %v1041, 0.01
    %v1501 = vmul.f32 %v1043, 0.01
    %v1502 = vmul.f32 %v1298, 0.01
    %v1503 = vmul.f32 %v1300, 0.01
    %v1504 = vmul.f32 %v533, 0.01
    %v1505 = vmul.f32 %v535, 0.01
    %v1506 = vmul.f32 %v790, 0.01
    %v1507 = vmul.f32 %v792, 0.01
    %v1508 = vmul.f32 %v1047, 0.01
    %v1509 = vmul.f32 %v1049, 0.01
    %v1510 = vmul.f32 %v1304, 0.01
    %v1511 = vmul.f32 %v1306, 0.01
    %v1512 = vmul.f32 %v539, 0.01
    %v1513 = vmul.f32 %v541, 0.01
    %v1514 = vmul.f32 %v796, 0.01
    %v1515 = vmul.f32 %v798, 0.01
    %v1516 = vmul.f32 %v1053, 0.01
    %v1517 = vmul.f32 %v1055, 0.01
    %v1518 = vmul.f32 %v1310, 0.01
    %v1519 = vmul.f32 %v1312, 0.01
    %v1520 = vmul.f32 %v545, 0.01
    %v1521 = vmul.f32 %v547, 0.01
    %v1522 = vmul.f32 %v802, 0.01
    %v1523 = vmul.f32 %v804, 0.01
    %v1524 = vmul.f32 %v1059, 0.01
    %v1525 = vmul.f32 %v1061, 0.01
    %v1526 = vmul.f32 %v1316, 0.01
    %v1527 = vmul.f32 %v1318, 0.01
    %v1528 = vmul.f32 %v551, 0.01
    %v1529 = vmul.f32 %v553, 0.01
    %v1530 = vmul.f32 %v808, 0.01
    %v1531 = vmul.f32 %v810, 0.01
    %v1532 = vmul.f32 %v1065, 0.01
    %v1533 = vmul.f32 %v1067, 0.01
    %v1534 = vmul.f32 %v1322, 0.01
    %v1535 = vmul.f32 %v1324, 0.01
    %v1536 = vmul.f32 %v557, 0.01
    %v1537 = vmul.f32 %v559, 0.01
    %v1538 = vmul.f32 %v814, 0.01
    %v1539 = vmul.f32 %v816, 0.01
    %v1540 = vmul.f32 %v1071, 0.01
    %v1541 = vmul.f32 %v1073, 0.01
    %v1542 = vmul.f32 %v1328, 0.01
    %v1543 = vmul.f32 %v1330, 0.01
    %v1544 = vmul.f32 %v563, 0.01
    %v1545 = vmul.f32 %v565, 0.01
    %v1546 = vmul.f32 %v820, 0.01
    %v1547 = vmul.f32 %v822, 0.01
    %v1548 = vmul.f32 %v1077, 0.01
    %v1549 = vmul.f32 %v1079, 0.01
    %v1550 = vmul.f32 %v1334, 0.01
    %v1551 = vmul.f32 %v1336, 0.01
    %v1552 = vmul.f32 %v569, 0.01
    %v1553 = vmul.f32 %v571, 0.01
    %v1554 = vmul.f32 %v826, 0.01
    %v1555 = vmul.f32 %v828, 0.01
    %v1556 = vmul.f32 %v1083, 0.01
    %v1557 = vmul.f32 %v1085, 0.01
    %v1558 = vmul.f32 %v1340, 0.01
    %v1559 = vmul.f32 %v1342, 0.01
    %v1560 = vmul.f32 %v575, 0.01
    %v1561 = vmul.f32 %v577, 0.01
    %v1562 = vmul.f32 %v832, 0.01
    %v1563 = vmul.f32 %v834, 0.01
    %v1564 = vmul.f32 %v1089, 0.01
    %v1565 = vmul.f32 %v1091, 0.01
    %v1566 = vmul.f32 %v1346, 0.01
    %v1567 = vmul.f32 %v1348, 0.01
    %v1568 = vmul.f32 %v581, 0.01
    %v1569 = vmul.f32 %v583, 0.01
    %v1570 = vmul.f32 %v838, 0.01
    %v1571 = vmul.f32 %v840, 0.01
    %v1572 = vmul.f32 %v1095, 0.01
    %v1573 = vmul.f32 %v1097, 0.01
    %v1574 = vmul.f32 %v1352, 0.01
    %v1575 = vmul.f32 %v1354, 0.01
    %v1576 = vmul.f32 %v587, 0.01
    %v1577 = vmul.f32 %v589, 0.01
    %v1578 = vmul.f32 %v844, 0.01
    %v1579 = vmul.f32 %v846, 0.01
    %v1580 = vmul.f32 %v1101, 0.01
    %v1581 = vmul.f32 %v1103, 0.01
    %v1582 = vmul.f32 %v1358, 0.01
    %v1583 = vmul.f32 %v1360, 0.01
    %v1584 = vmul.f32 %v593, 0.01
    %v1585 = vmul.f32 %v595, 0.01
    %v1586 = vmul.f32 %v850, 0.01
    %v1587 = vmul.f32 %v852, 0.01
    %v1588 = vmul.f32 %v1107, 0.01
    %v1589 = vmul.f32 %v1109, 0.01
    %v1590 = vmul.f32 %v1364, 0.01
    %v1591 = vmul.f32 %v1366, 0.01
    %v1592 = vmul.f32 %v599, 0.01
    %v1593 = vmul.f32 %v601, 0.01
    %v1594 = vmul.f32 %v856, 0.01
    %v1595 = vmul.f32 %v858, 0.01
    %v1596 = vmul.f32 %v1113, 0.01
    %v1597 = vmul.f32 %v1115, 0.01
    %v1598 = vmul.f32 %v1370, 0.01
    %v1599 = vmul.f32 %v1372, 0.01
    %v1600 = vmul.f32 %v605, 0.01
    %v1601 = vmul.f32 %v607, 0.01
    %v1602 = vmul.f32 %v862, 0.01
    %v1603 = vmul.f32 %v864, 0.01
    %v1604 = vmul.f32 %v1119, 0.01
    %v1605 = vmul.f32 %v1121, 0.01
    %v1606 = vmul.f32 %v1376, 0.01
    %v1607 = vmul.f32 %v1378, 0.01
    %v1608 = vmul.f32 %v611, 0.01
    %v1609 = vmul.f32 %v613, 0.01
    %v1610 = vmul.f32 %v868, 0.01
    %v1611 = vmul.f32 %v870, 0.01
    %v1612 = vmul.f32 %v1125, 0.01
    %v1613 = vmul.f32 %v1127, 0.01
    %v1614 = vmul.f32 %v1382, 0.01
    %v1615 = vmul.f32 %v1384, 0.01
    %v1616 = vmul.f32 %v617, 0.01
    %v1617 = vmul.f32 %v619, 0.01
    %v1618 = vmul.f32 %v874, 0.01
    %v1619 = vmul.f32 %v876, 0.01
    %v1620 = vmul.f32 %v1131, 0.01
    %v1621 = vmul.f32 %v1133, 0.01
    %v1622 = vmul.f32 %v1388, 0.01
    %v1623 = vmul.f32 %v1390, 0.01
    %v1624 = vmul.f32 %v623, 0.01
    %v1625 = vmul.f32 %v625, 0.01
    %v1626 = vmul.f32 %v880, 0.01
    %v1627 = vmul.f32 %v882, 0.01
    %v1628 = vmul.f32 %v1137, 0.01
    %v1629 = vmul.f32 %v1139, 0.01
    %v1630 = vmul.f32 %v1394, 0.01
    %v1631 = vmul.f32 %v1396, 0.01
    %v1632 = vmul.f32 %v629, 0.01
    %v1633 = vmul.f32 %v631, 0.01
    %v1634 = vmul.f32 %v886, 0.01
    %v1635 = vmul.f32 %v888, 0.01
    %v1636 = vmul.f32 %v1143, 0.01
    %v1637 = vmul.f32 %v1145, 0.01
    %v1638 = vmul.f32 %v1400, 0.01
    %v1639 = vmul.f32 %v1402, 0.01
    %v1640 = vmul.f32 %v635, 0.01
    %v1641 = vmul.f32 %v637, 0.01
    %v1642 = vmul.f32 %v892, 0.01
    %v1643 = vmul.f32 %v894, 0.01
    %v1644 = vmul.f32 %v1149, 0.01
    %v1645 = vmul.f32 %v1151, 0.01
    %v1646 = vmul.f32 %v1406, 0.01
    %v1647 = vmul.f32 %v1408, 0.01
    %v1648 = vmul.f32 %v641, 0.01
    %v1649 = vmul.f32 %v643, 0.01
    %v1650 = vmul.f32 %v898, 0.01
    %v1651 = vmul.f32 %v900, 0.01
    %v1652 = vmul.f32 %v1155, 0.01
    %v1653 = vmul.f32 %v1157, 0.01
    %v1654 = vmul.f32 %v1412, 0.01
    %v1655 = vmul.f32 %v1414, 0.01
    %v1656 = vmul.f32 %v647, 0.01
    %v1657 = vmul.f32 %v649, 0.01
    %v1658 = vmul.f32 %v904, 0.01
    %v1659 = vmul.f32 %v906, 0.01
    %v1660 = vmul.f32 %v1161, 0.01
    %v1661 = vmul.f32 %v1163, 0.01
    %v1662 = vmul.f32 %v1418, 0.01
    %v1663 = vmul.f32 %v1420, 0.01
    %v1664 = vmul.f32 %v653, 0.01
    %v1665 = vmul.f32 %v655, 0.01
    %v1666 = vmul.f32 %v910, 0.01
    %v1667 = vmul.f32 %v912, 0.01
    %v1668 = vmul.f32 %v1167, 0.01
    %v1669 = vmul.f32 %v1169, 0.01
    %v1670 = vmul.f32 %v1424, 0.01
    %v1671 = vmul.f32 %v1426, 0.01
    %v1672 = vmul.f32 %v659, 0.01
    %v1673 = vmul.f32 %v661, 0.01
    %v1674 = vmul.f32 %v916, 0.01
    %v1675 = vmul.f32 %v918, 0.01
    %v1676 = vmul.f32 %v1173, 0.01
    %v1677 = vmul.f32 %v1175, 0.01
    %v1678 = vmul.f32 %v1430, 0.01
    %v1679 = vmul.f32 %v1432, 0.01
    %v1680 = vmul.f32 %v665, 0.01
    %v1681 = vmul.f32 %v667, 0.01
    %v1682 = vmul.f32 %v922, 0.01
    %v1683 = vmul.f32 %v924, 0.01
    %v1684 = vmul.f32 %v1179, 0.01
    %v1685 = vmul.f32 %v1181, 0.01
    %v1686 = vmul.f32 %v1436, 0.01
    %v1687 = vmul.f32 %v1438, 0.01
    %v1688 = vmul.f32 %v671, 0.01
    %v1689 = vmul.f32 %v673, 0.01
    %v1690 = vmul.f32 %v928, 0.01
    %v1691 = vmul.f32 %v930, 0.01
    %v1692 = vmul.f32 %v1185, 0.01
    %v1693 = vmul.f32 %v1187, 0.01
    %v1694 = vmul.f32 %v1442, 0.01
    %v1695 = vmul.f32 %v1444, 0.01
    %v1696 = vmul.f32 %v677, 0.01
    %v1697 = vmul.f32 %v679, 0.01
    %v1698 = vmul.f32 %v934, 0.01
    %v1699 = vmul.f32 %v936, 0.01
    %v1700 = vmul.f32 %v1191, 0.01
    %v1701 = vmul.f32 %v1193, 0.01
    %v1702 = vmul.f32 %v1448, 0.01
    %v1703 = vmul.f32 %v1450, 0.01
    %v1704 = vmul.f32 %v683, 0.01
    %v1705 = vmul.f32 %v685, 0.01
    %v1706 = vmul.f32 %v940, 0.01
    %v1707 = vmul.f32 %v942, 0.01
    %v1708 = vmul.f32 %v1197, 0.01
    %v1709 = vmul.f32 %v1199, 0.01
    %v1710 = vmul.f32 %v1454, 0.01
    %v1711 = vmul.f32 %v1456, 0.01
    %v1712 = vmul.f32 %v689, 0.01
    %v1713 = vmul.f32 %v691, 0.01
    %v1714 = vmul.f32 %v946, 0.01
    %v1715 = vmul.f32 %v948, 0.01
    %v1716 = vmul.f32 %v1203, 0.01
    %v1717 = vmul.f32 %v1205, 0.01
    %v1718 = vmul.f32 %v1460, 0.01
    %v1719 = vmul.f32 %v1462, 0.01
    %v1720 = vmax.f32 %v503, %v1464
    %v1721 = vmax.f32 %v505, %v1465
    %v1722 = vmax.f32 %v760, %v1466
    %v1723 = vmax.f32 %v762, %v1467
    %v1724 = vmax.f32 %v1017, %v1468
    %v1725 = vmax.f32 %v1019, %v1469
    %v1726 = vmax.f32 %v1274, %v1470
    %v1727 = vmax.f32 %v1276, %v1471
    %v1728 = vmax.f32 %v509, %v1472
    %v1729 = vmax.f32 %v511, %v1473
    %v1730 = vmax.f32 %v766, %v1474
    %v1731 = vmax.f32 %v768, %v1475
    %v1732 = vmax.f32 %v1023, %v1476
    %v1733 = vmax.f32 %v1025, %v1477
    %v1734 = vmax.f32 %v1280, %v1478
    %v1735 = vmax.f32 %v1282, %v1479
    %v1736 = vmax.f32 %v515, %v1480
    %v1737 = vmax.f32 %v517, %v1481
    %v1738 = vmax.f32 %v772, %v1482
    %v1739 = vmax.f32 %v774, %v1483
    %v1740 = vmax.f32 %v1029, %v1484
    %v1741 = vmax.f32 %v1031, %v1485
    %v1742 = vmax.f32 %v1286, %v1486
    %v1743 = vmax.f32 %v1288, %v1487
    %v1744 = vmax.f32 %v521, %v1488
    %v1745 = vmax.f32 %v523, %v1489
    %v1746 = vmax.f32 %v778, %v1490
    %v1747 = vmax.f32 %v780, %v1491
    %v1748 = vmax.f32 %v1035, %v1492
    %v1749 = vmax.f32 %v1037, %v1493
    %v1750 = vmax.f32 %v1292, %v1494
    %v1751 = vmax.f32 %v1294, %v1495
    %v1752 = vmax.f32 %v527, %v1496
    %v1753 = vmax.f32 %v529, %v1497
    %v1754 = vmax.f32 %v784, %v1498
    %v1755 = vmax.f32 %v786, %v1499
    %v1756 = vmax.f32 %v1041, %v1500
    %v1757 = vmax.f32 %v1043, %v1501
    %v1758 = vmax.f32 %v1298, %v1502
    %v1759 = vmax.f32 %v1300, %v1503
    %v1760 = vmax.f32 %v533, %v1504
    %v1761 = vmax.f32 %v535, %v1505
    %v1762 = vmax.f32 %v790, %v1506
    %v1763 = vmax.f32 %v792, %v1507
    %v1764 = vmax.f32 %v1047, %v1508
    %v1765 = vmax.f32 %v1049, %v1509
    %v1766 = vmax.f32 %v1304, %v1510
    %v1767 = vmax.f32 %v1306, %v1511
    %v1768 = vmax.f32 %v539, %v1512
    %v1769 = vmax.f32 %v541, %v1513
    %v1770 = vmax.f32 %v796, %v1514
    %v1771 = vmax.f32 %v798, %v1515
    %v1772 = vmax.f32 %v1053, %v1516
    %v1773 = vmax.f32 %v1055, %v1517
    %v1774 = vmax.f32 %v1310, %v1518
    %v1775 = vmax.f32 %v1312, %v1519
    %v1776 = vmax.f32 %v545, %v1520
    %v1777 = vmax.f32 %v547, %v1521
    %v1778 = vmax.f32 %v802, %v1522
    %v1779 = vmax.f32 %v804, %v1523
    %v1780 = vmax.f32 %v1059, %v1524
    %v1781 = vmax.f32 %v1061, %v1525
    %v1782 = vmax.f32 %v1316, %v1526
    %v1783 = vmax.f32 %v1318, %v1527
    %v1784 = vmax.f32 %v551, %v1528
    %v1785 = vmax.f32 %v553, %v1529
    %v1786 = vmax.f32 %v808, %v1530
    %v1787 = vmax.f32 %v810, %v1531
    %v1788 = vmax.f32 %v1065, %v1532
    %v1789 = vmax.f32 %v1067, %v1533
    %v1790 = vmax.f32 %v1322, %v1534
    %v1791 = vmax.f32 %v1324, %v1535
    %v1792 = vmax.f32 %v557, %v1536
    %v1793 = vmax.f32 %v559, %v1537
    %v1794 = vmax.f32 %v814, %v1538
    %v1795 = vmax.f32 %v816, %v1539
    %v1796 = vmax.f32 %v1071, %v1540
    %v1797 = vmax.f32 %v1073, %v1541
    %v1798 = vmax.f32 %v1328, %v1542
    %v1799 = vmax.f32 %v1330, %v1543
    %v1800 = vmax.f32 %v563, %v1544
    %v1801 = vmax.f32 %v565, %v1545
    %v1802 = vmax.f32 %v820, %v1546
    %v1803 = vmax.f32 %v822, %v1547
    %v1804 = vmax.f32 %v1077, %v1548
    %v1805 = vmax.f32 %v1079, %v1549
    %v1806 = vmax.f32 %v1334, %v1550
    %v1807 = vmax.f32 %v1336, %v1551
    %v1808 = vmax.f32 %v569, %v1552
    %v1809 = vmax.f32 %v571, %v1553
    %v1810 = vmax.f32 %v826, %v1554
    %v1811 = vmax.f32 %v828, %v1555
    %v1812 = vmax.f32 %v1083, %v1556
    %v1813 = vmax.f32 %v1085, %v1557
    %v1814 = vmax.f32 %v1340, %v1558
    %v1815 = vmax.f32 %v1342, %v1559
    %v1816 = vmax.f32 %v575, %v1560
    %v1817 = vmax.f32 %v577, %v1561
    %v1818 = vmax.f32 %v832, %v1562
    %v1819 = vmax.f32 %v834, %v1563
    %v1820 = vmax.f32 %v1089, %v1564
    %v1821 = vmax.f32 %v1091, %v1565
    %v1822 = vmax.f32 %v1346, %v1566
    %v1823 = vmax.f32 %v1348, %v1567
    %v1824 = vmax.f32 %v581, %v1568
    %v1825 = vmax.f32 %v583, %v1569
    %v1826 = vmax.f32 %v838, %v1570
    %v1827 = vmax.f32 %v840, %v1571
    %v1828 = vmax.f32 %v1095, %v1572
    %v1829 = vmax.f32 %v1097, %v1573
    %v1830 = vmax.f32 %v1352, %v1574
    %v1831 = vmax.f32 %v1354, %v1575
    %v1832 = vmax.f32 %v587, %v1576
    %v1833 = vmax.f32 %v589, %v1577
    %v1834 = vmax.f32 %v844, %v1578
    %v1835 = vmax.f32 %v846, %v1579
    %v1836 = vmax.f32 %v1101, %v1580
    %v1837 = vmax.f32 %v1103, %v1581
    %v1838 = vmax.f32 %v1358, %v1582
    %v1839 = vmax.f32 %v1360, %v1583
    %v1840 = vmax.f32 %v593, %v1584
    %v1841 = vmax.f32 %v595, %v1585
    %v1842 = vmax.f32 %v850, %v1586
    %v1843 = vmax.f32 %v852, %v1587
    %v1844 = vmax.f32 %v1107, %v1588
    %v1845 = vmax.f32 %v1109, %v1589
    %v1846 = vmax.f32 %v1364, %v1590
    %v1847 = vmax.f32 %v1366, %v1591
    %v1848 = vmax.f32 %v599, %v1592
    %v1849 = vmax.f32 %v601, %v1593
    %v1850 = vmax.f32 %v856, %v1594
    %v1851 = vmax.f32 %v858, %v1595
    %v1852 = vmax.f32 %v1113, %v1596
    %v1853 = vmax.f32 %v1115, %v1597
    %v1854 = vmax.f32 %v1370, %v1598
    %v1855 = vmax.f32 %v1372, %v1599
    %v1856 = vmax.f32 %v605, %v1600
    %v1857 = vmax.f32 %v607, %v1601
    %v1858 = vmax.f32 %v862, %v1602
    %v1859 = vmax.f32 %v864, %v1603
    %v1860 = vmax.f32 %v1119, %v1604
    %v1861 = vmax.f32 %v1121, %v1605
    %v1862 = vmax.f32 %v1376, %v1606
    %v1863 = vmax.f32 %v1378, %v1607
    %v1864 = vmax.f32 %v611, %v1608
    %v1865 = vmax.f32 %v613, %v1609
    %v1866 = vmax.f32 %v868, %v1610
    %v1867 = vmax.f32 %v870, %v1611
    %v1868 = vmax.f32 %v1125, %v1612
    %v1869 = vmax.f32 %v1127, %v1613
    %v1870 = vmax.f32 %v1382, %v1614
    %v1871 = vmax.f32 %v1384, %v1615
    %v1872 = vmax.f32 %v617, %v1616
    %v1873 = vmax.f32 %v619, %v1617
    %v1874 = vmax.f32 %v874, %v1618
    %v1875 = vmax.f32 %v876, %v1619
    %v1876 = vmax.f32 %v1131, %v1620
    %v1877 = vmax.f32 %v1133, %v1621
    %v1878 = vmax.f32 %v1388, %v1622
    %v1879 = vmax.f32 %v1390, %v1623
    %v1880 = vmax.f32 %v623, %v1624
    %v1881 = vmax.f32 %v625, %v1625
    %v1882 = vmax.f32 %v880, %v1626
    %v1883 = vmax.f32 %v882, %v1627
    %v1884 = vmax.f32 %v1137, %v1628
    %v1885 = vmax.f32 %v1139, %v1629
    %v1886 = vmax.f32 %v1394, %v1630
    %v1887 = vmax.f32 %v1396, %v1631
    %v1888 = vmax.f32 %v629, %v1632
    %v1889 = vmax.f32 %v631, %v1633
    %v1890 = vmax.f32 %v886, %v1634
    %v1891 = vmax.f32 %v888, %v1635
    %v1892 = vmax.f32 %v1143, %v1636
    %v1893 = vmax.f32 %v1145, %v1637
    %v1894 = vmax.f32 %v1400, %v1638
    %v1895 = vmax.f32 %v1402, %v1639
    %v1896 = vmax.f32 %v635, %v1640
    %v1897 = vmax.f32 %v637, %v1641
    %v1898 = vmax.f32 %v892, %v1642
    %v1899 = vmax.f32 %v894, %v1643
    %v1900 = vmax.f32 %v1149, %v1644
    %v1901 = vmax.f32 %v1151, %v1645
    %v1902 = vmax.f32 %v1406, %v1646
    %v1903 = vmax.f32 %v1408, %v1647
    %v1904 = vmax.f32 %v641, %v1648
    %v1905 = vmax.f32 %v643, %v1649
    %v1906 = vmax.f32 %v898, %v1650
    %v1907 = vmax.f32 %v900, %v1651
    %v1908 = vmax.f32 %v1155, %v1652
    %v1909 = vmax.f32 %v1157, %v1653
    %v1910 = vmax.f32 %v1412, %v1654
    %v1911 = vmax.f32 %v1414, %v1655
    %v1912 = vmax.f32 %v647, %v1656
    %v1913 = vmax.f32 %v649, %v1657
    %v1914 = vmax.f32 %v904, %v1658
    %v1915 = vmax.f32 %v906, %v1659
    %v1916 = vmax.f32 %v1161, %v1660
    %v1917 = vmax.f32 %v1163, %v1661
    %v1918 = vmax.f32 %v1418, %v1662
    %v1919 = vmax.f32 %v1420, %v1663
    %v1920 = vmax.f32 %v653, %v1664
    %v1921 = vmax.f32 %v655, %v1665
    %v1922 = vmax.f32 %v910, %v1666
    %v1923 = vmax.f32 %v912, %v1667
    %v1924 = vmax.f32 %v1167, %v1668
    %v1925 = vmax.f32 %v1169, %v1669
    %v1926 = vmax.f32 %v1424, %v1670
    %v1927 = vmax.f32 %v1426, %v1671
    %v1928 = vmax.f32 %v659, %v1672
    %v1929 = vmax.f32 %v661, %v1673
    %v1930 = vmax.f32 %v916, %v1674
    %v1931 = vmax.f32 %v918, %v1675
    %v1932 = vmax.f32 %v1173, %v1676
    %v1933 = vmax.f32 %v1175, %v1677
    %v1934 = vmax.f32 %v1430, %v1678
    %v1935 = vmax.f32 %v1432, %v1679
    %v1936 = vmax.f32 %v665, %v1680
    %v1937 = vmax.f32 %v667, %v1681
    %v1938 = vmax.f32 %v922, %v1682
    %v1939 = vmax.f32 %v924, %v1683
    %v1940 = vmax.f32 %v1179, %v1684
    %v1941 = vmax.f32 %v1181, %v1685
    %v1942 = vmax.f32 %v1436, %v1686
    %v1943 = vmax.f32 %v1438, %v1687
    %v1944 = vmax.f32 %v671, %v1688
    %v1945 = vmax.f32 %v673, %v1689
    %v1946 = vmax.f32 %v928, %v1690
    %v1947 = vmax.f32 %v930, %v1691
    %v1948 = vmax.f32 %v1185, %v1692
    %v1949 = vmax.f32 %v1187, %v1693
    %v1950 = vmax.f32 %v1442, %v1694
    %v1951 = vmax.f32 %v1444, %v1695
    %v1952 = vmax.f32 %v677, %v1696
    %v1953 = vmax.f32 %v679, %v1697
    %v1954 = vmax.f32 %v934, %v1698
    %v1955 = vmax.f32 %v936, %v1699
    %v1956 = vmax.f32 %v1191, %v1700
    %v1957 = vmax.f32 %v1193, %v1701
    %v1958 = vmax.f32 %v1448, %v1702
    %v1959 = vmax.f32 %v1450, %v1703
    %v1960 = vmax.f32 %v683, %v1704
    %v1961 = vmax.f32 %v685, %v1705
    %v1962 = vmax.f32 %v940, %v1706
    %v1963 = vmax.f32 %v942, %v1707
    %v1964 = vmax.f32 %v1197, %v1708
    %v1965 = vmax.f32 %v1199, %v1709
    %v1966 = vmax.f32 %v1454, %v1710
    %v1967 = vmax.f32 %v1456, %v1711
    %v1968 = vmax.f32 %v689, %v1712
    %v1969 = vmax.f32 %v691, %v1713
    %v1970 = vmax.f32 %v946, %v1714
    %v1971 = vmax.f32 %v948, %v1715
    %v1972 = vmax.f32 %v1203, %v1716
    %v1973 = vmax.f32 %v1205, %v1717
    %v1974 = vmax.f32 %v1460, %v1718
    %v1975 = vmax.f32 %v1462, %v1719
    %v1976 = vld [vmem:[#allocation8] sm:$0xff]
    %v1977 = vld [vmem:[#allocation8 + $0x8] sm:$0xff]
    %v1978 = vld [vmem:[#allocation8 + $0x10] sm:$0xff]
    %v1979 = vld [vmem:[#allocation8 + $0x18] sm:$0xff]
    %v1980 = vld [vmem:[#allocation8 + $0x20] sm:$0xff]
    %v1981 = vld [vmem:[#allocation8 + $0x28] sm:$0xff]
    %v1982 = vld [vmem:[#allocation8 + $0x30] sm:$0xff]
    %v1983 = vld [vmem:[#allocation8 + $0x38] sm:$0xff]
    %v1984 = vld [vmem:[#allocation8 + $0x40] sm:$0xff]
    %v1985 = vld [vmem:[#allocation8 + $0x48] sm:$0xff]
    %v1986 = vld [vmem:[#allocation8 + $0x50] sm:$0xff]
    %v1987 = vld [vmem:[#allocation8 + $0x58] sm:$0xff]
    %v1988 = vld [vmem:[#allocation8 + $0x60] sm:$0xff]
    %v1989 = vld [vmem:[#allocation8 + $0x68] sm:$0xff]
    %v1990 = vld [vmem:[#allocation8 + $0x70] sm:$0xff]
    %v1991 = vld [vmem:[#allocation8 + $0x78] sm:$0xff]
    %v1992 = vld [vmem:[#allocation8 + $0x80] sm:$0xff]
    %v1993 = vld [vmem:[#allocation8 + $0x88] sm:$0xff]
    %v1994 = vld [vmem:[#allocation8 + $0x90] sm:$0xff]
    %v1995 = vld [vmem:[#allocation8 + $0x98] sm:$0xff]
    %v1996 = vld [vmem:[#allocation8 + $0xa0] sm:$0xff]
    %v1997 = vld [vmem:[#allocation8 + $0xa8] sm:$0xff]
    %v1998 = vld [vmem:[#allocation8 + $0xb0] sm:$0xff]
    %v1999 = vld [vmem:[#allocation8 + $0xb8] sm:$0xff]
    %v2000 = vld [vmem:[#allocation8 + $0xc0] sm:$0xff]
    %v2001 = vld [vmem:[#allocation8 + $0xc8] sm:$0xff]
    %v2002 = vld [vmem:[#allocation8 + $0xd0] sm:$0xff]
    %v2003 = vld [vmem:[#allocation8 + $0xd8] sm:$0xff]
    %v2004 = vld [vmem:[#allocation8 + $0xe0] sm:$0xff]
    %v2005 = vld [vmem:[#allocation8 + $0xe8] sm:$0xff]
    %v2006 = vld [vmem:[#allocation8 + $0xf0] sm:$0xff]
    %v2007 = vld [vmem:[#allocation8 + $0xf8] sm:$0xff]
    %v2008 = vld [vmem:[#allocation8 + $0x100] sm:$0xff]
    %v2009 = vld [vmem:[#allocation8 + $0x108] sm:$0xff]
    %v2010 = vld [vmem:[#allocation8 + $0x110] sm:$0xff]
    %v2011 = vld [vmem:[#allocation8 + $0x118] sm:$0xff]
    %v2012 = vld [vmem:[#allocation8 + $0x120] sm:$0xff]
    %v2013 = vld [vmem:[#allocation8 + $0x128] sm:$0xff]
    %v2014 = vld [vmem:[#allocation8 + $0x130] sm:$0xff]
    %v2015 = vld [vmem:[#allocation8 + $0x138] sm:$0xff]
    %v2016 = vld [vmem:[#allocation8 + $0x140] sm:$0xff]
    %v2017 = vld [vmem:[#allocation8 + $0x148] sm:$0xff]
    %v2018 = vld [vmem:[#allocation8 + $0x150] sm:$0xff]
    %v2019 = vld [vmem:[#allocation8 + $0x158] sm:$0xff]
    %v2020 = vld [vmem:[#allocation8 + $0x160] sm:$0xff]
    %v2021 = vld [vmem:[#allocation8 + $0x168] sm:$0xff]
    %v2022 = vld [vmem:[#allocation8 + $0x170] sm:$0xff]
    %v2023 = vld [vmem:[#allocation8 + $0x178] sm:$0xff]
    %v2024 = vld [vmem:[#allocation8 + $0x180] sm:$0xff]
    %v2025 = vld [vmem:[#allocation8 + $0x188] sm:$0xff]
    %v2026 = vld [vmem:[#allocation8 + $0x190] sm:$0xff]
    %v2027 = vld [vmem:[#allocation8 + $0x198] sm:$0xff]
    %v2028 = vld [vmem:[#allocation8 + $0x1a0] sm:$0xff]
    %v2029 = vld [vmem:[#allocation8 + $0x1a8] sm:$0xff]
    %v2030 = vld [vmem:[#allocation8 + $0x1b0] sm:$0xff]
    %v2031 = vld [vmem:[#allocation8 + $0x1b8] sm:$0xff]
    %v2032 = vld [vmem:[#allocation8 + $0x1c0] sm:$0xff]
    %v2033 = vld [vmem:[#allocation8 + $0x1c8] sm:$0xff]
    %v2034 = vld [vmem:[#allocation8 + $0x1d0] sm:$0xff]
    %v2035 = vld [vmem:[#allocation8 + $0x1d8] sm:$0xff]
    %v2036 = vld [vmem:[#allocation8 + $0x1e0] sm:$0xff]
    %v2037 = vld [vmem:[#allocation8 + $0x1e8] sm:$0xff]
    %v2038 = vld [vmem:[#allocation8 + $0x1f0] sm:$0xff]
    %v2039 = vld [vmem:[#allocation8 + $0x1f8] sm:$0xff]
    %v2040 = vld [vmem:[#allocation8 + $0x200] sm:$0xff]
    %v2041 = vld [vmem:[#allocation8 + $0x208] sm:$0xff]
    %v2042 = vld [vmem:[#allocation8 + $0x210] sm:$0xff]
    %v2043 = vld [vmem:[#allocation8 + $0x218] sm:$0xff]
    %v2044 = vld [vmem:[#allocation8 + $0x220] sm:$0xff]
    %v2045 = vld [vmem:[#allocation8 + $0x228] sm:$0xff]
    %v2046 = vld [vmem:[#allocation8 + $0x230] sm:$0xff]
    %v2047 = vld [vmem:[#allocation8 + $0x238] sm:$0xff]
    %v2048 = vld [vmem:[#allocation8 + $0x240] sm:$0xff]
    %v2049 = vld [vmem:[#allocation8 + $0x248] sm:$0xff]
    %v2050 = vld [vmem:[#allocation8 + $0x250] sm:$0xff]
    %v2051 = vld [vmem:[#allocation8 + $0x258] sm:$0xff]
    %v2052 = vld [vmem:[#allocation8 + $0x260] sm:$0xff]
    %v2053 = vld [vmem:[#allocation8 + $0x268] sm:$0xff]
    %v2054 = vld [vmem:[#allocation8 + $0x270] sm:$0xff]
    %v2055 = vld [vmem:[#allocation8 + $0x278] sm:$0xff]
    %v2056 = vld [vmem:[#allocation8 + $0x280] sm:$0xff]
    %v2057 = vld [vmem:[#allocation8 + $0x288] sm:$0xff]
    %v2058 = vld [vmem:[#allocation8 + $0x290] sm:$0xff]
    %v2059 = vld [vmem:[#allocation8 + $0x298] sm:$0xff]
    %v2060 = vld [vmem:[#allocation8 + $0x2a0] sm:$0xff]
    %v2061 = vld [vmem:[#allocation8 + $0x2a8] sm:$0xff]
    %v2062 = vld [vmem:[#allocation8 + $0x2b0] sm:$0xff]
    %v2063 = vld [vmem:[#allocation8 + $0x2b8] sm:$0xff]
    %v2064 = vld [vmem:[#allocation8 + $0x2c0] sm:$0xff]
    %v2065 = vld [vmem:[#allocation8 + $0x2c8] sm:$0xff]
    %v2066 = vld [vmem:[#allocation8 + $0x2d0] sm:$0xff]
    %v2067 = vld [vmem:[#allocation8 + $0x2d8] sm:$0xff]
    %v2068 = vld [vmem:[#allocation8 + $0x2e0] sm:$0xff]
    %v2069 = vld [vmem:[#allocation8 + $0x2e8] sm:$0xff]
    %v2070 = vld [vmem:[#allocation8 + $0x2f0] sm:$0xff]
    %v2071 = vld [vmem:[#allocation8 + $0x2f8] sm:$0xff]
    %v2072 = vld [vmem:[#allocation8 + $0x300] sm:$0xff]
    %v2073 = vld [vmem:[#allocation8 + $0x308] sm:$0xff]
    %v2074 = vld [vmem:[#allocation8 + $0x310] sm:$0xff]
    %v2075 = vld [vmem:[#allocation8 + $0x318] sm:$0xff]
    %v2076 = vld [vmem:[#allocation8 + $0x320] sm:$0xff]
    %v2077 = vld [vmem:[#allocation8 + $0x328] sm:$0xff]
    %v2078 = vld [vmem:[#allocation8 + $0x330] sm:$0xff]
    %v2079 = vld [vmem:[#allocation8 + $0x338] sm:$0xff]
    %v2080 = vld [vmem:[#allocation8 + $0x340] sm:$0xff]
    %v2081 = vld [vmem:[#allocation8 + $0x348] sm:$0xff]
    %v2082 = vld [vmem:[#allocation8 + $0x350] sm:$0xff]
    %v2083 = vld [vmem:[#allocation8 + $0x358] sm:$0xff]
    %v2084 = vld [vmem:[#allocation8 + $0x360] sm:$0xff]
    %v2085 = vld [vmem:[#allocation8 + $0x368] sm:$0xff]
    %v2086 = vld [vmem:[#allocation8 + $0x370] sm:$0xff]
    %v2087 = vld [vmem:[#allocation8 + $0x378] sm:$0xff]
    %v2088 = vld [vmem:[#allocation8 + $0x380] sm:$0xff]
    %v2089 = vld [vmem:[#allocation8 + $0x388] sm:$0xff]
    %v2090 = vld [vmem:[#allocation8 + $0x390] sm:$0xff]
    %v2091 = vld [vmem:[#allocation8 + $0x398] sm:$0xff]
    %v2092 = vld [vmem:[#allocation8 + $0x3a0] sm:$0xff]
    %v2093 = vld [vmem:[#allocation8 + $0x3a8] sm:$0xff]
    %v2094 = vld [vmem:[#allocation8 + $0x3b0] sm:$0xff]
    %v2095 = vld [vmem:[#allocation8 + $0x3b8] sm:$0xff]
    %v2096 = vld [vmem:[#allocation8 + $0x3c0] sm:$0xff]
    %v2097 = vld [vmem:[#allocation8 + $0x3c8] sm:$0xff]
    %v2098 = vld [vmem:[#allocation8 + $0x3d0] sm:$0xff]
    %v2099 = vld [vmem:[#allocation8 + $0x3d8] sm:$0xff]
    %v2100 = vld [vmem:[#allocation8 + $0x3e0] sm:$0xff]
    %v2101 = vld [vmem:[#allocation8 + $0x3e8] sm:$0xff]
    %v2102 = vld [vmem:[#allocation8 + $0x3f0] sm:$0xff]
    %v2103 = vld [vmem:[#allocation8 + $0x3f8] sm:$0xff]
    %v2104 = vld [vmem:[#allocation8 + $0x400] sm:$0xff]
    %v2105 = vld [vmem:[#allocation8 + $0x408] sm:$0xff]
    %v2106 = vld [vmem:[#allocation8 + $0x410] sm:$0xff]
    %v2107 = vld [vmem:[#allocation8 + $0x418] sm:$0xff]
    %v2108 = vld [vmem:[#allocation8 + $0x420] sm:$0xff]
    %v2109 = vld [vmem:[#allocation8 + $0x428] sm:$0xff]
    %v2110 = vld [vmem:[#allocation8 + $0x430] sm:$0xff]
    %v2111 = vld [vmem:[#allocation8 + $0x438] sm:$0xff]
    %v2112 = vld [vmem:[#allocation8 + $0x440] sm:$0xff]
    %v2113 = vld [vmem:[#allocation8 + $0x448] sm:$0xff]
    %v2114 = vld [vmem:[#allocation8 + $0x450] sm:$0xff]
    %v2115 = vld [vmem:[#allocation8 + $0x458] sm:$0xff]
    %v2116 = vld [vmem:[#allocation8 + $0x460] sm:$0xff]
    %v2117 = vld [vmem:[#allocation8 + $0x468] sm:$0xff]
    %v2118 = vld [vmem:[#allocation8 + $0x470] sm:$0xff]
    %v2119 = vld [vmem:[#allocation8 + $0x478] sm:$0xff]
    %v2120 = vld [vmem:[#allocation8 + $0x480] sm:$0xff]
    %v2121 = vld [vmem:[#allocation8 + $0x488] sm:$0xff]
    %v2122 = vld [vmem:[#allocation8 + $0x490] sm:$0xff]
    %v2123 = vld [vmem:[#allocation8 + $0x498] sm:$0xff]
    %v2124 = vld [vmem:[#allocation8 + $0x4a0] sm:$0xff]
    %v2125 = vld [vmem:[#allocation8 + $0x4a8] sm:$0xff]
    %v2126 = vld [vmem:[#allocation8 + $0x4b0] sm:$0xff]
    %v2127 = vld [vmem:[#allocation8 + $0x4b8] sm:$0xff]
    %v2128 = vld [vmem:[#allocation8 + $0x4c0] sm:$0xff]
    %v2129 = vld [vmem:[#allocation8 + $0x4c8] sm:$0xff]
    %v2130 = vld [vmem:[#allocation8 + $0x4d0] sm:$0xff]
    %v2131 = vld [vmem:[#allocation8 + $0x4d8] sm:$0xff]
    %v2132 = vld [vmem:[#allocation8 + $0x4e0] sm:$0xff]
    %v2133 = vld [vmem:[#allocation8 + $0x4e8] sm:$0xff]
    %v2134 = vld [vmem:[#allocation8 + $0x4f0] sm:$0xff]
    %v2135 = vld [vmem:[#allocation8 + $0x4f8] sm:$0xff]
    %v2136 = vld [vmem:[#allocation8 + $0x500] sm:$0xff]
    %v2137 = vld [vmem:[#allocation8 + $0x508] sm:$0xff]
    %v2138 = vld [vmem:[#allocation8 + $0x510] sm:$0xff]
    %v2139 = vld [vmem:[#allocation8 + $0x518] sm:$0xff]
    %v2140 = vld [vmem:[#allocation8 + $0x520] sm:$0xff]
    %v2141 = vld [vmem:[#allocation8 + $0x528] sm:$0xff]
    %v2142 = vld [vmem:[#allocation8 + $0x530] sm:$0xff]
    %v2143 = vld [vmem:[#allocation8 + $0x538] sm:$0xff]
    %v2144 = vld [vmem:[#allocation8 + $0x540] sm:$0xff]
    %v2145 = vld [vmem:[#allocation8 + $0x548] sm:$0xff]
    %v2146 = vld [vmem:[#allocation8 + $0x550] sm:$0xff]
    %v2147 = vld [vmem:[#allocation8 + $0x558] sm:$0xff]
    %v2148 = vld [vmem:[#allocation8 + $0x560] sm:$0xff]
    %v2149 = vld [vmem:[#allocation8 + $0x568] sm:$0xff]
    %v2150 = vld [vmem:[#allocation8 + $0x570] sm:$0xff]
    %v2151 = vld [vmem:[#allocation8 + $0x578] sm:$0xff]
    %v2152 = vld [vmem:[#allocation8 + $0x580] sm:$0xff]
    %v2153 = vld [vmem:[#allocation8 + $0x588] sm:$0xff]
    %v2154 = vld [vmem:[#allocation8 + $0x590] sm:$0xff]
    %v2155 = vld [vmem:[#allocation8 + $0x598] sm:$0xff]
    %v2156 = vld [vmem:[#allocation8 + $0x5a0] sm:$0xff]
    %v2157 = vld [vmem:[#allocation8 + $0x5a8] sm:$0xff]
    %v2158 = vld [vmem:[#allocation8 + $0x5b0] sm:$0xff]
    %v2159 = vld [vmem:[#allocation8 + $0x5b8] sm:$0xff]
    %v2160 = vld [vmem:[#allocation8 + $0x5c0] sm:$0xff]
    %v2161 = vld [vmem:[#allocation8 + $0x5c8] sm:$0xff]
    %v2162 = vld [vmem:[#allocation8 + $0x5d0] sm:$0xff]
    %v2163 = vld [vmem:[#allocation8 + $0x5d8] sm:$0xff]
    %v2164 = vld [vmem:[#allocation8 + $0x5e0] sm:$0xff]
    %v2165 = vld [vmem:[#allocation8 + $0x5e8] sm:$0xff]
    %v2166 = vld [vmem:[#allocation8 + $0x5f0] sm:$0xff]
    %v2167 = vld [vmem:[#allocation8 + $0x5f8] sm:$0xff]
    %v2168 = vld [vmem:[#allocation8 + $0x600] sm:$0xff]
    %v2169 = vld [vmem:[#allocation8 + $0x608] sm:$0xff]
    %v2170 = vld [vmem:[#allocation8 + $0x610] sm:$0xff]
    %v2171 = vld [vmem:[#allocation8 + $0x618] sm:$0xff]
    %v2172 = vld [vmem:[#allocation8 + $0x620] sm:$0xff]
    %v2173 = vld [vmem:[#allocation8 + $0x628] sm:$0xff]
    %v2174 = vld [vmem:[#allocation8 + $0x630] sm:$0xff]
    %v2175 = vld [vmem:[#allocation8 + $0x638] sm:$0xff]
    %v2176 = vld [vmem:[#allocation8 + $0x640] sm:$0xff]
    %v2177 = vld [vmem:[#allocation8 + $0x648] sm:$0xff]
    %v2178 = vld [vmem:[#allocation8 + $0x650] sm:$0xff]
    %v2179 = vld [vmem:[#allocation8 + $0x658] sm:$0xff]
    %v2180 = vld [vmem:[#allocation8 + $0x660] sm:$0xff]
    %v2181 = vld [vmem:[#allocation8 + $0x668] sm:$0xff]
    %v2182 = vld [vmem:[#allocation8 + $0x670] sm:$0xff]
    %v2183 = vld [vmem:[#allocation8 + $0x678] sm:$0xff]
    %v2184 = vld [vmem:[#allocation8 + $0x680] sm:$0xff]
    %v2185 = vld [vmem:[#allocation8 + $0x688] sm:$0xff]
    %v2186 = vld [vmem:[#allocation8 + $0x690] sm:$0xff]
    %v2187 = vld [vmem:[#allocation8 + $0x698] sm:$0xff]
    %v2188 = vld [vmem:[#allocation8 + $0x6a0] sm:$0xff]
    %v2189 = vld [vmem:[#allocation8 + $0x6a8] sm:$0xff]
    %v2190 = vld [vmem:[#allocation8 + $0x6b0] sm:$0xff]
    %v2191 = vld [vmem:[#allocation8 + $0x6b8] sm:$0xff]
    %v2192 = vld [vmem:[#allocation8 + $0x6c0] sm:$0xff]
    %v2193 = vld [vmem:[#allocation8 + $0x6c8] sm:$0xff]
    %v2194 = vld [vmem:[#allocation8 + $0x6d0] sm:$0xff]
    %v2195 = vld [vmem:[#allocation8 + $0x6d8] sm:$0xff]
    %v2196 = vld [vmem:[#allocation8 + $0x6e0] sm:$0xff]
    %v2197 = vld [vmem:[#allocation8 + $0x6e8] sm:$0xff]
    %v2198 = vld [vmem:[#allocation8 + $0x6f0] sm:$0xff]
    %v2199 = vld [vmem:[#allocation8 + $0x6f8] sm:$0xff]
    %v2200 = vld [vmem:[#allocation8 + $0x700] sm:$0xff]
    %v2201 = vld [vmem:[#allocation8 + $0x708] sm:$0xff]
    %v2202 = vld [vmem:[#allocation8 + $0x710] sm:$0xff]
    %v2203 = vld [vmem:[#allocation8 + $0x718] sm:$0xff]
    %v2204 = vld [vmem:[#allocation8 + $0x720] sm:$0xff]
    %v2205 = vld [vmem:[#allocation8 + $0x728] sm:$0xff]
    %v2206 = vld [vmem:[#allocation8 + $0x730] sm:$0xff]
    %v2207 = vld [vmem:[#allocation8 + $0x738] sm:$0xff]
    %v2208 = vld [vmem:[#allocation8 + $0x740] sm:$0xff]
    %v2209 = vld [vmem:[#allocation8 + $0x748] sm:$0xff]
    %v2210 = vld [vmem:[#allocation8 + $0x750] sm:$0xff]
    %v2211 = vld [vmem:[#allocation8 + $0x758] sm:$0xff]
    %v2212 = vld [vmem:[#allocation8 + $0x760] sm:$0xff]
    %v2213 = vld [vmem:[#allocation8 + $0x768] sm:$0xff]
    %v2214 = vld [vmem:[#allocation8 + $0x770] sm:$0xff]
    %v2215 = vld [vmem:[#allocation8 + $0x778] sm:$0xff]
    %v2216 = vld [vmem:[#allocation8 + $0x780] sm:$0xff]
    %v2217 = vld [vmem:[#allocation8 + $0x788] sm:$0xff]
    %v2218 = vld [vmem:[#allocation8 + $0x790] sm:$0xff]
    %v2219 = vld [vmem:[#allocation8 + $0x798] sm:$0xff]
    %v2220 = vld [vmem:[#allocation8 + $0x7a0] sm:$0xff]
    %v2221 = vld [vmem:[#allocation8 + $0x7a8] sm:$0xff]
    %v2222 = vld [vmem:[#allocation8 + $0x7b0] sm:$0xff]
    %v2223 = vld [vmem:[#allocation8 + $0x7b8] sm:$0xff]
    %v2224 = vld [vmem:[#allocation8 + $0x7c0] sm:$0xff]
    %v2225 = vld [vmem:[#allocation8 + $0x7c8] sm:$0xff]
    %v2226 = vld [vmem:[#allocation8 + $0x7d0] sm:$0xff]
    %v2227 = vld [vmem:[#allocation8 + $0x7d8] sm:$0xff]
    %v2228 = vld [vmem:[#allocation8 + $0x7e0] sm:$0xff]
    %v2229 = vld [vmem:[#allocation8 + $0x7e8] sm:$0xff]
    %v2230 = vld [vmem:[#allocation8 + $0x7f0] sm:$0xff]
    %v2231 = vld [vmem:[#allocation8 + $0x7f8] sm:$0xff]
    %v2232 = vld [vmem:[%s4] sm:$0x3]
    %v2234 = vlaneseq
    %v2235 = vshrl.u32 %v2234, 7
    %v2236 = vsub.s32 0, %v2235
    %v2237 = vrot.slane %v2232, %v2236
    %v2238 = vlaneseq
    %v2239 = vshrl.u32 %v2238, 7
    %v2240 = vsub.s32 1, %v2239
    %v2241 = vrot.slane %v2232, %v2240
    %2244 = vmatprep.subr.mxu0 %v2007
    %2245 = vmatpush1.msra.mxu0 %v2006
    %2246 = vmatprep.subr.mxu0 %v2005
    %2247 = vmatpush1.msra.mxu0 %v2004
    %2248 = vmatprep.subr.mxu0 %v2003
    %2249 = vmatpush1.msra.mxu0 %v2002
    %2250 = vmatprep.subr.mxu0 %v2001
    %2251 = vmatpush1.msra.mxu0 %v2000
    %2252 = vmatprep.subr.mxu0 %v1999
    %2253 = vmatpush1.msra.mxu0 %v1998
    %2254 = vmatprep.subr.mxu0 %v1997
    %2255 = vmatpush1.msra.mxu0 %v1996
    %2256 = vmatprep.subr.mxu0 %v1995
    %2257 = vmatpush1.msra.mxu0 %v1994
    %2258 = vmatprep.subr.mxu0 %v1993
    %2259 = vmatpush1.msra.mxu0 %v1992
    %2260 = vmatprep.subr.mxu0 %v1991
    %2261 = vmatpush1.msra.mxu0 %v1990
    %2262 = vmatprep.subr.mxu0 %v1989
    %2263 = vmatpush1.msra.mxu0 %v1988
    %2264 = vmatprep.subr.mxu0 %v1987
    %2265 = vmatpush1.msra.mxu0 %v1986
    %2266 = vmatprep.subr.mxu0 %v1985
    %2267 = vmatpush1.msra.mxu0 %v1984
    %2268 = vmatprep.subr.mxu0 %v1983
    %2269 = vmatpush1.msra.mxu0 %v1982
    %2270 = vmatprep.subr.mxu0 %v1981
    %2271 = vmatpush1.msra.mxu0 %v1980
    %2272 = vmatprep.subr.mxu0 %v1979
    %2273 = vmatpush1.msra.mxu0 %v1978
    %2274 = vmatprep.subr.mxu0 %v1977
    %2275 = vmatpush1.msra.mxu0 %v1976
    %2276 = vmatprep.subr.mxu0 %v2039
    %2277 = vmatpush2.msra.mxu0 %v2038
    %2278 = vmatprep.subr.mxu0 %v2037
    %2279 = vmatpush2.msra.mxu0 %v2036
    %2280 = vmatprep.subr.mxu0 %v2035
    %2281 = vmatpush2.msra.mxu0 %v2034
    %2282 = vmatprep.subr.mxu0 %v2033
    %2283 = vmatpush2.msra.mxu0 %v2032
    %2284 = vmatprep.subr.mxu0 %v2031
    %2285 = vmatpush2.msra.mxu0 %v2030
    %2286 = vmatprep.subr.mxu0 %v2029
    %2287 = vmatpush2.msra.mxu0 %v2028
    %2288 = vmatprep.subr.mxu0 %v2027
    %2289 = vmatpush2.msra.mxu0 %v2026
    %2290 = vmatprep.subr.mxu0 %v2025
    %2291 = vmatpush2.msra.mxu0 %v2024
    %2292 = vmatprep.subr.mxu0 %v2023
    %2293 = vmatpush2.msra.mxu0 %v2022
    %2294 = vmatprep.subr.mxu0 %v2021
    %2295 = vmatpush2.msra.mxu0 %v2020
    %2296 = vmatprep.subr.mxu0 %v2019
    %2297 = vmatpush2.msra.mxu0 %v2018
    %2298 = vmatprep.subr.mxu0 %v2017
    %2299 = vmatpush2.msra.mxu0 %v2016
    %2300 = vmatprep.subr.mxu0 %v2015
    %2301 = vmatpush2.msra.mxu0 %v2014
    %2302 = vmatprep.subr.mxu0 %v2013
    %2303 = vmatpush2.msra.mxu0 %v2012
    %2304 = vmatprep.subr.mxu0 %v2011
    %2305 = vmatpush2.msra.mxu0 %v2010
    %2306 = vmatprep.subr.mxu0 %v2009
    %2307 = vmatpush2.msra.mxu0 %v2008
    %2308 = vmatprep.mubr.f32.mxu0 %v1721
    %2309 = vmatmul.mubr.f32.gmra.mxu0 %v1720
    %v2310 = vpop.f32.mrf.mxu0
    %v2311 = vadd.f32 %v2237, %v2310
    %v2312 = vpop.f32.mrf.mxu0
    %v2313 = vadd.f32 %v2241, %v2312
    %2314 = vmatprep.mubr.f32.mxu0 %v1729
    %2315 = vmatmul.mubr.f32.gmra.mxu0 %v1728
    %v2316 = vpop.f32.mrf.mxu0
    %v2317 = vadd.f32 %v2237, %v2316
    %v2318 = vpop.f32.mrf.mxu0
    %v2319 = vadd.f32 %v2241, %v2318
    %2320 = vmatprep.mubr.f32.mxu0 %v1737
    %2321 = vmatmul.mubr.f32.gmra.mxu0 %v1736
    %v2322 = vpop.f32.mrf.mxu0
    %v2323 = vadd.f32 %v2237, %v2322
    %v2324 = vpop.f32.mrf.mxu0
    %v2325 = vadd.f32 %v2241, %v2324
    %2326 = vmatprep.mubr.f32.mxu0 %v1745
    %2327 = vmatmul.mubr.f32.gmra.mxu0 %v1744
    %v2328 = vpop.f32.mrf.mxu0
    %v2329 = vadd.f32 %v2237, %v2328
    %v2330 = vpop.f32.mrf.mxu0
    %v2331 = vadd.f32 %v2241, %v2330
    %2332 = vmatprep.mubr.f32.mxu0 %v1753
    %2333 = vmatmul.mubr.f32.gmra.mxu0 %v1752
    %v2334 = vpop.f32.mrf.mxu0
    %v2335 = vadd.f32 %v2237, %v2334
    %v2336 = vpop.f32.mrf.mxu0
    %v2337 = vadd.f32 %v2241, %v2336
    %2338 = vmatprep.mubr.f32.mxu0 %v1761
    %2339 = vmatmul.mubr.f32.gmra.mxu0 %v1760
    %v2340 = vpop.f32.mrf.mxu0
    %v2341 = vadd.f32 %v2237, %v2340
    %v2342 = vpop.f32.mrf.mxu0
    %v2343 = vadd.f32 %v2241, %v2342
    %2344 = vmatprep.mubr.f32.mxu0 %v1769
    %2345 = vmatmul.mubr.f32.gmra.mxu0 %v1768
    %v2346 = vpop.f32.mrf.mxu0
    %v2347 = vadd.f32 %v2237, %v2346
    %v2348 = vpop.f32.mrf.mxu0
    %v2349 = vadd.f32 %v2241, %v2348
    %2350 = vmatprep.mubr.f32.mxu0 %v1777
    %2351 = vmatmul.mubr.f32.gmra.mxu0 %v1776
    %v2352 = vpop.f32.mrf.mxu0
    %v2353 = vadd.f32 %v2237, %v2352
    %v2354 = vpop.f32.mrf.mxu0
    %v2355 = vadd.f32 %v2241, %v2354
    %2356 = vmatprep.mubr.f32.mxu0 %v1785
    %2357 = vmatmul.mubr.f32.gmra.mxu0 %v1784
    %v2358 = vpop.f32.mrf.mxu0
    %v2359 = vadd.f32 %v2237, %v2358
    %v2360 = vpop.f32.mrf.mxu0
    %v2361 = vadd.f32 %v2241, %v2360
    %2362 = vmatprep.mubr.f32.mxu0 %v1793
    %2363 = vmatmul.mubr.f32.gmra.mxu0 %v1792
    %v2364 = vpop.f32.mrf.mxu0
    %v2365 = vadd.f32 %v2237, %v2364
    %v2366 = vpop.f32.mrf.mxu0
    %v2367 = vadd.f32 %v2241, %v2366
    %2368 = vmatprep.mubr.f32.mxu0 %v1801
    %2369 = vmatmul.mubr.f32.gmra.mxu0 %v1800
    %v2370 = vpop.f32.mrf.mxu0
    %v2371 = vadd.f32 %v2237, %v2370
    %v2372 = vpop.f32.mrf.mxu0
    %v2373 = vadd.f32 %v2241, %v2372
    %2374 = vmatprep.mubr.f32.mxu0 %v1809
    %2375 = vmatmul.mubr.f32.gmra.mxu0 %v1808
    %v2376 = vpop.f32.mrf.mxu0
    %v2377 = vadd.f32 %v2237, %v2376
    %v2378 = vpop.f32.mrf.mxu0
    %v2379 = vadd.f32 %v2241, %v2378
    %2380 = vmatprep.mubr.f32.mxu0 %v1817
    %2381 = vmatmul.mubr.f32.gmra.mxu0 %v1816
    %v2382 = vpop.f32.mrf.mxu0
    %v2383 = vadd.f32 %v2237, %v2382
    %v2384 = vpop.f32.mrf.mxu0
    %v2385 = vadd.f32 %v2241, %v2384
    %2386 = vmatprep.mubr.f32.mxu0 %v1825
    %2387 = vmatmul.mubr.f32.gmra.mxu0 %v1824
    %v2388 = vpop.f32.mrf.mxu0
    %v2389 = vadd.f32 %v2237, %v2388
    %v2390 = vpop.f32.mrf.mxu0
    %v2391 = vadd.f32 %v2241, %v2390
    %2392 = vmatprep.mubr.f32.mxu0 %v1833
    %2393 = vmatmul.mubr.f32.gmra.mxu0 %v1832
    %v2394 = vpop.f32.mrf.mxu0
    %v2395 = vadd.f32 %v2237, %v2394
    %v2396 = vpop.f32.mrf.mxu0
    %v2397 = vadd.f32 %v2241, %v2396
    %2398 = vmatprep.mubr.f32.mxu0 %v1841
    %2399 = vmatmul.mubr.f32.gmra.mxu0 %v1840
    %v2400 = vpop.f32.mrf.mxu0
    %v2401 = vadd.f32 %v2237, %v2400
    %v2402 = vpop.f32.mrf.mxu0
    %v2403 = vadd.f32 %v2241, %v2402
    %2404 = vmatprep.mubr.f32.mxu0 %v1849
    %2405 = vmatmul.mubr.f32.gmra.mxu0 %v1848
    %v2406 = vpop.f32.mrf.mxu0
    %v2407 = vadd.f32 %v2237, %v2406
    %v2408 = vpop.f32.mrf.mxu0
    %v2409 = vadd.f32 %v2241, %v2408
    %2410 = vmatprep.mubr.f32.mxu0 %v1857
    %2411 = vmatmul.mubr.f32.gmra.mxu0 %v1856
    %v2412 = vpop.f32.mrf.mxu0
    %v2413 = vadd.f32 %v2237, %v2412
    %v2414 = vpop.f32.mrf.mxu0
    %v2415 = vadd.f32 %v2241, %v2414
    %2416 = vmatprep.mubr.f32.mxu0 %v1865
    %2417 = vmatmul.mubr.f32.gmra.mxu0 %v1864
    %v2418 = vpop.f32.mrf.mxu0
    %v2419 = vadd.f32 %v2237, %v2418
    %v2420 = vpop.f32.mrf.mxu0
    %v2421 = vadd.f32 %v2241, %v2420
    %2422 = vmatprep.mubr.f32.mxu0 %v1873
    %2423 = vmatmul.mubr.f32.gmra.mxu0 %v1872
    %v2424 = vpop.f32.mrf.mxu0
    %v2425 = vadd.f32 %v2237, %v2424
    %v2426 = vpop.f32.mrf.mxu0
    %v2427 = vadd.f32 %v2241, %v2426
    %2428 = vmatprep.mubr.f32.mxu0 %v1881
    %2429 = vmatmul.mubr.f32.gmra.mxu0 %v1880
    %v2430 = vpop.f32.mrf.mxu0
    %v2431 = vadd.f32 %v2237, %v2430
    %v2432 = vpop.f32.mrf.mxu0
    %v2433 = vadd.f32 %v2241, %v2432
    %2434 = vmatprep.mubr.f32.mxu0 %v1889
    %2435 = vmatmul.mubr.f32.gmra.mxu0 %v1888
    %v2436 = vpop.f32.mrf.mxu0
    %v2437 = vadd.f32 %v2237, %v2436
    %v2438 = vpop.f32.mrf.mxu0
    %v2439 = vadd.f32 %v2241, %v2438
    %2440 = vmatprep.mubr.f32.mxu0 %v1897
    %2441 = vmatmul.mubr.f32.gmra.mxu0 %v1896
    %v2442 = vpop.f32.mrf.mxu0
    %v2443 = vadd.f32 %v2237, %v2442
    %v2444 = vpop.f32.mrf.mxu0
    %v2445 = vadd.f32 %v2241, %v2444
    %2446 = vmatprep.mubr.f32.mxu0 %v1905
    %2447 = vmatmul.mubr.f32.gmra.mxu0 %v1904
    %v2448 = vpop.f32.mrf.mxu0
    %v2449 = vadd.f32 %v2237, %v2448
    %v2450 = vpop.f32.mrf.mxu0
    %v2451 = vadd.f32 %v2241, %v2450
    %2452 = vmatprep.mubr.f32.mxu0 %v1913
    %2453 = vmatmul.mubr.f32.gmra.mxu0 %v1912
    %v2454 = vpop.f32.mrf.mxu0
    %v2455 = vadd.f32 %v2237, %v2454
    %v2456 = vpop.f32.mrf.mxu0
    %v2457 = vadd.f32 %v2241, %v2456
    %2458 = vmatprep.mubr.f32.mxu0 %v1921
    %2459 = vmatmul.mubr.f32.gmra.mxu0 %v1920
    %v2460 = vpop.f32.mrf.mxu0
    %v2461 = vadd.f32 %v2237, %v2460
    %v2462 = vpop.f32.mrf.mxu0
    %v2463 = vadd.f32 %v2241, %v2462
    %2464 = vmatprep.mubr.f32.mxu0 %v1929
    %2465 = vmatmul.mubr.f32.gmra.mxu0 %v1928
    %v2466 = vpop.f32.mrf.mxu0
    %v2467 = vadd.f32 %v2237, %v2466
    %v2468 = vpop.f32.mrf.mxu0
    %v2469 = vadd.f32 %v2241, %v2468
    %2470 = vmatprep.mubr.f32.mxu0 %v1937
    %2471 = vmatmul.mubr.f32.gmra.mxu0 %v1936
    %v2472 = vpop.f32.mrf.mxu0
    %v2473 = vadd.f32 %v2237, %v2472
    %v2474 = vpop.f32.mrf.mxu0
    %v2475 = vadd.f32 %v2241, %v2474
    %2476 = vmatprep.mubr.f32.mxu0 %v1945
    %2477 = vmatmul.mubr.f32.gmra.mxu0 %v1944
    %v2478 = vpop.f32.mrf.mxu0
    %v2479 = vadd.f32 %v2237, %v2478
    %v2480 = vpop.f32.mrf.mxu0
    %v2481 = vadd.f32 %v2241, %v2480
    %2482 = vmatprep.mubr.f32.mxu0 %v1953
    %2483 = vmatmul.mubr.f32.gmra.mxu0 %v1952
    %v2484 = vpop.f32.mrf.mxu0
    %v2485 = vadd.f32 %v2237, %v2484
    %v2486 = vpop.f32.mrf.mxu0
    %v2487 = vadd.f32 %v2241, %v2486
    %2488 = vmatprep.mubr.f32.mxu0 %v1961
    %2489 = vmatmul.mubr.f32.gmra.mxu0 %v1960
    %v2490 = vpop.f32.mrf.mxu0
    %v2491 = vadd.f32 %v2237, %v2490
    %v2492 = vpop.f32.mrf.mxu0
    %v2493 = vadd.f32 %v2241, %v2492
    %2494 = vmatprep.mubr.f32.mxu0 %v1969
    %2495 = vmatmul.mubr.f32.gmra.mxu0 %v1968
    %v2496 = vpop.f32.mrf.mxu0
    %v2497 = vadd.f32 %v2237, %v2496
    %v2498 = vpop.f32.mrf.mxu0
    %v2499 = vadd.f32 %v2241, %v2498
    %2500 = vdwg.mxu0
    %2501 = vmatprep.subr.mxu0 %v2071
    %2502 = vmatpush1.msra.mxu0 %v2070
    %2503 = vmatprep.subr.mxu0 %v2069
    %2504 = vmatpush1.msra.mxu0 %v2068
    %2505 = vmatprep.subr.mxu0 %v2067
    %2506 = vmatpush1.msra.mxu0 %v2066
    %2507 = vmatprep.subr.mxu0 %v2065
    %2508 = vmatpush1.msra.mxu0 %v2064
    %2509 = vmatprep.subr.mxu0 %v2063
    %2510 = vmatpush1.msra.mxu0 %v2062
    %2511 = vmatprep.subr.mxu0 %v2061
    %2512 = vmatpush1.msra.mxu0 %v2060
    %2513 = vmatprep.subr.mxu0 %v2059
    %2514 = vmatpush1.msra.mxu0 %v2058
    %2515 = vmatprep.subr.mxu0 %v2057
    %2516 = vmatpush1.msra.mxu0 %v2056
    %2517 = vmatprep.subr.mxu0 %v2055
    %2518 = vmatpush1.msra.mxu0 %v2054
    %2519 = vmatprep.subr.mxu0 %v2053
    %2520 = vmatpush1.msra.mxu0 %v2052
    %2521 = vmatprep.subr.mxu0 %v2051
    %2522 = vmatpush1.msra.mxu0 %v2050
    %2523 = vmatprep.subr.mxu0 %v2049
    %2524 = vmatpush1.msra.mxu0 %v2048
    %2525 = vmatprep.subr.mxu0 %v2047
    %2526 = vmatpush1.msra.mxu0 %v2046
    %2527 = vmatprep.subr.mxu0 %v2045
    %2528 = vmatpush1.msra.mxu0 %v2044
    %2529 = vmatprep.subr.mxu0 %v2043
    %2530 = vmatpush1.msra.mxu0 %v2042
    %2531 = vmatprep.subr.mxu0 %v2041
    %2532 = vmatpush1.msra.mxu0 %v2040
    %2533 = vmatprep.subr.mxu0 %v2103
    %2534 = vmatpush2.msra.mxu0 %v2102
    %2535 = vmatprep.subr.mxu0 %v2101
    %2536 = vmatpush2.msra.mxu0 %v2100
    %2537 = vmatprep.subr.mxu0 %v2099
    %2538 = vmatpush2.msra.mxu0 %v2098
    %2539 = vmatprep.subr.mxu0 %v2097
    %2540 = vmatpush2.msra.mxu0 %v2096
    %2541 = vmatprep.subr.mxu0 %v2095
    %2542 = vmatpush2.msra.mxu0 %v2094
    %2543 = vmatprep.subr.mxu0 %v2093
    %2544 = vmatpush2.msra.mxu0 %v2092
    %2545 = vmatprep.subr.mxu0 %v2091
    %2546 = vmatpush2.msra.mxu0 %v2090
    %2547 = vmatprep.subr.mxu0 %v2089
    %2548 = vmatpush2.msra.mxu0 %v2088
    %2549 = vmatprep.subr.mxu0 %v2087
    %2550 = vmatpush2.msra.mxu0 %v2086
    %2551 = vmatprep.subr.mxu0 %v2085
    %2552 = vmatpush2.msra.mxu0 %v2084
    %2553 = vmatprep.subr.mxu0 %v2083
    %2554 = vmatpush2.msra.mxu0 %v2082
    %2555 = vmatprep.subr.mxu0 %v2081
    %2556 = vmatpush2.msra.mxu0 %v2080
    %2557 = vmatprep.subr.mxu0 %v2079
    %2558 = vmatpush2.msra.mxu0 %v2078
    %2559 = vmatprep.subr.mxu0 %v2077
    %2560 = vmatpush2.msra.mxu0 %v2076
    %2561 = vmatprep.subr.mxu0 %v2075
    %2562 = vmatpush2.msra.mxu0 %v2074
    %2563 = vmatprep.subr.mxu0 %v2073
    %2564 = vmatpush2.msra.mxu0 %v2072
    %2565 = vmatprep.mubr.f32.mxu0 %v1723
    %2566 = vmatmul.mubr.f32.gmra.mxu0 %v1722
    %v2567 = vpop.f32.mrf.mxu0
    %v2568 = vadd.f32 %v2311, %v2567
    %v2569 = vpop.f32.mrf.mxu0
    %v2570 = vadd.f32 %v2313, %v2569
    %2571 = vmatprep.mubr.f32.mxu0 %v1731
    %2572 = vmatmul.mubr.f32.gmra.mxu0 %v1730
    %v2573 = vpop.f32.mrf.mxu0
    %v2574 = vadd.f32 %v2317, %v2573
    %v2575 = vpop.f32.mrf.mxu0
    %v2576 = vadd.f32 %v2319, %v2575
    %2577 = vmatprep.mubr.f32.mxu0 %v1739
    %2578 = vmatmul.mubr.f32.gmra.mxu0 %v1738
    %v2579 = vpop.f32.mrf.mxu0
    %v2580 = vadd.f32 %v2323, %v2579
    %v2581 = vpop.f32.mrf.mxu0
    %v2582 = vadd.f32 %v2325, %v2581
    %2583 = vmatprep.mubr.f32.mxu0 %v1747
    %2584 = vmatmul.mubr.f32.gmra.mxu0 %v1746
    %v2585 = vpop.f32.mrf.mxu0
    %v2586 = vadd.f32 %v2329, %v2585
    %v2587 = vpop.f32.mrf.mxu0
    %v2588 = vadd.f32 %v2331, %v2587
    %2589 = vmatprep.mubr.f32.mxu0 %v1755
    %2590 = vmatmul.mubr.f32.gmra.mxu0 %v1754
    %v2591 = vpop.f32.mrf.mxu0
    %v2592 = vadd.f32 %v2335, %v2591
    %v2593 = vpop.f32.mrf.mxu0
    %v2594 = vadd.f32 %v2337, %v2593
    %2595 = vmatprep.mubr.f32.mxu0 %v1763
    %2596 = vmatmul.mubr.f32.gmra.mxu0 %v1762
    %v2597 = vpop.f32.mrf.mxu0
    %v2598 = vadd.f32 %v2341, %v2597
    %v2599 = vpop.f32.mrf.mxu0
    %v2600 = vadd.f32 %v2343, %v2599
    %2601 = vmatprep.mubr.f32.mxu0 %v1771
    %2602 = vmatmul.mubr.f32.gmra.mxu0 %v1770
    %v2603 = vpop.f32.mrf.mxu0
    %v2604 = vadd.f32 %v2347, %v2603
    %v2605 = vpop.f32.mrf.mxu0
    %v2606 = vadd.f32 %v2349, %v2605
    %2607 = vmatprep.mubr.f32.mxu0 %v1779
    %2608 = vmatmul.mubr.f32.gmra.mxu0 %v1778
    %v2609 = vpop.f32.mrf.mxu0
    %v2610 = vadd.f32 %v2353, %v2609
    %v2611 = vpop.f32.mrf.mxu0
    %v2612 = vadd.f32 %v2355, %v2611
    %2613 = vmatprep.mubr.f32.mxu0 %v1787
    %2614 = vmatmul.mubr.f32.gmra.mxu0 %v1786
    %v2615 = vpop.f32.mrf.mxu0
    %v2616 = vadd.f32 %v2359, %v2615
    %v2617 = vpop.f32.mrf.mxu0
    %v2618 = vadd.f32 %v2361, %v2617
    %2619 = vmatprep.mubr.f32.mxu0 %v1795
    %2620 = vmatmul.mubr.f32.gmra.mxu0 %v1794
    %v2621 = vpop.f32.mrf.mxu0
    %v2622 = vadd.f32 %v2365, %v2621
    %v2623 = vpop.f32.mrf.mxu0
    %v2624 = vadd.f32 %v2367, %v2623
    %2625 = vmatprep.mubr.f32.mxu0 %v1803
    %2626 = vmatmul.mubr.f32.gmra.mxu0 %v1802
    %v2627 = vpop.f32.mrf.mxu0
    %v2628 = vadd.f32 %v2371, %v2627
    %v2629 = vpop.f32.mrf.mxu0
    %v2630 = vadd.f32 %v2373, %v2629
    %2631 = vmatprep.mubr.f32.mxu0 %v1811
    %2632 = vmatmul.mubr.f32.gmra.mxu0 %v1810
    %v2633 = vpop.f32.mrf.mxu0
    %v2634 = vadd.f32 %v2377, %v2633
    %v2635 = vpop.f32.mrf.mxu0
    %v2636 = vadd.f32 %v2379, %v2635
    %2637 = vmatprep.mubr.f32.mxu0 %v1819
    %2638 = vmatmul.mubr.f32.gmra.mxu0 %v1818
    %v2639 = vpop.f32.mrf.mxu0
    %v2640 = vadd.f32 %v2383, %v2639
    %v2641 = vpop.f32.mrf.mxu0
    %v2642 = vadd.f32 %v2385, %v2641
    %2643 = vmatprep.mubr.f32.mxu0 %v1827
    %2644 = vmatmul.mubr.f32.gmra.mxu0 %v1826
    %v2645 = vpop.f32.mrf.mxu0
    %v2646 = vadd.f32 %v2389, %v2645
    %v2647 = vpop.f32.mrf.mxu0
    %v2648 = vadd.f32 %v2391, %v2647
    %2649 = vmatprep.mubr.f32.mxu0 %v1835
    %2650 = vmatmul.mubr.f32.gmra.mxu0 %v1834
    %v2651 = vpop.f32.mrf.mxu0
    %v2652 = vadd.f32 %v2395, %v2651
    %v2653 = vpop.f32.mrf.mxu0
    %v2654 = vadd.f32 %v2397, %v2653
    %2655 = vmatprep.mubr.f32.mxu0 %v1843
    %2656 = vmatmul.mubr.f32.gmra.mxu0 %v1842
    %v2657 = vpop.f32.mrf.mxu0
    %v2658 = vadd.f32 %v2401, %v2657
    %v2659 = vpop.f32.mrf.mxu0
    %v2660 = vadd.f32 %v2403, %v2659
    %2661 = vmatprep.mubr.f32.mxu0 %v1851
    %2662 = vmatmul.mubr.f32.gmra.mxu0 %v1850
    %v2663 = vpop.f32.mrf.mxu0
    %v2664 = vadd.f32 %v2407, %v2663
    %v2665 = vpop.f32.mrf.mxu0
    %v2666 = vadd.f32 %v2409, %v2665
    %2667 = vmatprep.mubr.f32.mxu0 %v1859
    %2668 = vmatmul.mubr.f32.gmra.mxu0 %v1858
    %v2669 = vpop.f32.mrf.mxu0
    %v2670 = vadd.f32 %v2413, %v2669
    %v2671 = vpop.f32.mrf.mxu0
    %v2672 = vadd.f32 %v2415, %v2671
    %2673 = vmatprep.mubr.f32.mxu0 %v1867
    %2674 = vmatmul.mubr.f32.gmra.mxu0 %v1866
    %v2675 = vpop.f32.mrf.mxu0
    %v2676 = vadd.f32 %v2419, %v2675
    %v2677 = vpop.f32.mrf.mxu0
    %v2678 = vadd.f32 %v2421, %v2677
    %2679 = vmatprep.mubr.f32.mxu0 %v1875
    %2680 = vmatmul.mubr.f32.gmra.mxu0 %v1874
    %v2681 = vpop.f32.mrf.mxu0
    %v2682 = vadd.f32 %v2425, %v2681
    %v2683 = vpop.f32.mrf.mxu0
    %v2684 = vadd.f32 %v2427, %v2683
    %2685 = vmatprep.mubr.f32.mxu0 %v1883
    %2686 = vmatmul.mubr.f32.gmra.mxu0 %v1882
    %v2687 = vpop.f32.mrf.mxu0
    %v2688 = vadd.f32 %v2431, %v2687
    %v2689 = vpop.f32.mrf.mxu0
    %v2690 = vadd.f32 %v2433, %v2689
    %2691 = vmatprep.mubr.f32.mxu0 %v1891
    %2692 = vmatmul.mubr.f32.gmra.mxu0 %v1890
    %v2693 = vpop.f32.mrf.mxu0
    %v2694 = vadd.f32 %v2437, %v2693
    %v2695 = vpop.f32.mrf.mxu0
    %v2696 = vadd.f32 %v2439, %v2695
    %2697 = vmatprep.mubr.f32.mxu0 %v1899
    %2698 = vmatmul.mubr.f32.gmra.mxu0 %v1898
    %v2699 = vpop.f32.mrf.mxu0
    %v2700 = vadd.f32 %v2443, %v2699
    %v2701 = vpop.f32.mrf.mxu0
    %v2702 = vadd.f32 %v2445, %v2701
    %2703 = vmatprep.mubr.f32.mxu0 %v1907
    %2704 = vmatmul.mubr.f32.gmra.mxu0 %v1906
    %v2705 = vpop.f32.mrf.mxu0
    %v2706 = vadd.f32 %v2449, %v2705
    %v2707 = vpop.f32.mrf.mxu0
    %v2708 = vadd.f32 %v2451, %v2707
    %2709 = vmatprep.mubr.f32.mxu0 %v1915
    %2710 = vmatmul.mubr.f32.gmra.mxu0 %v1914
    %v2711 = vpop.f32.mrf.mxu0
    %v2712 = vadd.f32 %v2455, %v2711
    %v2713 = vpop.f32.mrf.mxu0
    %v2714 = vadd.f32 %v2457, %v2713
    %2715 = vmatprep.mubr.f32.mxu0 %v1923
    %2716 = vmatmul.mubr.f32.gmra.mxu0 %v1922
    %v2717 = vpop.f32.mrf.mxu0
    %v2718 = vadd.f32 %v2461, %v2717
    %v2719 = vpop.f32.mrf.mxu0
    %v2720 = vadd.f32 %v2463, %v2719
    %2721 = vmatprep.mubr.f32.mxu0 %v1931
    %2722 = vmatmul.mubr.f32.gmra.mxu0 %v1930
    %v2723 = vpop.f32.mrf.mxu0
    %v2724 = vadd.f32 %v2467, %v2723
    %v2725 = vpop.f32.mrf.mxu0
    %v2726 = vadd.f32 %v2469, %v2725
    %2727 = vmatprep.mubr.f32.mxu0 %v1939
    %2728 = vmatmul.mubr.f32.gmra.mxu0 %v1938
    %v2729 = vpop.f32.mrf.mxu0
    %v2730 = vadd.f32 %v2473, %v2729
    %v2731 = vpop.f32.mrf.mxu0
    %v2732 = vadd.f32 %v2475, %v2731
    %2733 = vmatprep.mubr.f32.mxu0 %v1947
    %2734 = vmatmul.mubr.f32.gmra.mxu0 %v1946
    %v2735 = vpop.f32.mrf.mxu0
    %v2736 = vadd.f32 %v2479, %v2735
    %v2737 = vpop.f32.mrf.mxu0
    %v2738 = vadd.f32 %v2481, %v2737
    %2739 = vmatprep.mubr.f32.mxu0 %v1955
    %2740 = vmatmul.mubr.f32.gmra.mxu0 %v1954
    %v2741 = vpop.f32.mrf.mxu0
    %v2742 = vadd.f32 %v2485, %v2741
    %v2743 = vpop.f32.mrf.mxu0
    %v2744 = vadd.f32 %v2487, %v2743
    %2745 = vmatprep.mubr.f32.mxu0 %v1963
    %2746 = vmatmul.mubr.f32.gmra.mxu0 %v1962
    %v2747 = vpop.f32.mrf.mxu0
    %v2748 = vadd.f32 %v2491, %v2747
    %v2749 = vpop.f32.mrf.mxu0
    %v2750 = vadd.f32 %v2493, %v2749
    %2751 = vmatprep.mubr.f32.mxu0 %v1971
    %2752 = vmatmul.mubr.f32.gmra.mxu0 %v1970
    %v2753 = vpop.f32.mrf.mxu0
    %v2754 = vadd.f32 %v2497, %v2753
    %v2755 = vpop.f32.mrf.mxu0
    %v2756 = vadd.f32 %v2499, %v2755
    %2757 = vdwg.mxu0
    %2758 = vmatprep.subr.mxu0 %v2135
    %2759 = vmatpush1.msra.mxu0 %v2134
    %2760 = vmatprep.subr.mxu0 %v2133
    %2761 = vmatpush1.msra.mxu0 %v2132
    %2762 = vmatprep.subr.mxu0 %v2131
    %2763 = vmatpush1.msra.mxu0 %v2130
    %2764 = vmatprep.subr.mxu0 %v2129
    %2765 = vmatpush1.msra.mxu0 %v2128
    %2766 = vmatprep.subr.mxu0 %v2127
    %2767 = vmatpush1.msra.mxu0 %v2126
    %2768 = vmatprep.subr.mxu0 %v2125
    %2769 = vmatpush1.msra.mxu0 %v2124
    %2770 = vmatprep.subr.mxu0 %v2123
    %2771 = vmatpush1.msra.mxu0 %v2122
    %2772 = vmatprep.subr.mxu0 %v2121
    %2773 = vmatpush1.msra.mxu0 %v2120
    %2774 = vmatprep.subr.mxu0 %v2119
    %2775 = vmatpush1.msra.mxu0 %v2118
    %2776 = vmatprep.subr.mxu0 %v2117
    %2777 = vmatpush1.msra.mxu0 %v2116
    %2778 = vmatprep.subr.mxu0 %v2115
    %2779 = vmatpush1.msra.mxu0 %v2114
    %2780 = vmatprep.subr.mxu0 %v2113
    %2781 = vmatpush1.msra.mxu0 %v2112
    %2782 = vmatprep.subr.mxu0 %v2111
    %2783 = vmatpush1.msra.mxu0 %v2110
    %2784 = vmatprep.subr.mxu0 %v2109
    %2785 = vmatpush1.msra.mxu0 %v2108
    %2786 = vmatprep.subr.mxu0 %v2107
    %2787 = vmatpush1.msra.mxu0 %v2106
    %2788 = vmatprep.subr.mxu0 %v2105
    %2789 = vmatpush1.msra.mxu0 %v2104
    %2790 = vmatprep.subr.mxu0 %v2167
    %2791 = vmatpush2.msra.mxu0 %v2166
    %2792 = vmatprep.subr.mxu0 %v2165
    %2793 = vmatpush2.msra.mxu0 %v2164
    %2794 = vmatprep.subr.mxu0 %v2163
    %2795 = vmatpush2.msra.mxu0 %v2162
    %2796 = vmatprep.subr.mxu0 %v2161
    %2797 = vmatpush2.msra.mxu0 %v2160
    %2798 = vmatprep.subr.mxu0 %v2159
    %2799 = vmatpush2.msra.mxu0 %v2158
    %2800 = vmatprep.subr.mxu0 %v2157
    %2801 = vmatpush2.msra.mxu0 %v2156
    %2802 = vmatprep.subr.mxu0 %v2155
    %2803 = vmatpush2.msra.mxu0 %v2154
    %2804 = vmatprep.subr.mxu0 %v2153
    %2805 = vmatpush2.msra.mxu0 %v2152
    %2806 = vmatprep.subr.mxu0 %v2151
    %2807 = vmatpush2.msra.mxu0 %v2150
    %2808 = vmatprep.subr.mxu0 %v2149
    %2809 = vmatpush2.msra.mxu0 %v2148
    %2810 = vmatprep.subr.mxu0 %v2147
    %2811 = vmatpush2.msra.mxu0 %v2146
    %2812 = vmatprep.subr.mxu0 %v2145
    %2813 = vmatpush2.msra.mxu0 %v2144
    %2814 = vmatprep.subr.mxu0 %v2143
    %2815 = vmatpush2.msra.mxu0 %v2142
    %2816 = vmatprep.subr.mxu0 %v2141
    %2817 = vmatpush2.msra.mxu0 %v2140
    %2818 = vmatprep.subr.mxu0 %v2139
    %2819 = vmatpush2.msra.mxu0 %v2138
    %2820 = vmatprep.subr.mxu0 %v2137
    %2821 = vmatpush2.msra.mxu0 %v2136
    %2822 = vmatprep.mubr.f32.mxu0 %v1725
    %2823 = vmatmul.mubr.f32.gmra.mxu0 %v1724
    %v2824 = vpop.f32.mrf.mxu0
    %v2825 = vadd.f32 %v2568, %v2824
    %v2826 = vpop.f32.mrf.mxu0
    %v2827 = vadd.f32 %v2570, %v2826
    %2828 = vmatprep.mubr.f32.mxu0 %v1733
    %2829 = vmatmul.mubr.f32.gmra.mxu0 %v1732
    %v2830 = vpop.f32.mrf.mxu0
    %v2831 = vadd.f32 %v2574, %v2830
    %v2832 = vpop.f32.mrf.mxu0
    %v2833 = vadd.f32 %v2576, %v2832
    %2834 = vmatprep.mubr.f32.mxu0 %v1741
    %2835 = vmatmul.mubr.f32.gmra.mxu0 %v1740
    %v2836 = vpop.f32.mrf.mxu0
    %v2837 = vadd.f32 %v2580, %v2836
    %v2838 = vpop.f32.mrf.mxu0
    %v2839 = vadd.f32 %v2582, %v2838
    %2840 = vmatprep.mubr.f32.mxu0 %v1749
    %2841 = vmatmul.mubr.f32.gmra.mxu0 %v1748
    %v2842 = vpop.f32.mrf.mxu0
    %v2843 = vadd.f32 %v2586, %v2842
    %v2844 = vpop.f32.mrf.mxu0
    %v2845 = vadd.f32 %v2588, %v2844
    %2846 = vmatprep.mubr.f32.mxu0 %v1757
    %2847 = vmatmul.mubr.f32.gmra.mxu0 %v1756
    %v2848 = vpop.f32.mrf.mxu0
    %v2849 = vadd.f32 %v2592, %v2848
    %v2850 = vpop.f32.mrf.mxu0
    %v2851 = vadd.f32 %v2594, %v2850
    %2852 = vmatprep.mubr.f32.mxu0 %v1765
    %2853 = vmatmul.mubr.f32.gmra.mxu0 %v1764
    %v2854 = vpop.f32.mrf.mxu0
    %v2855 = vadd.f32 %v2598, %v2854
    %v2856 = vpop.f32.mrf.mxu0
    %v2857 = vadd.f32 %v2600, %v2856
    %2858 = vmatprep.mubr.f32.mxu0 %v1773
    %2859 = vmatmul.mubr.f32.gmra.mxu0 %v1772
    %v2860 = vpop.f32.mrf.mxu0
    %v2861 = vadd.f32 %v2604, %v2860
    %v2862 = vpop.f32.mrf.mxu0
    %v2863 = vadd.f32 %v2606, %v2862
    %2864 = vmatprep.mubr.f32.mxu0 %v1781
    %2865 = vmatmul.mubr.f32.gmra.mxu0 %v1780
    %v2866 = vpop.f32.mrf.mxu0
    %v2867 = vadd.f32 %v2610, %v2866
    %v2868 = vpop.f32.mrf.mxu0
    %v2869 = vadd.f32 %v2612, %v2868
    %2870 = vmatprep.mubr.f32.mxu0 %v1789
    %2871 = vmatmul.mubr.f32.gmra.mxu0 %v1788
    %v2872 = vpop.f32.mrf.mxu0
    %v2873 = vadd.f32 %v2616, %v2872
    %v2874 = vpop.f32.mrf.mxu0
    %v2875 = vadd.f32 %v2618, %v2874
    %2876 = vmatprep.mubr.f32.mxu0 %v1797
    %2877 = vmatmul.mubr.f32.gmra.mxu0 %v1796
    %v2878 = vpop.f32.mrf.mxu0
    %v2879 = vadd.f32 %v2622, %v2878
    %v2880 = vpop.f32.mrf.mxu0
    %v2881 = vadd.f32 %v2624, %v2880
    %2882 = vmatprep.mubr.f32.mxu0 %v1805
    %2883 = vmatmul.mubr.f32.gmra.mxu0 %v1804
    %v2884 = vpop.f32.mrf.mxu0
    %v2885 = vadd.f32 %v2628, %v2884
    %v2886 = vpop.f32.mrf.mxu0
    %v2887 = vadd.f32 %v2630, %v2886
    %2888 = vmatprep.mubr.f32.mxu0 %v1813
    %2889 = vmatmul.mubr.f32.gmra.mxu0 %v1812
    %v2890 = vpop.f32.mrf.mxu0
    %v2891 = vadd.f32 %v2634, %v2890
    %v2892 = vpop.f32.mrf.mxu0
    %v2893 = vadd.f32 %v2636, %v2892
    %2894 = vmatprep.mubr.f32.mxu0 %v1821
    %2895 = vmatmul.mubr.f32.gmra.mxu0 %v1820
    %v2896 = vpop.f32.mrf.mxu0
    %v2897 = vadd.f32 %v2640, %v2896
    %v2898 = vpop.f32.mrf.mxu0
    %v2899 = vadd.f32 %v2642, %v2898
    %2900 = vmatprep.mubr.f32.mxu0 %v1829
    %2901 = vmatmul.mubr.f32.gmra.mxu0 %v1828
    %v2902 = vpop.f32.mrf.mxu0
    %v2903 = vadd.f32 %v2646, %v2902
    %v2904 = vpop.f32.mrf.mxu0
    %v2905 = vadd.f32 %v2648, %v2904
    %2906 = vmatprep.mubr.f32.mxu0 %v1837
    %2907 = vmatmul.mubr.f32.gmra.mxu0 %v1836
    %v2908 = vpop.f32.mrf.mxu0
    %v2909 = vadd.f32 %v2652, %v2908
    %v2910 = vpop.f32.mrf.mxu0
    %v2911 = vadd.f32 %v2654, %v2910
    %2912 = vmatprep.mubr.f32.mxu0 %v1845
    %2913 = vmatmul.mubr.f32.gmra.mxu0 %v1844
    %v2914 = vpop.f32.mrf.mxu0
    %v2915 = vadd.f32 %v2658, %v2914
    %v2916 = vpop.f32.mrf.mxu0
    %v2917 = vadd.f32 %v2660, %v2916
    %2918 = vmatprep.mubr.f32.mxu0 %v1853
    %2919 = vmatmul.mubr.f32.gmra.mxu0 %v1852
    %v2920 = vpop.f32.mrf.mxu0
    %v2921 = vadd.f32 %v2664, %v2920
    %v2922 = vpop.f32.mrf.mxu0
    %v2923 = vadd.f32 %v2666, %v2922
    %2924 = vmatprep.mubr.f32.mxu0 %v1861
    %2925 = vmatmul.mubr.f32.gmra.mxu0 %v1860
    %v2926 = vpop.f32.mrf.mxu0
    %v2927 = vadd.f32 %v2670, %v2926
    %v2928 = vpop.f32.mrf.mxu0
    %v2929 = vadd.f32 %v2672, %v2928
    %2930 = vmatprep.mubr.f32.mxu0 %v1869
    %2931 = vmatmul.mubr.f32.gmra.mxu0 %v1868
    %v2932 = vpop.f32.mrf.mxu0
    %v2933 = vadd.f32 %v2676, %v2932
    %v2934 = vpop.f32.mrf.mxu0
    %v2935 = vadd.f32 %v2678, %v2934
    %2936 = vmatprep.mubr.f32.mxu0 %v1877
    %2937 = vmatmul.mubr.f32.gmra.mxu0 %v1876
    %v2938 = vpop.f32.mrf.mxu0
    %v2939 = vadd.f32 %v2682, %v2938
    %v2940 = vpop.f32.mrf.mxu0
    %v2941 = vadd.f32 %v2684, %v2940
    %2942 = vmatprep.mubr.f32.mxu0 %v1885
    %2943 = vmatmul.mubr.f32.gmra.mxu0 %v1884
    %v2944 = vpop.f32.mrf.mxu0
    %v2945 = vadd.f32 %v2688, %v2944
    %v2946 = vpop.f32.mrf.mxu0
    %v2947 = vadd.f32 %v2690, %v2946
    %2948 = vmatprep.mubr.f32.mxu0 %v1893
    %2949 = vmatmul.mubr.f32.gmra.mxu0 %v1892
    %v2950 = vpop.f32.mrf.mxu0
    %v2951 = vadd.f32 %v2694, %v2950
    %v2952 = vpop.f32.mrf.mxu0
    %v2953 = vadd.f32 %v2696, %v2952
    %2954 = vmatprep.mubr.f32.mxu0 %v1901
    %2955 = vmatmul.mubr.f32.gmra.mxu0 %v1900
    %v2956 = vpop.f32.mrf.mxu0
    %v2957 = vadd.f32 %v2700, %v2956
    %v2958 = vpop.f32.mrf.mxu0
    %v2959 = vadd.f32 %v2702, %v2958
    %2960 = vmatprep.mubr.f32.mxu0 %v1909
    %2961 = vmatmul.mubr.f32.gmra.mxu0 %v1908
    %v2962 = vpop.f32.mrf.mxu0
    %v2963 = vadd.f32 %v2706, %v2962
    %v2964 = vpop.f32.mrf.mxu0
    %v2965 = vadd.f32 %v2708, %v2964
    %2966 = vmatprep.mubr.f32.mxu0 %v1917
    %2967 = vmatmul.mubr.f32.gmra.mxu0 %v1916
    %v2968 = vpop.f32.mrf.mxu0
    %v2969 = vadd.f32 %v2712, %v2968
    %v2970 = vpop.f32.mrf.mxu0
    %v2971 = vadd.f32 %v2714, %v2970
    %2972 = vmatprep.mubr.f32.mxu0 %v1925
    %2973 = vmatmul.mubr.f32.gmra.mxu0 %v1924
    %v2974 = vpop.f32.mrf.mxu0
    %v2975 = vadd.f32 %v2718, %v2974
    %v2976 = vpop.f32.mrf.mxu0
    %v2977 = vadd.f32 %v2720, %v2976
    %2978 = vmatprep.mubr.f32.mxu0 %v1933
    %2979 = vmatmul.mubr.f32.gmra.mxu0 %v1932
    %v2980 = vpop.f32.mrf.mxu0
    %v2981 = vadd.f32 %v2724, %v2980
    %v2982 = vpop.f32.mrf.mxu0
    %v2983 = vadd.f32 %v2726, %v2982
    %2984 = vmatprep.mubr.f32.mxu0 %v1941
    %2985 = vmatmul.mubr.f32.gmra.mxu0 %v1940
    %v2986 = vpop.f32.mrf.mxu0
    %v2987 = vadd.f32 %v2730, %v2986
    %v2988 = vpop.f32.mrf.mxu0
    %v2989 = vadd.f32 %v2732, %v2988
    %2990 = vmatprep.mubr.f32.mxu0 %v1949
    %2991 = vmatmul.mubr.f32.gmra.mxu0 %v1948
    %v2992 = vpop.f32.mrf.mxu0
    %v2993 = vadd.f32 %v2736, %v2992
    %v2994 = vpop.f32.mrf.mxu0
    %v2995 = vadd.f32 %v2738, %v2994
    %2996 = vmatprep.mubr.f32.mxu0 %v1957
    %2997 = vmatmul.mubr.f32.gmra.mxu0 %v1956
    %v2998 = vpop.f32.mrf.mxu0
    %v2999 = vadd.f32 %v2742, %v2998
    %v3000 = vpop.f32.mrf.mxu0
    %v3001 = vadd.f32 %v2744, %v3000
    %3002 = vmatprep.mubr.f32.mxu0 %v1965
    %3003 = vmatmul.mubr.f32.gmra.mxu0 %v1964
    %v3004 = vpop.f32.mrf.mxu0
    %v3005 = vadd.f32 %v2748, %v3004
    %v3006 = vpop.f32.mrf.mxu0
    %v3007 = vadd.f32 %v2750, %v3006
    %3008 = vmatprep.mubr.f32.mxu0 %v1973
    %3009 = vmatmul.mubr.f32.gmra.mxu0 %v1972
    %v3010 = vpop.f32.mrf.mxu0
    %v3011 = vadd.f32 %v2754, %v3010
    %v3012 = vpop.f32.mrf.mxu0
    %v3013 = vadd.f32 %v2756, %v3012
    %3014 = vdwg.mxu0
    %3015 = vmatprep.subr.mxu0 %v2199
    %3016 = vmatpush1.msra.mxu0 %v2198
    %3017 = vmatprep.subr.mxu0 %v2197
    %3018 = vmatpush1.msra.mxu0 %v2196
    %3019 = vmatprep.subr.mxu0 %v2195
    %3020 = vmatpush1.msra.mxu0 %v2194
    %3021 = vmatprep.subr.mxu0 %v2193
    %3022 = vmatpush1.msra.mxu0 %v2192
    %3023 = vmatprep.subr.mxu0 %v2191
    %3024 = vmatpush1.msra.mxu0 %v2190
    %3025 = vmatprep.subr.mxu0 %v2189
    %3026 = vmatpush1.msra.mxu0 %v2188
    %3027 = vmatprep.subr.mxu0 %v2187
    %3028 = vmatpush1.msra.mxu0 %v2186
    %3029 = vmatprep.subr.mxu0 %v2185
    %3030 = vmatpush1.msra.mxu0 %v2184
    %3031 = vmatprep.subr.mxu0 %v2183
    %3032 = vmatpush1.msra.mxu0 %v2182
    %3033 = vmatprep.subr.mxu0 %v2181
    %3034 = vmatpush1.msra.mxu0 %v2180
    %3035 = vmatprep.subr.mxu0 %v2179
    %3036 = vmatpush1.msra.mxu0 %v2178
    %3037 = vmatprep.subr.mxu0 %v2177
    %3038 = vmatpush1.msra.mxu0 %v2176
    %3039 = vmatprep.subr.mxu0 %v2175
    %3040 = vmatpush1.msra.mxu0 %v2174
    %3041 = vmatprep.subr.mxu0 %v2173
    %3042 = vmatpush1.msra.mxu0 %v2172
    %3043 = vmatprep.subr.mxu0 %v2171
    %3044 = vmatpush1.msra.mxu0 %v2170
    %3045 = vmatprep.subr.mxu0 %v2169
    %3046 = vmatpush1.msra.mxu0 %v2168
    %3047 = vmatprep.subr.mxu0 %v2231
    %3048 = vmatpush2.msra.mxu0 %v2230
    %3049 = vmatprep.subr.mxu0 %v2229
    %3050 = vmatpush2.msra.mxu0 %v2228
    %3051 = vmatprep.subr.mxu0 %v2227
    %3052 = vmatpush2.msra.mxu0 %v2226
    %3053 = vmatprep.subr.mxu0 %v2225
    %3054 = vmatpush2.msra.mxu0 %v2224
    %3055 = vmatprep.subr.mxu0 %v2223
    %3056 = vmatpush2.msra.mxu0 %v2222
    %3057 = vmatprep.subr.mxu0 %v2221
    %3058 = vmatpush2.msra.mxu0 %v2220
    %3059 = vmatprep.subr.mxu0 %v2219
    %3060 = vmatpush2.msra.mxu0 %v2218
    %3061 = vmatprep.subr.mxu0 %v2217
    %3062 = vmatpush2.msra.mxu0 %v2216
    %3063 = vmatprep.subr.mxu0 %v2215
    %3064 = vmatpush2.msra.mxu0 %v2214
    %3065 = vmatprep.subr.mxu0 %v2213
    %3066 = vmatpush2.msra.mxu0 %v2212
    %3067 = vmatprep.subr.mxu0 %v2211
    %3068 = vmatpush2.msra.mxu0 %v2210
    %3069 = vmatprep.subr.mxu0 %v2209
    %3070 = vmatpush2.msra.mxu0 %v2208
    %3071 = vmatprep.subr.mxu0 %v2207
    %3072 = vmatpush2.msra.mxu0 %v2206
    %3073 = vmatprep.subr.mxu0 %v2205
    %3074 = vmatpush2.msra.mxu0 %v2204
    %3075 = vmatprep.subr.mxu0 %v2203
    %3076 = vmatpush2.msra.mxu0 %v2202
    %3077 = vmatprep.subr.mxu0 %v2201
    %3078 = vmatpush2.msra.mxu0 %v2200
    %3079 = vmatprep.mubr.f32.mxu0 %v1727
    %3080 = vmatmul.mubr.f32.gmra.mxu0 %v1726
    %v3081 = vpop.f32.mrf.mxu0
    %v3082 = vadd.f32 %v2825, %v3081
    %v3083 = vpop.f32.mrf.mxu0
    %v3084 = vadd.f32 %v2827, %v3083
    %3085 = vmatprep.mubr.f32.mxu0 %v1735
    %3086 = vmatmul.mubr.f32.gmra.mxu0 %v1734
    %v3087 = vpop.f32.mrf.mxu0
    %v3088 = vadd.f32 %v2831, %v3087
    %v3089 = vpop.f32.mrf.mxu0
    %v3090 = vadd.f32 %v2833, %v3089
    %3091 = vmatprep.mubr.f32.mxu0 %v1743
    %3092 = vmatmul.mubr.f32.gmra.mxu0 %v1742
    %v3093 = vpop.f32.mrf.mxu0
    %v3094 = vadd.f32 %v2837, %v3093
    %v3095 = vpop.f32.mrf.mxu0
    %v3096 = vadd.f32 %v2839, %v3095
    %3097 = vmatprep.mubr.f32.mxu0 %v1751
    %3098 = vmatmul.mubr.f32.gmra.mxu0 %v1750
    %v3099 = vpop.f32.mrf.mxu0
    %v3100 = vadd.f32 %v2843, %v3099
    %v3101 = vpop.f32.mrf.mxu0
    %v3102 = vadd.f32 %v2845, %v3101
    %3103 = vmatprep.mubr.f32.mxu0 %v1759
    %3104 = vmatmul.mubr.f32.gmra.mxu0 %v1758
    %v3105 = vpop.f32.mrf.mxu0
    %v3106 = vadd.f32 %v2849, %v3105
    %v3107 = vpop.f32.mrf.mxu0
    %v3108 = vadd.f32 %v2851, %v3107
    %3109 = vmatprep.mubr.f32.mxu0 %v1767
    %3110 = vmatmul.mubr.f32.gmra.mxu0 %v1766
    %v3111 = vpop.f32.mrf.mxu0
    %v3112 = vadd.f32 %v2855, %v3111
    %v3113 = vpop.f32.mrf.mxu0
    %v3114 = vadd.f32 %v2857, %v3113
    %3115 = vmatprep.mubr.f32.mxu0 %v1775
    %3116 = vmatmul.mubr.f32.gmra.mxu0 %v1774
    %v3117 = vpop.f32.mrf.mxu0
    %v3118 = vadd.f32 %v2861, %v3117
    %v3119 = vpop.f32.mrf.mxu0
    %v3120 = vadd.f32 %v2863, %v3119
    %3121 = vmatprep.mubr.f32.mxu0 %v1783
    %3122 = vmatmul.mubr.f32.gmra.mxu0 %v1782
    %v3123 = vpop.f32.mrf.mxu0
    %v3124 = vadd.f32 %v2867, %v3123
    %v3125 = vpop.f32.mrf.mxu0
    %v3126 = vadd.f32 %v2869, %v3125
    %3127 = vmatprep.mubr.f32.mxu0 %v1791
    %3128 = vmatmul.mubr.f32.gmra.mxu0 %v1790
    %v3129 = vpop.f32.mrf.mxu0
    %v3130 = vadd.f32 %v2873, %v3129
    %v3131 = vpop.f32.mrf.mxu0
    %v3132 = vadd.f32 %v2875, %v3131
    %3133 = vmatprep.mubr.f32.mxu0 %v1799
    %3134 = vmatmul.mubr.f32.gmra.mxu0 %v1798
    %v3135 = vpop.f32.mrf.mxu0
    %v3136 = vadd.f32 %v2879, %v3135
    %v3137 = vpop.f32.mrf.mxu0
    %v3138 = vadd.f32 %v2881, %v3137
    %3139 = vmatprep.mubr.f32.mxu0 %v1807
    %3140 = vmatmul.mubr.f32.gmra.mxu0 %v1806
    %v3141 = vpop.f32.mrf.mxu0
    %v3142 = vadd.f32 %v2885, %v3141
    %v3143 = vpop.f32.mrf.mxu0
    %v3144 = vadd.f32 %v2887, %v3143
    %3145 = vmatprep.mubr.f32.mxu0 %v1815
    %3146 = vmatmul.mubr.f32.gmra.mxu0 %v1814
    %v3147 = vpop.f32.mrf.mxu0
    %v3148 = vadd.f32 %v2891, %v3147
    %v3149 = vpop.f32.mrf.mxu0
    %v3150 = vadd.f32 %v2893, %v3149
    %3151 = vmatprep.mubr.f32.mxu0 %v1823
    %3152 = vmatmul.mubr.f32.gmra.mxu0 %v1822
    %v3153 = vpop.f32.mrf.mxu0
    %v3154 = vadd.f32 %v2897, %v3153
    %v3155 = vpop.f32.mrf.mxu0
    %v3156 = vadd.f32 %v2899, %v3155
    %3157 = vmatprep.mubr.f32.mxu0 %v1831
    %3158 = vmatmul.mubr.f32.gmra.mxu0 %v1830
    %v3159 = vpop.f32.mrf.mxu0
    %v3160 = vadd.f32 %v2903, %v3159
    %v3161 = vpop.f32.mrf.mxu0
    %v3162 = vadd.f32 %v2905, %v3161
    %3163 = vmatprep.mubr.f32.mxu0 %v1839
    %3164 = vmatmul.mubr.f32.gmra.mxu0 %v1838
    %v3165 = vpop.f32.mrf.mxu0
    %v3166 = vadd.f32 %v2909, %v3165
    %v3167 = vpop.f32.mrf.mxu0
    %v3168 = vadd.f32 %v2911, %v3167
    %3169 = vmatprep.mubr.f32.mxu0 %v1847
    %3170 = vmatmul.mubr.f32.gmra.mxu0 %v1846
    %v3171 = vpop.f32.mrf.mxu0
    %v3172 = vadd.f32 %v2915, %v3171
    %v3173 = vpop.f32.mrf.mxu0
    %v3174 = vadd.f32 %v2917, %v3173
    %3175 = vmatprep.mubr.f32.mxu0 %v1855
    %3176 = vmatmul.mubr.f32.gmra.mxu0 %v1854
    %v3177 = vpop.f32.mrf.mxu0
    %v3178 = vadd.f32 %v2921, %v3177
    %v3179 = vpop.f32.mrf.mxu0
    %v3180 = vadd.f32 %v2923, %v3179
    %3181 = vmatprep.mubr.f32.mxu0 %v1863
    %3182 = vmatmul.mubr.f32.gmra.mxu0 %v1862
    %v3183 = vpop.f32.mrf.mxu0
    %v3184 = vadd.f32 %v2927, %v3183
    %v3185 = vpop.f32.mrf.mxu0
    %v3186 = vadd.f32 %v2929, %v3185
    %3187 = vmatprep.mubr.f32.mxu0 %v1871
    %3188 = vmatmul.mubr.f32.gmra.mxu0 %v1870
    %v3189 = vpop.f32.mrf.mxu0
    %v3190 = vadd.f32 %v2933, %v3189
    %v3191 = vpop.f32.mrf.mxu0
    %v3192 = vadd.f32 %v2935, %v3191
    %3193 = vmatprep.mubr.f32.mxu0 %v1879
    %3194 = vmatmul.mubr.f32.gmra.mxu0 %v1878
    %v3195 = vpop.f32.mrf.mxu0
    %v3196 = vadd.f32 %v2939, %v3195
    %v3197 = vpop.f32.mrf.mxu0
    %v3198 = vadd.f32 %v2941, %v3197
    %3199 = vmatprep.mubr.f32.mxu0 %v1887
    %3200 = vmatmul.mubr.f32.gmra.mxu0 %v1886
    %v3201 = vpop.f32.mrf.mxu0
    %v3202 = vadd.f32 %v2945, %v3201
    %v3203 = vpop.f32.mrf.mxu0
    %v3204 = vadd.f32 %v2947, %v3203
    %3205 = vmatprep.mubr.f32.mxu0 %v1895
    %3206 = vmatmul.mubr.f32.gmra.mxu0 %v1894
    %v3207 = vpop.f32.mrf.mxu0
    %v3208 = vadd.f32 %v2951, %v3207
    %v3209 = vpop.f32.mrf.mxu0
    %v3210 = vadd.f32 %v2953, %v3209
    %3211 = vmatprep.mubr.f32.mxu0 %v1903
    %3212 = vmatmul.mubr.f32.gmra.mxu0 %v1902
    %v3213 = vpop.f32.mrf.mxu0
    %v3214 = vadd.f32 %v2957, %v3213
    %v3215 = vpop.f32.mrf.mxu0
    %v3216 = vadd.f32 %v2959, %v3215
    %3217 = vmatprep.mubr.f32.mxu0 %v1911
    %3218 = vmatmul.mubr.f32.gmra.mxu0 %v1910
    %v3219 = vpop.f32.mrf.mxu0
    %v3220 = vadd.f32 %v2963, %v3219
    %v3221 = vpop.f32.mrf.mxu0
    %v3222 = vadd.f32 %v2965, %v3221
    %3223 = vmatprep.mubr.f32.mxu0 %v1919
    %3224 = vmatmul.mubr.f32.gmra.mxu0 %v1918
    %v3225 = vpop.f32.mrf.mxu0
    %v3226 = vadd.f32 %v2969, %v3225
    %v3227 = vpop.f32.mrf.mxu0
    %v3228 = vadd.f32 %v2971, %v3227
    %3229 = vmatprep.mubr.f32.mxu0 %v1927
    %3230 = vmatmul.mubr.f32.gmra.mxu0 %v1926
    %v3231 = vpop.f32.mrf.mxu0
    %v3232 = vadd.f32 %v2975, %v3231
    %v3233 = vpop.f32.mrf.mxu0
    %v3234 = vadd.f32 %v2977, %v3233
    %3235 = vmatprep.mubr.f32.mxu0 %v1935
    %3236 = vmatmul.mubr.f32.gmra.mxu0 %v1934
    %v3237 = vpop.f32.mrf.mxu0
    %v3238 = vadd.f32 %v2981, %v3237
    %v3239 = vpop.f32.mrf.mxu0
    %v3240 = vadd.f32 %v2983, %v3239
    %3241 = vmatprep.mubr.f32.mxu0 %v1943
    %3242 = vmatmul.mubr.f32.gmra.mxu0 %v1942
    %v3243 = vpop.f32.mrf.mxu0
    %v3244 = vadd.f32 %v2987, %v3243
    %v3245 = vpop.f32.mrf.mxu0
    %v3246 = vadd.f32 %v2989, %v3245
    %3247 = vmatprep.mubr.f32.mxu0 %v1951
    %3248 = vmatmul.mubr.f32.gmra.mxu0 %v1950
    %v3249 = vpop.f32.mrf.mxu0
    %v3250 = vadd.f32 %v2993, %v3249
    %v3251 = vpop.f32.mrf.mxu0
    %v3252 = vadd.f32 %v2995, %v3251
    %3253 = vmatprep.mubr.f32.mxu0 %v1959
    %3254 = vmatmul.mubr.f32.gmra.mxu0 %v1958
    %v3255 = vpop.f32.mrf.mxu0
    %v3256 = vadd.f32 %v2999, %v3255
    %v3257 = vpop.f32.mrf.mxu0
    %v3258 = vadd.f32 %v3001, %v3257
    %3259 = vmatprep.mubr.f32.mxu0 %v1967
    %3260 = vmatmul.mubr.f32.gmra.mxu0 %v1966
    %v3261 = vpop.f32.mrf.mxu0
    %v3262 = vadd.f32 %v3005, %v3261
    %v3263 = vpop.f32.mrf.mxu0
    %v3264 = vadd.f32 %v3007, %v3263
    %3265 = vmatprep.mubr.f32.mxu0 %v1975
    %3266 = vmatmul.mubr.f32.gmra.mxu0 %v1974
    %v3267 = vpop.f32.mrf.mxu0
    %v3268 = vadd.f32 %v3011, %v3267
    %v3269 = vpop.f32.mrf.mxu0
    %v3270 = vadd.f32 %v3013, %v3269
    %3271 = vdwg.mxu0
    %3272 = vst [vmem:[#allocation10] sm:$0xff] %v3082
    %3273 = vst [vmem:[#allocation10 + $0x8] sm:$0xff] %v3084
    %3274 = vst [vmem:[#allocation10 + $0x10] sm:$0xff] %v3088
    %3275 = vst [vmem:[#allocation10 + $0x18] sm:$0xff] %v3090
    %3276 = vst [vmem:[#allocation10 + $0x20] sm:$0xff] %v3094
    %3277 = vst [vmem:[#allocation10 + $0x28] sm:$0xff] %v3096
    %3278 = vst [vmem:[#allocation10 + $0x30] sm:$0xff] %v3100
    %3279 = vst [vmem:[#allocation10 + $0x38] sm:$0xff] %v3102
    %3280 = vst [vmem:[#allocation10 + $0x40] sm:$0xff] %v3106
    %3281 = vst [vmem:[#allocation10 + $0x48] sm:$0xff] %v3108
    %3282 = vst [vmem:[#allocation10 + $0x50] sm:$0xff] %v3112
    %3283 = vst [vmem:[#allocation10 + $0x58] sm:$0xff] %v3114
    %3284 = vst [vmem:[#allocation10 + $0x60] sm:$0xff] %v3118
    %3285 = vst [vmem:[#allocation10 + $0x68] sm:$0xff] %v3120
    %3286 = vst [vmem:[#allocation10 + $0x70] sm:$0xff] %v3124
    %3287 = vst [vmem:[#allocation10 + $0x78] sm:$0xff] %v3126
    %3288 = vst [vmem:[#allocation10 + $0x80] sm:$0xff] %v3130
    %3289 = vst [vmem:[#allocation10 + $0x88] sm:$0xff] %v3132
    %3290 = vst [vmem:[#allocation10 + $0x90] sm:$0xff] %v3136
    %3291 = vst [vmem:[#allocation10 + $0x98] sm:$0xff] %v3138
    %3292 = vst [vmem:[#allocation10 + $0xa0] sm:$0xff] %v3142
    %3293 = vst [vmem:[#allocation10 + $0xa8] sm:$0xff] %v3144
    %3294 = vst [vmem:[#allocation10 + $0xb0] sm:$0xff] %v3148
    %3295 = vst [vmem:[#allocation10 + $0xb8] sm:$0xff] %v3150
    %3296 = vst [vmem:[#allocation10 + $0xc0] sm:$0xff] %v3154
    %3297 = vst [vmem:[#allocation10 + $0xc8] sm:$0xff] %v3156
    %3298 = vst [vmem:[#allocation10 + $0xd0] sm:$0xff] %v3160
    %3299 = vst [vmem:[#allocation10 + $0xd8] sm:$0xff] %v3162
    %3300 = vst [vmem:[#allocation10 + $0xe0] sm:$0xff] %v3166
    %3301 = vst [vmem:[#allocation10 + $0xe8] sm:$0xff] %v3168
    %3302 = vst [vmem:[#allocation10 + $0xf0] sm:$0xff] %v3172
    %3303 = vst [vmem:[#allocation10 + $0xf8] sm:$0xff] %v3174
    %3304 = vst [vmem:[#allocation10 + $0x100] sm:$0xff] %v3178
    %3305 = vst [vmem:[#allocation10 + $0x108] sm:$0xff] %v3180
    %3306 = vst [vmem:[#allocation10 + $0x110] sm:$0xff] %v3184
    %3307 = vst [vmem:[#allocation10 + $0x118] sm:$0xff] %v3186
    %3308 = vst [vmem:[#allocation10 + $0x120] sm:$0xff] %v3190
    %3309 = vst [vmem:[#allocation10 + $0x128] sm:$0xff] %v3192
    %3310 = vst [vmem:[#allocation10 + $0x130] sm:$0xff] %v3196
    %3311 = vst [vmem:[#allocation10 + $0x138] sm:$0xff] %v3198
    %3312 = vst [vmem:[#allocation10 + $0x140] sm:$0xff] %v3202
    %3313 = vst [vmem:[#allocation10 + $0x148] sm:$0xff] %v3204
    %3314 = vst [vmem:[#allocation10 + $0x150] sm:$0xff] %v3208
    %3315 = vst [vmem:[#allocation10 + $0x158] sm:$0xff] %v3210
    %3316 = vst [vmem:[#allocation10 + $0x160] sm:$0xff] %v3214
    %3317 = vst [vmem:[#allocation10 + $0x168] sm:$0xff] %v3216
    %3318 = vst [vmem:[#allocation10 + $0x170] sm:$0xff] %v3220
    %3319 = vst [vmem:[#allocation10 + $0x178] sm:$0xff] %v3222
    %3320 = vst [vmem:[#allocation10 + $0x180] sm:$0xff] %v3226
    %3321 = vst [vmem:[#allocation10 + $0x188] sm:$0xff] %v3228
    %3322 = vst [vmem:[#allocation10 + $0x190] sm:$0xff] %v3232
    %3323 = vst [vmem:[#allocation10 + $0x198] sm:$0xff] %v3234
    %3324 = vst [vmem:[#allocation10 + $0x1a0] sm:$0xff] %v3238
    %3325 = vst [vmem:[#allocation10 + $0x1a8] sm:$0xff] %v3240
    %3326 = vst [vmem:[#allocation10 + $0x1b0] sm:$0xff] %v3244
    %3327 = vst [vmem:[#allocation10 + $0x1b8] sm:$0xff] %v3246
    %3328 = vst [vmem:[#allocation10 + $0x1c0] sm:$0xff] %v3250
    %3329 = vst [vmem:[#allocation10 + $0x1c8] sm:$0xff] %v3252
    %3330 = vst [vmem:[#allocation10 + $0x1d0] sm:$0xff] %v3256
    %3331 = vst [vmem:[#allocation10 + $0x1d8] sm:$0xff] %v3258
    %3332 = vst [vmem:[#allocation10 + $0x1e0] sm:$0xff] %v3262
    %3333 = vst [vmem:[#allocation10 + $0x1e8] sm:$0xff] %v3264
    %3334 = vst [vmem:[#allocation10 + $0x1f0] sm:$0xff] %v3268
    %3335 = vst [vmem:[#allocation10 + $0x1f8] sm:$0xff] %v3270
    // Predicated region
    $region38: #{tpu_custom_call.1} parent=1 // pred_check
      _
    $region39: #{tpu_custom_call.1} parent=1 // pred_check_branch
      %3337 = sbr.rel (0) target = $region41
    $region40: #{tpu_custom_call.1} parent=1 // pred_region
      %s3339 = ssub.s32 8192, 8192
      %3340 = vsyncadd [#allocation4], %s3339
      %s3341 = sshll.u32 [#allocation10], 4
      %s3342 = int_to_ptr.vmem [resolvable:$true] %s3341
      %3347 = dma.vmem_to_hbm [thread:$0]  %s3342, 8192, %s5, [#allocation4], 256, 256, 16
    $region41: #{tpu_custom_call.1} parent=1 // pred_fallthru
      _
    // Predicated region
    $region42: #{tpu_custom_call.1} parent=1 // pred_check
      _
    $region43: #{tpu_custom_call.1} parent=1 // pred_check_branch
      %3349 = sbr.rel (0) target = $region45
    $region44: #{tpu_custom_call.1} parent=1 // pred_region
      %3350 = dma.done [#allocation4], 8192
    $region45: #{tpu_custom_call.1} parent=1 // pred_fallthru
      _
    %3351 = vsyncpa [#allocation3], 1
    %3352 = vsyncpa [#allocation6], 1
    %3353 = vsyncpa [#allocation9], 1
    %3354 = vsyncpa [#allocation4], 1

</llo_original>
